<compile_context>
chip_gen: v7x
topology: tpu7x:2x2x1
jax: 0.10.0
libtpu: 0.0.40
codegen_flags: <defaults>
</compile_context>

<pallas_src>
import functools
import math

import jax
import jax.numpy as jnp
from jax import lax
from jax.experimental import pallas as pl
from jax.experimental.pallas import tpu as pltpu


def _mha_kernel(q_ref, k_ref, v_ref, mask_ref,
                wq_ref, bq_ref, wk_ref, bk_ref, wv_ref, bv_ref,
                fcw_ref, fcb_ref, o_ref,
                kh_ref, vh_ref, ctx_ref,
                *, num_heads, compute_dtype, approx_recip):
    # Grid point = (batch, query-tile).  Blocks:
    #   q_ref: (1, TQ, D)   k_ref/v_ref: (1, S, D)   mask_ref: (1, 1, S)
    #   wq/wk/wv/fcw: (D, D) head-stacked,  bq/bk/bv/fcb: (1, D)
    #   scratch: kh_ref/vh_ref (S, D) compute_dtype (per-batch cache), ctx_ref (TQ, D)
    tq, d = q_ref.shape[1], q_ref.shape[2]
    s = k_ref.shape[1]
    hd = d // num_heads
    inv_sqrt_hd = 1.0 / math.sqrt(hd)

    # K/V projections only once per batch (first query tile); cached across the "arbitrary"
    # query-tile axis in persistent VMEM scratch.
    @pl.when(pl.program_id(1) == 0)
    def _():
        kh = jnp.dot(k_ref[0], wk_ref[...], preferred_element_type=jnp.float32) + bk_ref[...]
        vh = jnp.dot(v_ref[0], wv_ref[...], preferred_element_type=jnp.float32) + bv_ref[...]
        kh_ref[...] = kh.astype(compute_dtype)
        vh_ref[...] = vh.astype(compute_dtype)

    # Q projection for this tile; 1/sqrt(hd) folded in (torch scales before masking, so
    # masked scores are still set to exactly -1e9 below -> bit-compatible masking).
    qh = (jnp.dot(q_ref[0], wq_ref[...], preferred_element_type=jnp.float32)
          + bq_ref[...]) * inv_sqrt_hd
    qh = qh.astype(compute_dtype)                                      # (TQ, D)

    kh = kh_ref[...]                                                   # (S, D) compute_dtype
    vh = vh_ref[...]                                                   # (S, D) compute_dtype
    # masked_fill(mask == 0, -1e9); broadcast hoisted out of the head loop.
    neg_mask = jnp.broadcast_to(mask_ref[0] == 0, (tq, s))             # (TQ, S) bool

    # TODO(synk): for num_heads >= 12 a lax.fori_loop over head offsets would bound live
    # ranges, but dynamic lane-offset slicing of kh/vh needs hd % 128 == 0; keep the static
    # unroll which is correct for any head size.
    for h in range(num_heads):
        sl = slice(h * hd, (h + 1) * hd)
        # scores = qh_h @ kh_h^T, contracting last dims (no transpose materialized).
        scores = lax.dot_general(qh[:, sl], kh[:, sl],
                                 (((1,), (1,)), ((), ())),
                                 preferred_element_type=jnp.float32)   # (TQ, S) f32
        scores = jnp.where(neg_mask, -1e9, scores)
        scores = scores - jnp.max(scores, axis=-1, keepdims=True)
        p = jnp.exp(scores)
        inv_l = pl.reciprocal(jnp.sum(p, axis=-1, keepdims=True), approx=approx_recip)
        p = (p * inv_l).astype(compute_dtype)                          # softmax (TQ, S)
        # TODO(synk): dropout(att_weights) is identity in eval mode; training dropout not implemented.
        ctx = jnp.dot(p, vh[:, sl], preferred_element_type=jnp.float32)  # (TQ, hd) f32
        ctx_ref[:, sl] = ctx.astype(compute_dtype)

    # One full-width fc matmul (D-deep contraction fills the systolic array) + f32 accumulate.
    out = jnp.dot(ctx_ref[...], fcw_ref[...], preferred_element_type=jnp.float32) + fcb_ref[...]
    o_ref[0] = out.astype(o_ref.dtype)


def _pick_query_tile(seq_len, hidden):
    """Largest TQ (capped at 256) dividing seq_len whose per-tile f32 temporaries
    (scores + probs (TQ, S) and qh/ctx/out (TQ, D)) fit a conservative VMEM budget."""
    budget = 4 << 20  # bytes; conservative across v5e/v6e/v7x
    divisors = [c for c in (256, 128, 64, 32, 16, 8) if seq_len % c == 0]
    for cand in divisors:
        if cand * (2 * seq_len + 3 * hidden) * 4 <= budget:
            return cand
    return divisors[-1] if divisors else seq_len


def multi_head_attention(query, key, value, mask, params,
                         compute_dtype=jnp.float32):
    """query/key/value: (B, S, D) f32; mask: (B, 1, S) int (1 = keep, 0 = mask) or None.

    compute_dtype casts all MXU operands (projections, scores, p@v, fc) to this dtype
    (jnp.bfloat16 recommended on v5e/v6e/v7x: ~2-4x MXU + halved VMEM/HBM for those stages);
    accumulation and softmax stay f32.  Default f32 tracks the torch reference to ~1 ulp
    (softmax uses reciprocal-then-multiply rather than division).
    """
    B, S, D = query.shape
    H = params["num_heads"]
    assert D % H == 0, "hidden_size must be divisible by num_attention_heads"
    wq, bq = params["wq"], params["bq"]
    wk, bk = params["wk"], params["bk"]
    wv, bv = params["wv"], params["bv"]
    fc_w, fc_b = params["fc_w"], params["fc_b"]

    if mask is None:
        mask = jnp.ones((B, 1, S), dtype=jnp.int32)
    mask = mask.astype(jnp.int32)

    cd = compute_dtype
    q_in, k_in, v_in = query.astype(cd), key.astype(cd), value.astype(cd)
    wq_in, wk_in, wv_in, fcw_in = (wq.astype(cd), wk.astype(cd),
                                   wv.astype(cd), fc_w.astype(cd))

    TQ = _pick_query_tile(S, D)
    grid = (B, S // TQ)

    kernel = functools.partial(_mha_kernel, num_heads=H, compute_dtype=cd,
                               approx_recip=cd != jnp.float32)

    # TODO(synk): for S >= ~2K add a KV-tile grid axis with flash-style online softmax so
    # VMEM stays bounded independent of S (full-S K/V blocks + kh/vh cache won't fit v7x).
    def call(single_buffer):
        # Inputs whose block index never changes along the inner axis only need one buffer.
        const = {"pipeline_mode": pl.Buffered(1)} if single_buffer else {}
        q_spec = pl.BlockSpec((1, TQ, D), lambda b, i: (b, i, 0))
        kv_spec = pl.BlockSpec((1, S, D), lambda b, i: (b, 0, 0), **const)
        mask_spec = pl.BlockSpec((1, 1, S), lambda b, i: (b, 0, 0), **const)
        w_spec = pl.BlockSpec((D, D), lambda b, i: (0, 0), **const)
        b_spec = pl.BlockSpec((1, D), lambda b, i: (0, 0), **const)
        out_spec = pl.BlockSpec((1, TQ, D), lambda b, i: (b, i, 0))
        return pl.pallas_call(
            kernel,
            out_shape=jax.ShapeDtypeStruct((B, S, D), jnp.float32),
            grid_spec=pltpu.PrefetchScalarGridSpec(
                num_scalar_prefetch=0,
                grid=grid,
                in_specs=[q_spec, kv_spec, kv_spec, mask_spec,
                          w_spec, b_spec, w_spec, b_spec, w_spec, b_spec,
                          w_spec, b_spec],
                out_specs=out_spec,
                scratch_shapes=[pltpu.VMEM((S, D), cd),      # kh cache (per batch)
                                pltpu.VMEM((S, D), cd),      # vh cache (per batch)
                                pltpu.VMEM((TQ, D), cd)]),   # per-tile ctx slab for fused fc
            compiler_params=pltpu.CompilerParams(
                # Batch axis parallel feeds v7x megacore; query-tile axis must stay
                # sequential ("arbitrary") so the per-batch K/V cache is valid.
                # TODO(synk): if B == 1 on v7x, precompute kh/vh outside the kernel and make
                # the query-tile axis the parallel one instead.
                dimension_semantics=("parallel", "arbitrary"),
                # Explicit budget: safe on v5e/v6e (128 MiB phys, 16/32 MiB scoped default)
                # and equals v7x physical VMEM.  Re-derive when adding KV tiling.
                vmem_limit_bytes=64 * 1024 * 1024),
        )(q_in, k_in, v_in, mask,
          wq_in, bq, wk_in, bk, wv_in, bv,
          fcw_in, fc_b)

    try:
        return call(single_buffer=True)
    except Exception:
        # Pallas build without BlockSpec pipeline_mode support: identical kernel, default
        # double buffering (only the VMEM footprint differs).
        return call(single_buffer=False)


def init_params(key, hidden_size, num_heads):
    """Head-fused parameters: columns [h*hd:(h+1)*hd] of wq/wk/wv belong to head h,
    rows [h*hd:(h+1)*hd] of fc_w consume head h's context (matches torch.cat order)."""
    ks = jax.random.split(key, 8)
    scale = 1.0 / math.sqrt(hidden_size)
    u = lambda k, shape: jax.random.uniform(k, shape, jnp.float32, -scale, scale)
    return {
        "num_heads": num_heads,
        "wq": u(ks[0], (hidden_size, hidden_size)),
        "bq": u(ks[1], (1, hidden_size)),
        "wk": u(ks[2], (hidden_size, hidden_size)),
        "bk": u(ks[3], (1, hidden_size)),
        "wv": u(ks[4], (hidden_size, hidden_size)),
        "bv": u(ks[5], (1, hidden_size)),
        "fc_w": u(ks[6], (hidden_size, hidden_size)),
        "fc_b": u(ks[7], (1, hidden_size)),
    }


if __name__ == "__main__":
    B, S, D, H = 2, 8, 32, 4  # batch, seq, hidden_size, num_attention_heads

    root = jax.random.PRNGKey(0)
    kq, kk, kv, km, kp = jax.random.split(root, 5)

    query = jax.random.normal(kq, (B, S, D), jnp.float32)
    key = jax.random.normal(kk, (B, S, D), jnp.float32)
    value = jax.random.normal(kv, (B, S, D), jnp.float32)
    # mask: 1 = attend, 0 = masked; last two key positions of batch 1 masked.
    mask = jnp.ones((B, 1, S), jnp.int32).at[1, 0, -2:].set(0)

    params = init_params(kp, D, H)

    out = multi_head_attention(query, key, value, mask, params)
    jax.block_until_ready(out)
    assert out.shape == (B, S, D)
    print("KERNEL_OK")
</pallas_src>

<mosaic_0001>
module attributes {stable_mosaic.version = 11 : i64} {
  func.func @_mha_kernel(%arg0: i32, %arg1: i32, %arg2: memref<1x8x32xf32, #tpu.memory_space<vmem>>, %arg3: memref<1x8x32xf32, #tpu.memory_space<vmem>>, %arg4: memref<1x8x32xf32, #tpu.memory_space<vmem>>, %arg5: memref<1x1x8xi32, #tpu.memory_space<vmem>>, %arg6: memref<32x32xf32, #tpu.memory_space<vmem>>, %arg7: memref<1x32xf32, #tpu.memory_space<vmem>>, %arg8: memref<32x32xf32, #tpu.memory_space<vmem>>, %arg9: memref<1x32xf32, #tpu.memory_space<vmem>>, %arg10: memref<32x32xf32, #tpu.memory_space<vmem>>, %arg11: memref<1x32xf32, #tpu.memory_space<vmem>>, %arg12: memref<32x32xf32, #tpu.memory_space<vmem>>, %arg13: memref<1x32xf32, #tpu.memory_space<vmem>>, %arg14: memref<1x8x32xf32, #tpu.memory_space<vmem>>, %arg15: memref<8x32xf32, #tpu.memory_space<vmem>>, %arg16: memref<8x32xf32, #tpu.memory_space<vmem>>, %arg17: memref<8x32xf32, #tpu.memory_space<vmem>>) attributes {dimension_semantics = [#tpu.dimension_semantics<parallel>, #tpu.dimension_semantics<arbitrary>], iteration_bounds = array<i64: 2, 1>, scalar_prefetch = 0 : i64, scratch_operands = 3 : i64, tpu.core_type = #tpu.core_type<tc>, window_params = [{transform_indices = @transform_0, window_bounds = array<i64: 1, 8, 32>}, {pipeline_mode = #tpu.pipeline_mode<synchronous>, transform_indices = @transform_1, window_bounds = array<i64: 1, 8, 32>}, {pipeline_mode = #tpu.pipeline_mode<synchronous>, transform_indices = @transform_2, window_bounds = array<i64: 1, 8, 32>}, {pipeline_mode = #tpu.pipeline_mode<synchronous>, transform_indices = @transform_3, window_bounds = array<i64: 1, 1, 8>}, {pipeline_mode = #tpu.pipeline_mode<synchronous>, transform_indices = @transform_4, window_bounds = array<i64: 32, 32>}, {pipeline_mode = #tpu.pipeline_mode<synchronous>, transform_indices = @transform_5, window_bounds = array<i64: 1, 32>}, {pipeline_mode = #tpu.pipeline_mode<synchronous>, transform_indices = @transform_6, window_bounds = array<i64: 32, 32>}, {pipeline_mode = #tpu.pipeline_mode<synchronous>, transform_indices = @transform_7, window_bounds = array<i64: 1, 32>}, {pipeline_mode = #tpu.pipeline_mode<synchronous>, transform_indices = @transform_8, window_bounds = array<i64: 32, 32>}, {pipeline_mode = #tpu.pipeline_mode<synchronous>, transform_indices = @transform_9, window_bounds = array<i64: 1, 32>}, {pipeline_mode = #tpu.pipeline_mode<synchronous>, transform_indices = @transform_10, window_bounds = array<i64: 32, 32>}, {pipeline_mode = #tpu.pipeline_mode<synchronous>, transform_indices = @transform_11, window_bounds = array<i64: 1, 32>}, {transform_indices = @transform_12, window_bounds = array<i64: 1, 8, 32>}]} {
    %c0_i32 = arith.constant 0 : i32
    %0 = arith.cmpi eq, %arg1, %c0_i32 : i32
    %1 = arith.extui %0 : i1 to i32
    %c0_i32_0 = arith.constant 0 : i32
    %2 = arith.cmpi ne, %1, %c0_i32_0 : i32
    scf.if %2 {
      %c0_51 = arith.constant 0 : index
      %c0_52 = arith.constant 0 : index
      %c0_53 = arith.constant 0 : index
      %101 = vector.load %arg3[%c0_51, %c0_52, %c0_53] : memref<1x8x32xf32, #tpu.memory_space<vmem>>, vector<1x8x32xf32>
      %102 = vector.shape_cast %101 : vector<1x8x32xf32> to vector<8x32xf32>
      %c0_54 = arith.constant 0 : index
      %c0_55 = arith.constant 0 : index
      %103 = vector.load %arg8[%c0_54, %c0_55] : memref<32x32xf32, #tpu.memory_space<vmem>>, vector<32x32xf32>
      %cst_56 = arith.constant dense<0.000000e+00> : vector<8x32xf32>
      %104 = tpu.matmul %102, %103, %cst_56 {dimension_numbers = #tpu.dot_dimension_numbers<[1], [0], [0], [1], [0, 0, 1, 1], [], []>} : vector<8x32xf32>, vector<32x32xf32>, vector<8x32xf32> -> vector<8x32xf32>
      %c0_57 = arith.constant 0 : index
      %c0_58 = arith.constant 0 : index
      %105 = vector.load %arg9[%c0_57, %c0_58] : memref<1x32xf32, #tpu.memory_space<vmem>>, vector<1x32xf32>
      %106 = vector.broadcast %105 : vector<1x32xf32> to vector<8x32xf32>
      %107 = arith.addf %104, %106 : vector<8x32xf32>
      %c0_59 = arith.constant 0 : index
      %c0_60 = arith.constant 0 : index
      %c0_61 = arith.constant 0 : index
      %108 = vector.load %arg4[%c0_59, %c0_60, %c0_61] : memref<1x8x32xf32, #tpu.memory_space<vmem>>, vector<1x8x32xf32>
      %109 = vector.shape_cast %108 : vector<1x8x32xf32> to vector<8x32xf32>
      %c0_62 = arith.constant 0 : index
      %c0_63 = arith.constant 0 : index
      %110 = vector.load %arg10[%c0_62, %c0_63] : memref<32x32xf32, #tpu.memory_space<vmem>>, vector<32x32xf32>
      %cst_64 = arith.constant dense<0.000000e+00> : vector<8x32xf32>
      %111 = tpu.matmul %109, %110, %cst_64 {dimension_numbers = #tpu.dot_dimension_numbers<[1], [0], [0], [1], [0, 0, 1, 1], [], []>} : vector<8x32xf32>, vector<32x32xf32>, vector<8x32xf32> -> vector<8x32xf32>
      %c0_65 = arith.constant 0 : index
      %c0_66 = arith.constant 0 : index
      %112 = vector.load %arg11[%c0_65, %c0_66] : memref<1x32xf32, #tpu.memory_space<vmem>>, vector<1x32xf32>
      %113 = vector.broadcast %112 : vector<1x32xf32> to vector<8x32xf32>
      %114 = arith.addf %111, %113 : vector<8x32xf32>
      %c0_67 = arith.constant 0 : index
      %c0_68 = arith.constant 0 : index
      %115 = vector.load %arg15[%c0_67, %c0_68] : memref<8x32xf32, #tpu.memory_space<vmem>>, vector<8x32xf32>
      tpu.vector_store %arg15[%c0_67, %c0_68], %107 {strides = array<i32>} : memref<8x32xf32, #tpu.memory_space<vmem>>, vector<8x32xf32>,
      %c0_69 = arith.constant 0 : index
      %c0_70 = arith.constant 0 : index
      %116 = vector.load %arg16[%c0_69, %c0_70] : memref<8x32xf32, #tpu.memory_space<vmem>>, vector<8x32xf32>
      tpu.vector_store %arg16[%c0_69, %c0_70], %114 {strides = array<i32>} : memref<8x32xf32, #tpu.memory_space<vmem>>, vector<8x32xf32>,
    } else {
    }
    %c0 = arith.constant 0 : index
    %c0_1 = arith.constant 0 : index
    %c0_2 = arith.constant 0 : index
    %3 = vector.load %arg2[%c0, %c0_1, %c0_2] : memref<1x8x32xf32, #tpu.memory_space<vmem>>, vector<1x8x32xf32>
    %4 = vector.shape_cast %3 : vector<1x8x32xf32> to vector<8x32xf32>
    %c0_3 = arith.constant 0 : index
    %c0_4 = arith.constant 0 : index
    %5 = vector.load %arg6[%c0_3, %c0_4] : memref<32x32xf32, #tpu.memory_space<vmem>>, vector<32x32xf32>
    %cst = arith.constant dense<0.000000e+00> : vector<8x32xf32>
    %6 = tpu.matmul %4, %5, %cst {dimension_numbers = #tpu.dot_dimension_numbers<[1], [0], [0], [1], [0, 0, 1, 1], [], []>} : vector<8x32xf32>, vector<32x32xf32>, vector<8x32xf32> -> vector<8x32xf32>
    %c0_5 = arith.constant 0 : index
    %c0_6 = arith.constant 0 : index
    %7 = vector.load %arg7[%c0_5, %c0_6] : memref<1x32xf32, #tpu.memory_space<vmem>>, vector<1x32xf32>
    %8 = vector.broadcast %7 : vector<1x32xf32> to vector<8x32xf32>
    %9 = arith.addf %6, %8 : vector<8x32xf32>
    %cst_7 = arith.constant 0.353553385 : f32
    %10 = vector.broadcast %cst_7 : f32 to vector<8x32xf32>
    %11 = arith.mulf %9, %10 : vector<8x32xf32>
    %c0_8 = arith.constant 0 : index
    %c0_9 = arith.constant 0 : index
    %12 = vector.load %arg15[%c0_8, %c0_9] : memref<8x32xf32, #tpu.memory_space<vmem>>, vector<8x32xf32>
    %c0_10 = arith.constant 0 : index
    %c0_11 = arith.constant 0 : index
    %13 = vector.load %arg16[%c0_10, %c0_11] : memref<8x32xf32, #tpu.memory_space<vmem>>, vector<8x32xf32>
    %c0_12 = arith.constant 0 : index
    %c0_13 = arith.constant 0 : index
    %c0_14 = arith.constant 0 : index
    %14 = vector.load %arg5[%c0_12, %c0_13, %c0_14] : memref<1x1x8xi32, #tpu.memory_space<vmem>>, vector<1x1x8xi32>
    %15 = vector.shape_cast %14 : vector<1x1x8xi32> to vector<1x8xi32>
    %c0_i32_15 = arith.constant 0 : i32
    %16 = vector.broadcast %c0_i32_15 : i32 to vector<1x8xi32>
    %17 = arith.cmpi eq, %15, %16 : vector<1x8xi32>
    %18 = vector.shape_cast %17 : vector<1x8xi1> to vector<1x8xi1>
    %19 = vector.broadcast %18 : vector<1x8xi1> to vector<8x8xi1>
    %20 = vector.extract_strided_slice %11 {offsets = [0, 0], sizes = [8, 8], strides = [1, 1]} : vector<8x32xf32> to vector<8x8xf32>
    %21 = vector.extract_strided_slice %12 {offsets = [0, 0], sizes = [8, 8], strides = [1, 1]} : vector<8x32xf32> to vector<8x8xf32>
    %cst_16 = arith.constant dense<0.000000e+00> : vector<8x8xf32>
    %22 = tpu.matmul %20, %21, %cst_16 {dimension_numbers = #tpu.dot_dimension_numbers<[1], [1], [0], [0], [0, 0, 1, 0], [], []>} : vector<8x8xf32>, vector<8x8xf32>, vector<8x8xf32> -> vector<8x8xf32>
    %cst_17 = arith.constant -1.000000e+09 : f32
    %23 = vector.broadcast %cst_17 : f32 to vector<8x8xf32>
    %24 = arith.select %19, %23, %22 : vector<8x8xi1>, vector<8x8xf32>
    %cst_18 = arith.constant dense<0xFF800000> : vector<8xf32>
    %25 = vector.multi_reduction <maximumf>, %24, %cst_18 [1] : vector<8x8xf32> to vector<8xf32>
    %26 = vector.shape_cast %25 : vector<8xf32> to vector<8x1xf32>
    %27 = vector.broadcast %26 : vector<8x1xf32> to vector<8x8xf32>
    %28 = arith.subf %24, %27 : vector<8x8xf32>
    %29 = math.exp %28 : vector<8x8xf32>
    %cst_19 = arith.constant dense<0.000000e+00> : vector<8xf32>
    %30 = vector.multi_reduction <add>, %29, %cst_19 [1] : vector<8x8xf32> to vector<8xf32>
    %31 = vector.shape_cast %30 : vector<8xf32> to vector<8x1xf32>
    %32 = tpu.reciprocal %31 : vector<8x1xf32> -> vector<8x1xf32>
    %33 = vector.broadcast %32 : vector<8x1xf32> to vector<8x8xf32>
    %34 = arith.mulf %29, %33 : vector<8x8xf32>
    %35 = vector.extract_strided_slice %13 {offsets = [0, 0], sizes = [8, 8], strides = [1, 1]} : vector<8x32xf32> to vector<8x8xf32>
    %cst_20 = arith.constant dense<0.000000e+00> : vector<8x8xf32>
    %36 = tpu.matmul %34, %35, %cst_20 {dimension_numbers = #tpu.dot_dimension_numbers<[1], [0], [0], [1], [0, 0, 1, 1], [], []>} : vector<8x8xf32>, vector<8x8xf32>, vector<8x8xf32> -> vector<8x8xf32>
    %c0_21 = arith.constant 0 : index
    %c0_22 = arith.constant 0 : index
    %37 = vector.load %arg17[%c0_21, %c0_22] : memref<8x32xf32, #tpu.memory_space<vmem>>, vector<8x8xf32>
    tpu.vector_store %arg17[%c0_21, %c0_22], %36 {strides = array<i32>} : memref<8x32xf32, #tpu.memory_space<vmem>>, vector<8x8xf32>,
    %38 = vector.extract_strided_slice %11 {offsets = [0, 8], sizes = [8, 8], strides = [1, 1]} : vector<8x32xf32> to vector<8x8xf32>
    %39 = vector.extract_strided_slice %12 {offsets = [0, 8], sizes = [8, 8], strides = [1, 1]} : vector<8x32xf32> to vector<8x8xf32>
    %cst_23 = arith.constant dense<0.000000e+00> : vector<8x8xf32>
    %40 = tpu.matmul %38, %39, %cst_23 {dimension_numbers = #tpu.dot_dimension_numbers<[1], [1], [0], [0], [0, 0, 1, 0], [], []>} : vector<8x8xf32>, vector<8x8xf32>, vector<8x8xf32> -> vector<8x8xf32>
    %cst_24 = arith.constant -1.000000e+09 : f32
    %41 = vector.broadcast %cst_24 : f32 to vector<8x8xf32>
    %42 = arith.select %19, %41, %40 : vector<8x8xi1>, vector<8x8xf32>
    %cst_25 = arith.constant dense<0xFF800000> : vector<8xf32>
    %43 = vector.multi_reduction <maximumf>, %42, %cst_25 [1] : vector<8x8xf32> to vector<8xf32>
    %44 = vector.shape_cast %43 : vector<8xf32> to vector<8x1xf32>
    %45 = vector.broadcast %44 : vector<8x1xf32> to vector<8x8xf32>
    %46 = arith.subf %42, %45 : vector<8x8xf32>
    %47 = math.exp %46 : vector<8x8xf32>
    %cst_26 = arith.constant dense<0.000000e+00> : vector<8xf32>
    %48 = vector.multi_reduction <add>, %47, %cst_26 [1] : vector<8x8xf32> to vector<8xf32>
    %49 = vector.shape_cast %48 : vector<8xf32> to vector<8x1xf32>
    %50 = tpu.reciprocal %49 : vector<8x1xf32> -> vector<8x1xf32>
    %51 = vector.broadcast %50 : vector<8x1xf32> to vector<8x8xf32>
    %52 = arith.mulf %47, %51 : vector<8x8xf32>
    %53 = vector.extract_strided_slice %13 {offsets = [0, 8], sizes = [8, 8], strides = [1, 1]} : vector<8x32xf32> to vector<8x8xf32>
    %cst_27 = arith.constant dense<0.000000e+00> : vector<8x8xf32>
    %54 = tpu.matmul %52, %53, %cst_27 {dimension_numbers = #tpu.dot_dimension_numbers<[1], [0], [0], [1], [0, 0, 1, 1], [], []>} : vector<8x8xf32>, vector<8x8xf32>, vector<8x8xf32> -> vector<8x8xf32>
    %c0_28 = arith.constant 0 : index
    %c8 = arith.constant 8 : index
    %55 = vector.load %arg17[%c0_28, %c8] : memref<8x32xf32, #tpu.memory_space<vmem>>, vector<8x8xf32>
    tpu.vector_store %arg17[%c0_28, %c8], %54 {strides = array<i32>} : memref<8x32xf32, #tpu.memory_space<vmem>>, vector<8x8xf32>,
    %56 = vector.extract_strided_slice %11 {offsets = [0, 16], sizes = [8, 8], strides = [1, 1]} : vector<8x32xf32> to vector<8x8xf32>
    %57 = vector.extract_strided_slice %12 {offsets = [0, 16], sizes = [8, 8], strides = [1, 1]} : vector<8x32xf32> to vector<8x8xf32>
    %cst_29 = arith.constant dense<0.000000e+00> : vector<8x8xf32>
    %58 = tpu.matmul %56, %57, %cst_29 {dimension_numbers = #tpu.dot_dimension_numbers<[1], [1], [0], [0], [0, 0, 1, 0], [], []>} : vector<8x8xf32>, vector<8x8xf32>, vector<8x8xf32> -> vector<8x8xf32>
    %cst_30 = arith.constant -1.000000e+09 : f32
    %59 = vector.broadcast %cst_30 : f32 to vector<8x8xf32>
    %60 = arith.select %19, %59, %58 : vector<8x8xi1>, vector<8x8xf32>
    %cst_31 = arith.constant dense<0xFF800000> : vector<8xf32>
    %61 = vector.multi_reduction <maximumf>, %60, %cst_31 [1] : vector<8x8xf32> to vector<8xf32>
    %62 = vector.shape_cast %61 : vector<8xf32> to vector<8x1xf32>
    %63 = vector.broadcast %62 : vector<8x1xf32> to vector<8x8xf32>
    %64 = arith.subf %60, %63 : vector<8x8xf32>
    %65 = math.exp %64 : vector<8x8xf32>
    %cst_32 = arith.constant dense<0.000000e+00> : vector<8xf32>
    %66 = vector.multi_reduction <add>, %65, %cst_32 [1] : vector<8x8xf32> to vector<8xf32>
    %67 = vector.shape_cast %66 : vector<8xf32> to vector<8x1xf32>
    %68 = tpu.reciprocal %67 : vector<8x1xf32> -> vector<8x1xf32>
    %69 = vector.broadcast %68 : vector<8x1xf32> to vector<8x8xf32>
    %70 = arith.mulf %65, %69 : vector<8x8xf32>
    %71 = vector.extract_strided_slice %13 {offsets = [0, 16], sizes = [8, 8], strides = [1, 1]} : vector<8x32xf32> to vector<8x8xf32>
    %cst_33 = arith.constant dense<0.000000e+00> : vector<8x8xf32>
    %72 = tpu.matmul %70, %71, %cst_33 {dimension_numbers = #tpu.dot_dimension_numbers<[1], [0], [0], [1], [0, 0, 1, 1], [], []>} : vector<8x8xf32>, vector<8x8xf32>, vector<8x8xf32> -> vector<8x8xf32>
    %c0_34 = arith.constant 0 : index
    %c16 = arith.constant 16 : index
    %73 = vector.load %arg17[%c0_34, %c16] : memref<8x32xf32, #tpu.memory_space<vmem>>, vector<8x8xf32>
    tpu.vector_store %arg17[%c0_34, %c16], %72 {strides = array<i32>} : memref<8x32xf32, #tpu.memory_space<vmem>>, vector<8x8xf32>,
    %74 = vector.extract_strided_slice %11 {offsets = [0, 24], sizes = [8, 8], strides = [1, 1]} : vector<8x32xf32> to vector<8x8xf32>
    %75 = vector.extract_strided_slice %12 {offsets = [0, 24], sizes = [8, 8], strides = [1, 1]} : vector<8x32xf32> to vector<8x8xf32>
    %cst_35 = arith.constant dense<0.000000e+00> : vector<8x8xf32>
    %76 = tpu.matmul %74, %75, %cst_35 {dimension_numbers = #tpu.dot_dimension_numbers<[1], [1], [0], [0], [0, 0, 1, 0], [], []>} : vector<8x8xf32>, vector<8x8xf32>, vector<8x8xf32> -> vector<8x8xf32>
    %cst_36 = arith.constant -1.000000e+09 : f32
    %77 = vector.broadcast %cst_36 : f32 to vector<8x8xf32>
    %78 = arith.select %19, %77, %76 : vector<8x8xi1>, vector<8x8xf32>
    %cst_37 = arith.constant dense<0xFF800000> : vector<8xf32>
    %79 = vector.multi_reduction <maximumf>, %78, %cst_37 [1] : vector<8x8xf32> to vector<8xf32>
    %80 = vector.shape_cast %79 : vector<8xf32> to vector<8x1xf32>
    %81 = vector.broadcast %80 : vector<8x1xf32> to vector<8x8xf32>
    %82 = arith.subf %78, %81 : vector<8x8xf32>
    %83 = math.exp %82 : vector<8x8xf32>
    %cst_38 = arith.constant dense<0.000000e+00> : vector<8xf32>
    %84 = vector.multi_reduction <add>, %83, %cst_38 [1] : vector<8x8xf32> to vector<8xf32>
    %85 = vector.shape_cast %84 : vector<8xf32> to vector<8x1xf32>
    %86 = tpu.reciprocal %85 : vector<8x1xf32> -> vector<8x1xf32>
    %87 = vector.broadcast %86 : vector<8x1xf32> to vector<8x8xf32>
    %88 = arith.mulf %83, %87 : vector<8x8xf32>
    %89 = vector.extract_strided_slice %13 {offsets = [0, 24], sizes = [8, 8], strides = [1, 1]} : vector<8x32xf32> to vector<8x8xf32>
    %cst_39 = arith.constant dense<0.000000e+00> : vector<8x8xf32>
    %90 = tpu.matmul %88, %89, %cst_39 {dimension_numbers = #tpu.dot_dimension_numbers<[1], [0], [0], [1], [0, 0, 1, 1], [], []>} : vector<8x8xf32>, vector<8x8xf32>, vector<8x8xf32> -> vector<8x8xf32>
    %c0_40 = arith.constant 0 : index
    %c24 = arith.constant 24 : index
    %91 = vector.load %arg17[%c0_40, %c24] : memref<8x32xf32, #tpu.memory_space<vmem>>, vector<8x8xf32>
    tpu.vector_store %arg17[%c0_40, %c24], %90 {strides = array<i32>} : memref<8x32xf32, #tpu.memory_space<vmem>>, vector<8x8xf32>,
    %c0_41 = arith.constant 0 : index
    %c0_42 = arith.constant 0 : index
    %92 = vector.load %arg17[%c0_41, %c0_42] : memref<8x32xf32, #tpu.memory_space<vmem>>, vector<8x32xf32>
    %c0_43 = arith.constant 0 : index
    %c0_44 = arith.constant 0 : index
    %93 = vector.load %arg12[%c0_43, %c0_44] : memref<32x32xf32, #tpu.memory_space<vmem>>, vector<32x32xf32>
    %cst_45 = arith.constant dense<0.000000e+00> : vector<8x32xf32>
    %94 = tpu.matmul %92, %93, %cst_45 {dimension_numbers = #tpu.dot_dimension_numbers<[1], [0], [0], [1], [0, 0, 1, 1], [], []>} : vector<8x32xf32>, vector<32x32xf32>, vector<8x32xf32> -> vector<8x32xf32>
    %c0_46 = arith.constant 0 : index
    %c0_47 = arith.constant 0 : index
    %95 = vector.load %arg13[%c0_46, %c0_47] : memref<1x32xf32, #tpu.memory_space<vmem>>, vector<1x32xf32>
    %96 = vector.broadcast %95 : vector<1x32xf32> to vector<8x32xf32>
    %97 = arith.addf %94, %96 : vector<8x32xf32>
    %c0_48 = arith.constant 0 : index
    %c0_49 = arith.constant 0 : index
    %c0_50 = arith.constant 0 : index
    %98 = vector.load %arg14[%c0_48, %c0_49, %c0_50] : memref<1x8x32xf32, #tpu.memory_space<vmem>>, vector<1x8x32xf32>
    %99 = vector.shape_cast %98 : vector<1x8x32xf32> to vector<8x32xf32>
    %100 = vector.shape_cast %97 : vector<8x32xf32> to vector<1x8x32xf32>
    tpu.vector_store %arg14[%c0_48, %c0_49, %c0_50], %100 {strides = array<i32>} : memref<1x8x32xf32, #tpu.memory_space<vmem>>, vector<1x8x32xf32>,
    return
  }
  func.func @transform_0(%arg0: i32, %arg1: i32) -> (i32, i32, i32) {
    %c0_i32 = arith.constant 0 : i32
    %c0_i32_0 = arith.constant 0 : i32
    return %arg0, %arg1, %c0_i32 : i32, i32, i32
  }
  func.func @transform_1(%arg0: i32, %arg1: i32) -> (i32, i32, i32) {
    %c0_i32 = arith.constant 0 : i32
    %c0_i32_0 = arith.constant 0 : i32
    %c0_i32_1 = arith.constant 0 : i32
    return %arg0, %c0_i32, %c0_i32_0 : i32, i32, i32
  }
  func.func @transform_2(%arg0: i32, %arg1: i32) -> (i32, i32, i32) {
    %c0_i32 = arith.constant 0 : i32
    %c0_i32_0 = arith.constant 0 : i32
    %c0_i32_1 = arith.constant 0 : i32
    return %arg0, %c0_i32, %c0_i32_0 : i32, i32, i32
  }
  func.func @transform_3(%arg0: i32, %arg1: i32) -> (i32, i32, i32) {
    %c0_i32 = arith.constant 0 : i32
    %c0_i32_0 = arith.constant 0 : i32
    %c0_i32_1 = arith.constant 0 : i32
    return %arg0, %c0_i32, %c0_i32_0 : i32, i32, i32
  }
  func.func @transform_4(%arg0: i32, %arg1: i32) -> (i32, i32) {
    %c0_i32 = arith.constant 0 : i32
    %c0_i32_0 = arith.constant 0 : i32
    %c0_i32_1 = arith.constant 0 : i32
    return %c0_i32, %c0_i32_0 : i32, i32
  }
  func.func @transform_5(%arg0: i32, %arg1: i32) -> (i32, i32) {
    %c0_i32 = arith.constant 0 : i32
    %c0_i32_0 = arith.constant 0 : i32
    %c0_i32_1 = arith.constant 0 : i32
    return %c0_i32, %c0_i32_0 : i32, i32
  }
  func.func @transform_6(%arg0: i32, %arg1: i32) -> (i32, i32) {
    %c0_i32 = arith.constant 0 : i32
    %c0_i32_0 = arith.constant 0 : i32
    %c0_i32_1 = arith.constant 0 : i32
    return %c0_i32, %c0_i32_0 : i32, i32
  }
  func.func @transform_7(%arg0: i32, %arg1: i32) -> (i32, i32) {
    %c0_i32 = arith.constant 0 : i32
    %c0_i32_0 = arith.constant 0 : i32
    %c0_i32_1 = arith.constant 0 : i32
    return %c0_i32, %c0_i32_0 : i32, i32
  }
  func.func @transform_8(%arg0: i32, %arg1: i32) -> (i32, i32) {
    %c0_i32 = arith.constant 0 : i32
    %c0_i32_0 = arith.constant 0 : i32
    %c0_i32_1 = arith.constant 0 : i32
    return %c0_i32, %c0_i32_0 : i32, i32
  }
  func.func @transform_9(%arg0: i32, %arg1: i32) -> (i32, i32) {
    %c0_i32 = arith.constant 0 : i32
    %c0_i32_0 = arith.constant 0 : i32
    %c0_i32_1 = arith.constant 0 : i32
    return %c0_i32, %c0_i32_0 : i32, i32
  }
  func.func @transform_10(%arg0: i32, %arg1: i32) -> (i32, i32) {
    %c0_i32 = arith.constant 0 : i32
    %c0_i32_0 = arith.constant 0 : i32
    %c0_i32_1 = arith.constant 0 : i32
    return %c0_i32, %c0_i32_0 : i32, i32
  }
  func.func @transform_11(%arg0: i32, %arg1: i32) -> (i32, i32) {
    %c0_i32 = arith.constant 0 : i32
    %c0_i32_0 = arith.constant 0 : i32
    %c0_i32_1 = arith.constant 0 : i32
    return %c0_i32, %c0_i32_0 : i32, i32
  }
  func.func @transform_12(%arg0: i32, %arg1: i32) -> (i32, i32, i32) {
    %c0_i32 = arith.constant 0 : i32
    %c0_i32_0 = arith.constant 0 : i32
    return %arg0, %arg1, %c0_i32 : i32, i32, i32
  }
}

module attributes {stable_mosaic.version = 11 : i64} {
  func.func @_mha_kernel(%arg0: i32, %arg1: i32, %arg2: memref<1x8x32xf32, #tpu.memory_space<vmem>>, %arg3: memref<1x8x32xf32, #tpu.memory_space<vmem>>, %arg4: memref<1x8x32xf32, #tpu.memory_space<vmem>>, %arg5: memref<1x1x8xi32, #tpu.memory_space<vmem>>, %arg6: memref<32x32xf32, #tpu.memory_space<vmem>>, %arg7: memref<1x32xf32, #tpu.memory_space<vmem>>, %arg8: memref<32x32xf32, #tpu.memory_space<vmem>>, %arg9: memref<1x32xf32, #tpu.memory_space<vmem>>, %arg10: memref<32x32xf32, #tpu.memory_space<vmem>>, %arg11: memref<1x32xf32, #tpu.memory_space<vmem>>, %arg12: memref<32x32xf32, #tpu.memory_space<vmem>>, %arg13: memref<1x32xf32, #tpu.memory_space<vmem>>, %arg14: memref<1x8x32xf32, #tpu.memory_space<vmem>>, %arg15: memref<8x32xf32, #tpu.memory_space<vmem>>, %arg16: memref<8x32xf32, #tpu.memory_space<vmem>>, %arg17: memref<8x32xf32, #tpu.memory_space<vmem>>) attributes {dimension_semantics = [#tpu.dimension_semantics<parallel>, #tpu.dimension_semantics<arbitrary>], iteration_bounds = array<i64: 2, 1>, scalar_prefetch = 0 : i64, scratch_operands = 3 : i64, tpu.core_type = #tpu.core_type<tc>, window_params = [{transform_indices = @transform_0, window_bounds = array<i64: 1, 8, 32>}, {transform_indices = @transform_1, window_bounds = array<i64: 1, 8, 32>}, {transform_indices = @transform_2, window_bounds = array<i64: 1, 8, 32>}, {transform_indices = @transform_3, window_bounds = array<i64: 1, 1, 8>}, {pipeline_mode = #tpu.pipeline_mode<synchronous>, transform_indices = @transform_4, window_bounds = array<i64: 32, 32>}, {pipeline_mode = #tpu.pipeline_mode<synchronous>, transform_indices = @transform_5, window_bounds = array<i64: 1, 32>}, {pipeline_mode = #tpu.pipeline_mode<synchronous>, transform_indices = @transform_6, window_bounds = array<i64: 32, 32>}, {pipeline_mode = #tpu.pipeline_mode<synchronous>, transform_indices = @transform_7, window_bounds = array<i64: 1, 32>}, {pipeline_mode = #tpu.pipeline_mode<synchronous>, transform_indices = @transform_8, window_bounds = array<i64: 32, 32>}, {pipeline_mode = #tpu.pipeline_mode<synchronous>, transform_indices = @transform_9, window_bounds = array<i64: 1, 32>}, {pipeline_mode = #tpu.pipeline_mode<synchronous>, transform_indices = @transform_10, window_bounds = array<i64: 32, 32>}, {pipeline_mode = #tpu.pipeline_mode<synchronous>, transform_indices = @transform_11, window_bounds = array<i64: 1, 32>}, {transform_indices = @transform_12, window_bounds = array<i64: 1, 8, 32>}]} {
    %c0_i32 = arith.constant 0 : i32
    %0 = arith.cmpi eq, %arg1, %c0_i32 : i32
    %1 = arith.extui %0 : i1 to i32
    %c0_i32_0 = arith.constant 0 : i32
    %2 = arith.cmpi ne, %1, %c0_i32_0 : i32
    scf.if %2 {
      %c0_51 = arith.constant 0 : index
      %c0_52 = arith.constant 0 : index
      %c0_53 = arith.constant 0 : index
      %101 = vector.load %arg3[%c0_51, %c0_52, %c0_53] : memref<1x8x32xf32, #tpu.memory_space<vmem>>, vector<1x8x32xf32>
      %102 = vector.shape_cast %101 : vector<1x8x32xf32> to vector<8x32xf32>
      %c0_54 = arith.constant 0 : index
      %c0_55 = arith.constant 0 : index
      %103 = vector.load %arg8[%c0_54, %c0_55] : memref<32x32xf32, #tpu.memory_space<vmem>>, vector<32x32xf32>
      %cst_56 = arith.constant dense<0.000000e+00> : vector<8x32xf32>
      %104 = tpu.matmul %102, %103, %cst_56 {dimension_numbers = #tpu.dot_dimension_numbers<[1], [0], [0], [1], [0, 0, 1, 1], [], []>} : vector<8x32xf32>, vector<32x32xf32>, vector<8x32xf32> -> vector<8x32xf32>
      %c0_57 = arith.constant 0 : index
      %c0_58 = arith.constant 0 : index
      %105 = vector.load %arg9[%c0_57, %c0_58] : memref<1x32xf32, #tpu.memory_space<vmem>>, vector<1x32xf32>
      %106 = vector.broadcast %105 : vector<1x32xf32> to vector<8x32xf32>
      %107 = arith.addf %104, %106 : vector<8x32xf32>
      %c0_59 = arith.constant 0 : index
      %c0_60 = arith.constant 0 : index
      %c0_61 = arith.constant 0 : index
      %108 = vector.load %arg4[%c0_59, %c0_60, %c0_61] : memref<1x8x32xf32, #tpu.memory_space<vmem>>, vector<1x8x32xf32>
      %109 = vector.shape_cast %108 : vector<1x8x32xf32> to vector<8x32xf32>
      %c0_62 = arith.constant 0 : index
      %c0_63 = arith.constant 0 : index
      %110 = vector.load %arg10[%c0_62, %c0_63] : memref<32x32xf32, #tpu.memory_space<vmem>>, vector<32x32xf32>
      %cst_64 = arith.constant dense<0.000000e+00> : vector<8x32xf32>
      %111 = tpu.matmul %109, %110, %cst_64 {dimension_numbers = #tpu.dot_dimension_numbers<[1], [0], [0], [1], [0, 0, 1, 1], [], []>} : vector<8x32xf32>, vector<32x32xf32>, vector<8x32xf32> -> vector<8x32xf32>
      %c0_65 = arith.constant 0 : index
      %c0_66 = arith.constant 0 : index
      %112 = vector.load %arg11[%c0_65, %c0_66] : memref<1x32xf32, #tpu.memory_space<vmem>>, vector<1x32xf32>
      %113 = vector.broadcast %112 : vector<1x32xf32> to vector<8x32xf32>
      %114 = arith.addf %111, %113 : vector<8x32xf32>
      %c0_67 = arith.constant 0 : index
      %c0_68 = arith.constant 0 : index
      %115 = vector.load %arg15[%c0_67, %c0_68] : memref<8x32xf32, #tpu.memory_space<vmem>>, vector<8x32xf32>
      tpu.vector_store %arg15[%c0_67, %c0_68], %107 {strides = array<i32>} : memref<8x32xf32, #tpu.memory_space<vmem>>, vector<8x32xf32>,
      %c0_69 = arith.constant 0 : index
      %c0_70 = arith.constant 0 : index
      %116 = vector.load %arg16[%c0_69, %c0_70] : memref<8x32xf32, #tpu.memory_space<vmem>>, vector<8x32xf32>
      tpu.vector_store %arg16[%c0_69, %c0_70], %114 {strides = array<i32>} : memref<8x32xf32, #tpu.memory_space<vmem>>, vector<8x32xf32>,
    } else {
    }
    %c0 = arith.constant 0 : index
    %c0_1 = arith.constant 0 : index
    %c0_2 = arith.constant 0 : index
    %3 = vector.load %arg2[%c0, %c0_1, %c0_2] : memref<1x8x32xf32, #tpu.memory_space<vmem>>, vector<1x8x32xf32>
    %4 = vector.shape_cast %3 : vector<1x8x32xf32> to vector<8x32xf32>
    %c0_3 = arith.constant 0 : index
    %c0_4 = arith.constant 0 : index
    %5 = vector.load %arg6[%c0_3, %c0_4] : memref<32x32xf32, #tpu.memory_space<vmem>>, vector<32x32xf32>
    %cst = arith.constant dense<0.000000e+00> : vector<8x32xf32>
    %6 = tpu.matmul %4, %5, %cst {dimension_numbers = #tpu.dot_dimension_numbers<[1], [0], [0], [1], [0, 0, 1, 1], [], []>} : vector<8x32xf32>, vector<32x32xf32>, vector<8x32xf32> -> vector<8x32xf32>
    %c0_5 = arith.constant 0 : index
    %c0_6 = arith.constant 0 : index
    %7 = vector.load %arg7[%c0_5, %c0_6] : memref<1x32xf32, #tpu.memory_space<vmem>>, vector<1x32xf32>
    %8 = vector.broadcast %7 : vector<1x32xf32> to vector<8x32xf32>
    %9 = arith.addf %6, %8 : vector<8x32xf32>
    %cst_7 = arith.constant 0.353553385 : f32
    %10 = vector.broadcast %cst_7 : f32 to vector<8x32xf32>
    %11 = arith.mulf %9, %10 : vector<8x32xf32>
    %c0_8 = arith.constant 0 : index
    %c0_9 = arith.constant 0 : index
    %12 = vector.load %arg15[%c0_8, %c0_9] : memref<8x32xf32, #tpu.memory_space<vmem>>, vector<8x32xf32>
    %c0_10 = arith.constant 0 : index
    %c0_11 = arith.constant 0 : index
    %13 = vector.load %arg16[%c0_10, %c0_11] : memref<8x32xf32, #tpu.memory_space<vmem>>, vector<8x32xf32>
    %c0_12 = arith.constant 0 : index
    %c0_13 = arith.constant 0 : index
    %c0_14 = arith.constant 0 : index
    %14 = vector.load %arg5[%c0_12, %c0_13, %c0_14] : memref<1x1x8xi32, #tpu.memory_space<vmem>>, vector<1x1x8xi32>
    %15 = vector.shape_cast %14 : vector<1x1x8xi32> to vector<1x8xi32>
    %c0_i32_15 = arith.constant 0 : i32
    %16 = vector.broadcast %c0_i32_15 : i32 to vector<1x8xi32>
    %17 = arith.cmpi eq, %15, %16 : vector<1x8xi32>
    %18 = vector.shape_cast %17 : vector<1x8xi1> to vector<1x8xi1>
    %19 = vector.broadcast %18 : vector<1x8xi1> to vector<8x8xi1>
    %20 = vector.extract_strided_slice %11 {offsets = [0, 0], sizes = [8, 8], strides = [1, 1]} : vector<8x32xf32> to vector<8x8xf32>
    %21 = vector.extract_strided_slice %12 {offsets = [0, 0], sizes = [8, 8], strides = [1, 1]} : vector<8x32xf32> to vector<8x8xf32>
    %cst_16 = arith.constant dense<0.000000e+00> : vector<8x8xf32>
    %22 = tpu.matmul %20, %21, %cst_16 {dimension_numbers = #tpu.dot_dimension_numbers<[1], [1], [0], [0], [0, 0, 1, 0], [], []>} : vector<8x8xf32>, vector<8x8xf32>, vector<8x8xf32> -> vector<8x8xf32>
    %cst_17 = arith.constant -1.000000e+09 : f32
    %23 = vector.broadcast %cst_17 : f32 to vector<8x8xf32>
    %24 = arith.select %19, %23, %22 : vector<8x8xi1>, vector<8x8xf32>
    %cst_18 = arith.constant dense<0xFF800000> : vector<8xf32>
    %25 = vector.multi_reduction <maximumf>, %24, %cst_18 [1] : vector<8x8xf32> to vector<8xf32>
    %26 = vector.shape_cast %25 : vector<8xf32> to vector<8x1xf32>
    %27 = vector.broadcast %26 : vector<8x1xf32> to vector<8x8xf32>
    %28 = arith.subf %24, %27 : vector<8x8xf32>
    %29 = math.exp %28 : vector<8x8xf32>
    %cst_19 = arith.constant dense<0.000000e+00> : vector<8xf32>
    %30 = vector.multi_reduction <add>, %29, %cst_19 [1] : vector<8x8xf32> to vector<8xf32>
    %31 = vector.shape_cast %30 : vector<8xf32> to vector<8x1xf32>
    %32 = tpu.reciprocal %31 : vector<8x1xf32> -> vector<8x1xf32>
    %33 = vector.broadcast %32 : vector<8x1xf32> to vector<8x8xf32>
    %34 = arith.mulf %29, %33 : vector<8x8xf32>
    %35 = vector.extract_strided_slice %13 {offsets = [0, 0], sizes = [8, 8], strides = [1, 1]} : vector<8x32xf32> to vector<8x8xf32>
    %cst_20 = arith.constant dense<0.000000e+00> : vector<8x8xf32>
    %36 = tpu.matmul %34, %35, %cst_20 {dimension_numbers = #tpu.dot_dimension_numbers<[1], [0], [0], [1], [0, 0, 1, 1], [], []>} : vector<8x8xf32>, vector<8x8xf32>, vector<8x8xf32> -> vector<8x8xf32>
    %c0_21 = arith.constant 0 : index
    %c0_22 = arith.constant 0 : index
    %37 = vector.load %arg17[%c0_21, %c0_22] : memref<8x32xf32, #tpu.memory_space<vmem>>, vector<8x8xf32>
    tpu.vector_store %arg17[%c0_21, %c0_22], %36 {strides = array<i32>} : memref<8x32xf32, #tpu.memory_space<vmem>>, vector<8x8xf32>,
    %38 = vector.extract_strided_slice %11 {offsets = [0, 8], sizes = [8, 8], strides = [1, 1]} : vector<8x32xf32> to vector<8x8xf32>
    %39 = vector.extract_strided_slice %12 {offsets = [0, 8], sizes = [8, 8], strides = [1, 1]} : vector<8x32xf32> to vector<8x8xf32>
    %cst_23 = arith.constant dense<0.000000e+00> : vector<8x8xf32>
    %40 = tpu.matmul %38, %39, %cst_23 {dimension_numbers = #tpu.dot_dimension_numbers<[1], [1], [0], [0], [0, 0, 1, 0], [], []>} : vector<8x8xf32>, vector<8x8xf32>, vector<8x8xf32> -> vector<8x8xf32>
    %cst_24 = arith.constant -1.000000e+09 : f32
    %41 = vector.broadcast %cst_24 : f32 to vector<8x8xf32>
    %42 = arith.select %19, %41, %40 : vector<8x8xi1>, vector<8x8xf32>
    %cst_25 = arith.constant dense<0xFF800000> : vector<8xf32>
    %43 = vector.multi_reduction <maximumf>, %42, %cst_25 [1] : vector<8x8xf32> to vector<8xf32>
    %44 = vector.shape_cast %43 : vector<8xf32> to vector<8x1xf32>
    %45 = vector.broadcast %44 : vector<8x1xf32> to vector<8x8xf32>
    %46 = arith.subf %42, %45 : vector<8x8xf32>
    %47 = math.exp %46 : vector<8x8xf32>
    %cst_26 = arith.constant dense<0.000000e+00> : vector<8xf32>
    %48 = vector.multi_reduction <add>, %47, %cst_26 [1] : vector<8x8xf32> to vector<8xf32>
    %49 = vector.shape_cast %48 : vector<8xf32> to vector<8x1xf32>
    %50 = tpu.reciprocal %49 : vector<8x1xf32> -> vector<8x1xf32>
    %51 = vector.broadcast %50 : vector<8x1xf32> to vector<8x8xf32>
    %52 = arith.mulf %47, %51 : vector<8x8xf32>
    %53 = vector.extract_strided_slice %13 {offsets = [0, 8], sizes = [8, 8], strides = [1, 1]} : vector<8x32xf32> to vector<8x8xf32>
    %cst_27 = arith.constant dense<0.000000e+00> : vector<8x8xf32>
    %54 = tpu.matmul %52, %53, %cst_27 {dimension_numbers = #tpu.dot_dimension_numbers<[1], [0], [0], [1], [0, 0, 1, 1], [], []>} : vector<8x8xf32>, vector<8x8xf32>, vector<8x8xf32> -> vector<8x8xf32>
    %c0_28 = arith.constant 0 : index
    %c8 = arith.constant 8 : index
    %55 = vector.load %arg17[%c0_28, %c8] : memref<8x32xf32, #tpu.memory_space<vmem>>, vector<8x8xf32>
    tpu.vector_store %arg17[%c0_28, %c8], %54 {strides = array<i32>} : memref<8x32xf32, #tpu.memory_space<vmem>>, vector<8x8xf32>,
    %56 = vector.extract_strided_slice %11 {offsets = [0, 16], sizes = [8, 8], strides = [1, 1]} : vector<8x32xf32> to vector<8x8xf32>
    %57 = vector.extract_strided_slice %12 {offsets = [0, 16], sizes = [8, 8], strides = [1, 1]} : vector<8x32xf32> to vector<8x8xf32>
    %cst_29 = arith.constant dense<0.000000e+00> : vector<8x8xf32>
    %58 = tpu.matmul %56, %57, %cst_29 {dimension_numbers = #tpu.dot_dimension_numbers<[1], [1], [0], [0], [0, 0, 1, 0], [], []>} : vector<8x8xf32>, vector<8x8xf32>, vector<8x8xf32> -> vector<8x8xf32>
    %cst_30 = arith.constant -1.000000e+09 : f32
    %59 = vector.broadcast %cst_30 : f32 to vector<8x8xf32>
    %60 = arith.select %19, %59, %58 : vector<8x8xi1>, vector<8x8xf32>
    %cst_31 = arith.constant dense<0xFF800000> : vector<8xf32>
    %61 = vector.multi_reduction <maximumf>, %60, %cst_31 [1] : vector<8x8xf32> to vector<8xf32>
    %62 = vector.shape_cast %61 : vector<8xf32> to vector<8x1xf32>
    %63 = vector.broadcast %62 : vector<8x1xf32> to vector<8x8xf32>
    %64 = arith.subf %60, %63 : vector<8x8xf32>
    %65 = math.exp %64 : vector<8x8xf32>
    %cst_32 = arith.constant dense<0.000000e+00> : vector<8xf32>
    %66 = vector.multi_reduction <add>, %65, %cst_32 [1] : vector<8x8xf32> to vector<8xf32>
    %67 = vector.shape_cast %66 : vector<8xf32> to vector<8x1xf32>
    %68 = tpu.reciprocal %67 : vector<8x1xf32> -> vector<8x1xf32>
    %69 = vector.broadcast %68 : vector<8x1xf32> to vector<8x8xf32>
    %70 = arith.mulf %65, %69 : vector<8x8xf32>
    %71 = vector.extract_strided_slice %13 {offsets = [0, 16], sizes = [8, 8], strides = [1, 1]} : vector<8x32xf32> to vector<8x8xf32>
    %cst_33 = arith.constant dense<0.000000e+00> : vector<8x8xf32>
    %72 = tpu.matmul %70, %71, %cst_33 {dimension_numbers = #tpu.dot_dimension_numbers<[1], [0], [0], [1], [0, 0, 1, 1], [], []>} : vector<8x8xf32>, vector<8x8xf32>, vector<8x8xf32> -> vector<8x8xf32>
    %c0_34 = arith.constant 0 : index
    %c16 = arith.constant 16 : index
    %73 = vector.load %arg17[%c0_34, %c16] : memref<8x32xf32, #tpu.memory_space<vmem>>, vector<8x8xf32>
    tpu.vector_store %arg17[%c0_34, %c16], %72 {strides = array<i32>} : memref<8x32xf32, #tpu.memory_space<vmem>>, vector<8x8xf32>,
    %74 = vector.extract_strided_slice %11 {offsets = [0, 24], sizes = [8, 8], strides = [1, 1]} : vector<8x32xf32> to vector<8x8xf32>
    %75 = vector.extract_strided_slice %12 {offsets = [0, 24], sizes = [8, 8], strides = [1, 1]} : vector<8x32xf32> to vector<8x8xf32>
    %cst_35 = arith.constant dense<0.000000e+00> : vector<8x8xf32>
    %76 = tpu.matmul %74, %75, %cst_35 {dimension_numbers = #tpu.dot_dimension_numbers<[1], [1], [0], [0], [0, 0, 1, 0], [], []>} : vector<8x8xf32>, vector<8x8xf32>, vector<8x8xf32> -> vector<8x8xf32>
    %cst_36 = arith.constant -1.000000e+09 : f32
    %77 = vector.broadcast %cst_36 : f32 to vector<8x8xf32>
    %78 = arith.select %19, %77, %76 : vector<8x8xi1>, vector<8x8xf32>
    %cst_37 = arith.constant dense<0xFF800000> : vector<8xf32>
    %79 = vector.multi_reduction <maximumf>, %78, %cst_37 [1] : vector<8x8xf32> to vector<8xf32>
    %80 = vector.shape_cast %79 : vector<8xf32> to vector<8x1xf32>
    %81 = vector.broadcast %80 : vector<8x1xf32> to vector<8x8xf32>
    %82 = arith.subf %78, %81 : vector<8x8xf32>
    %83 = math.exp %82 : vector<8x8xf32>
    %cst_38 = arith.constant dense<0.000000e+00> : vector<8xf32>
    %84 = vector.multi_reduction <add>, %83, %cst_38 [1] : vector<8x8xf32> to vector<8xf32>
    %85 = vector.shape_cast %84 : vector<8xf32> to vector<8x1xf32>
    %86 = tpu.reciprocal %85 : vector<8x1xf32> -> vector<8x1xf32>
    %87 = vector.broadcast %86 : vector<8x1xf32> to vector<8x8xf32>
    %88 = arith.mulf %83, %87 : vector<8x8xf32>
    %89 = vector.extract_strided_slice %13 {offsets = [0, 24], sizes = [8, 8], strides = [1, 1]} : vector<8x32xf32> to vector<8x8xf32>
    %cst_39 = arith.constant dense<0.000000e+00> : vector<8x8xf32>
    %90 = tpu.matmul %88, %89, %cst_39 {dimension_numbers = #tpu.dot_dimension_numbers<[1], [0], [0], [1], [0, 0, 1, 1], [], []>} : vector<8x8xf32>, vector<8x8xf32>, vector<8x8xf32> -> vector<8x8xf32>
    %c0_40 = arith.constant 0 : index
    %c24 = arith.constant 24 : index
    %91 = vector.load %arg17[%c0_40, %c24] : memref<8x32xf32, #tpu.memory_space<vmem>>, vector<8x8xf32>
    tpu.vector_store %arg17[%c0_40, %c24], %90 {strides = array<i32>} : memref<8x32xf32, #tpu.memory_space<vmem>>, vector<8x8xf32>,
    %c0_41 = arith.constant 0 : index
    %c0_42 = arith.constant 0 : index
    %92 = vector.load %arg17[%c0_41, %c0_42] : memref<8x32xf32, #tpu.memory_space<vmem>>, vector<8x32xf32>
    %c0_43 = arith.constant 0 : index
    %c0_44 = arith.constant 0 : index
    %93 = vector.load %arg12[%c0_43, %c0_44] : memref<32x32xf32, #tpu.memory_space<vmem>>, vector<32x32xf32>
    %cst_45 = arith.constant dense<0.000000e+00> : vector<8x32xf32>
    %94 = tpu.matmul %92, %93, %cst_45 {dimension_numbers = #tpu.dot_dimension_numbers<[1], [0], [0], [1], [0, 0, 1, 1], [], []>} : vector<8x32xf32>, vector<32x32xf32>, vector<8x32xf32> -> vector<8x32xf32>
    %c0_46 = arith.constant 0 : index
    %c0_47 = arith.constant 0 : index
    %95 = vector.load %arg13[%c0_46, %c0_47] : memref<1x32xf32, #tpu.memory_space<vmem>>, vector<1x32xf32>
    %96 = vector.broadcast %95 : vector<1x32xf32> to vector<8x32xf32>
    %97 = arith.addf %94, %96 : vector<8x32xf32>
    %c0_48 = arith.constant 0 : index
    %c0_49 = arith.constant 0 : index
    %c0_50 = arith.constant 0 : index
    %98 = vector.load %arg14[%c0_48, %c0_49, %c0_50] : memref<1x8x32xf32, #tpu.memory_space<vmem>>, vector<1x8x32xf32>
    %99 = vector.shape_cast %98 : vector<1x8x32xf32> to vector<8x32xf32>
    %100 = vector.shape_cast %97 : vector<8x32xf32> to vector<1x8x32xf32>
    tpu.vector_store %arg14[%c0_48, %c0_49, %c0_50], %100 {strides = array<i32>} : memref<1x8x32xf32, #tpu.memory_space<vmem>>, vector<1x8x32xf32>,
    return
  }
  func.func @transform_0(%arg0: i32, %arg1: i32) -> (i32, i32, i32) {
    %c0_i32 = arith.constant 0 : i32
    %c0_i32_0 = arith.constant 0 : i32
    return %arg0, %arg1, %c0_i32 : i32, i32, i32
  }
  func.func @transform_1(%arg0: i32, %arg1: i32) -> (i32, i32, i32) {
    %c0_i32 = arith.constant 0 : i32
    %c0_i32_0 = arith.constant 0 : i32
    %c0_i32_1 = arith.constant 0 : i32
    return %arg0, %c0_i32, %c0_i32_0 : i32, i32, i32
  }
  func.func @transform_2(%arg0: i32, %arg1: i32) -> (i32, i32, i32) {
    %c0_i32 = arith.constant 0 : i32
    %c0_i32_0 = arith.constant 0 : i32
    %c0_i32_1 = arith.constant 0 : i32
    return %arg0, %c0_i32, %c0_i32_0 : i32, i32, i32
  }
  func.func @transform_3(%arg0: i32, %arg1: i32) -> (i32, i32, i32) {
    %c0_i32 = arith.constant 0 : i32
    %c0_i32_0 = arith.constant 0 : i32
    %c0_i32_1 = arith.constant 0 : i32
    return %arg0, %c0_i32, %c0_i32_0 : i32, i32, i32
  }
  func.func @transform_4(%arg0: i32, %arg1: i32) -> (i32, i32) {
    %c0_i32 = arith.constant 0 : i32
    %c0_i32_0 = arith.constant 0 : i32
    %c0_i32_1 = arith.constant 0 : i32
    return %c0_i32, %c0_i32_0 : i32, i32
  }
  func.func @transform_5(%arg0: i32, %arg1: i32) -> (i32, i32) {
    %c0_i32 = arith.constant 0 : i32
    %c0_i32_0 = arith.constant 0 : i32
    %c0_i32_1 = arith.constant 0 : i32
    return %c0_i32, %c0_i32_0 : i32, i32
  }
  func.func @transform_6(%arg0: i32, %arg1: i32) -> (i32, i32) {
    %c0_i32 = arith.constant 0 : i32
    %c0_i32_0 = arith.constant 0 : i32
    %c0_i32_1 = arith.constant 0 : i32
    return %c0_i32, %c0_i32_0 : i32, i32
  }
  func.func @transform_7(%arg0: i32, %arg1: i32) -> (i32, i32) {
    %c0_i32 = arith.constant 0 : i32
    %c0_i32_0 = arith.constant 0 : i32
    %c0_i32_1 = arith.constant 0 : i32
    return %c0_i32, %c0_i32_0 : i32, i32
  }
  func.func @transform_8(%arg0: i32, %arg1: i32) -> (i32, i32) {
    %c0_i32 = arith.constant 0 : i32
    %c0_i32_0 = arith.constant 0 : i32
    %c0_i32_1 = arith.constant 0 : i32
    return %c0_i32, %c0_i32_0 : i32, i32
  }
  func.func @transform_9(%arg0: i32, %arg1: i32) -> (i32, i32) {
    %c0_i32 = arith.constant 0 : i32
    %c0_i32_0 = arith.constant 0 : i32
    %c0_i32_1 = arith.constant 0 : i32
    return %c0_i32, %c0_i32_0 : i32, i32
  }
  func.func @transform_10(%arg0: i32, %arg1: i32) -> (i32, i32) {
    %c0_i32 = arith.constant 0 : i32
    %c0_i32_0 = arith.constant 0 : i32
    %c0_i32_1 = arith.constant 0 : i32
    return %c0_i32, %c0_i32_0 : i32, i32
  }
  func.func @transform_11(%arg0: i32, %arg1: i32) -> (i32, i32) {
    %c0_i32 = arith.constant 0 : i32
    %c0_i32_0 = arith.constant 0 : i32
    %c0_i32_1 = arith.constant 0 : i32
    return %c0_i32, %c0_i32_0 : i32, i32
  }
  func.func @transform_12(%arg0: i32, %arg1: i32) -> (i32, i32, i32) {
    %c0_i32 = arith.constant 0 : i32
    %c0_i32_0 = arith.constant 0 : i32
    return %arg0, %arg1, %c0_i32 : i32, i32, i32
  }
}

</mosaic_0001>

<llo_original>
// kernel: tpu_custom_call.1
$region0: #{tpu_custom_call.1}
  #allocation0 [shape = 'u32[]', space=smem, size = 0x4, offset = 0x4, fixed_abs, tag = 'smem constant byte address 0x4 - core index']
  #allocation1 [shape = 'u32[144,128]{1,0:T(1,128)}', space=vmem, size = 0x12000, scoped, tag = 'internal scratch']
  #allocation2 [shape = 'f32[8,32]{1,0:T(8,128)}', space=vmem, size = 0x1000, scoped, tag = 'scratch operand']
  #allocation3 [shape = 'f32[8,32]{1,0:T(8,128)}', space=vmem, size = 0x1000, scoped, tag = 'scratch operand']
  #allocation4 [shape = 'f32[8,32]{1,0:T(8,128)}', space=vmem, size = 0x1000, scoped, tag = 'scratch operand']
  %s0 = inlined_call_operand.hbm [shape: f32[2,8,32], index: 0, kind: input, shape index: {}]
  %s1 = inlined_call_operand.hbm [shape: f32[2,8,32], index: 1, kind: input, shape index: {}]
  %s2 = inlined_call_operand.hbm [shape: f32[2,8,32], index: 2, kind: input, shape index: {}]
  %s3 = inlined_call_operand.hbm [shape: s32[2,1,8], index: 3, kind: input, shape index: {}]
  %s4 = inlined_call_operand.hbm [shape: f32[32,32], index: 4, kind: input, shape index: {}]
  %s5 = inlined_call_operand.hbm [shape: f32[1,32], index: 5, kind: input, shape index: {}]
  %s6 = inlined_call_operand.hbm [shape: f32[32,32], index: 6, kind: input, shape index: {}]
  %s7 = inlined_call_operand.hbm [shape: f32[1,32], index: 7, kind: input, shape index: {}]
  %s8 = inlined_call_operand.hbm [shape: f32[32,32], index: 8, kind: input, shape index: {}]
  %s9 = inlined_call_operand.hbm [shape: f32[1,32], index: 9, kind: input, shape index: {}]
  %s10 = inlined_call_operand.hbm [shape: f32[32,32], index: 10, kind: input, shape index: {}]
  %s11 = inlined_call_operand.hbm [shape: f32[1,32], index: 11, kind: input, shape index: {}]
  %s12 = inlined_call_operand.hbm [shape: f32[2,8,32], index: 12, kind: output, shape index: {}]
  %s13 = sld [smem:[#allocation0]]
  $region133: #{tpu_custom_call.1} parent=0
    _
  %s15 = ssub.s32 1, %s13
  %s16 = scalar_select 0, %s15, %s13
  $region1: #{tpu_custom_call.1} parent=0
    #allocation5 [shape = 'u8[8192]{0}', space=vmem, size = 0x2000, scoped, tag = 'input window, operand 0']
    #allocation6 [shape = 's32[2]{0}', space=sflag, size = 0x8, scoped, tag = 'scoped memory for tpu_custom_call.1']
    #allocation7 [shape = 's32[2]{0}', space=sflag, size = 0x8, scoped, tag = 'scoped memory for tpu_custom_call.1']
    #allocation8 [shape = 'u8[4096]{0}', space=vmem, size = 0x1000, scoped, tag = 'input window, operand 1, single buffered']
    #allocation9 [shape = 's32[1]{0}', space=sflag, size = 0x4, scoped, tag = 'scoped memory for tpu_custom_call.1']
    #allocation10 [shape = 'u8[4096]{0}', space=vmem, size = 0x1000, scoped, tag = 'input window, operand 2, single buffered']
    #allocation11 [shape = 'u8[512]{0}', space=vmem, size = 0x400, scoped, tag = 'input window, operand 3, single buffered']
    #allocation12 [shape = 's32[1]{0}', space=sflag, size = 0x4, scoped, tag = 'scoped memory for tpu_custom_call.1']
    #allocation13 [shape = 'u8[16384]{0}', space=vmem, size = 0x4000, scoped, tag = 'input window, operand 4, single buffered']
    #allocation14 [shape = 'u8[512]{0}', space=vmem, size = 0x400, scoped, tag = 'input window, operand 5, single buffered']
    #allocation15 [shape = 's32[1]{0}', space=sflag, size = 0x4, scoped, tag = 'scoped memory for tpu_custom_call.1']
    #allocation16 [shape = 'u8[16384]{0}', space=vmem, size = 0x4000, scoped, tag = 'input window, operand 6, single buffered']
    #allocation17 [shape = 'u8[512]{0}', space=vmem, size = 0x400, scoped, tag = 'input window, operand 7, single buffered']
    #allocation18 [shape = 's32[1]{0}', space=sflag, size = 0x4, scoped, tag = 'scoped memory for tpu_custom_call.1']
    #allocation19 [shape = 'u8[16384]{0}', space=vmem, size = 0x4000, scoped, tag = 'input window, operand 8, single buffered']
    #allocation20 [shape = 'u8[512]{0}', space=vmem, size = 0x400, scoped, tag = 'input window, operand 9, single buffered']
    #allocation21 [shape = 's32[1]{0}', space=sflag, size = 0x4, scoped, tag = 'scoped memory for tpu_custom_call.1']
    #allocation22 [shape = 'u8[16384]{0}', space=vmem, size = 0x4000, scoped, tag = 'input window, operand 10, single buffered']
    #allocation23 [shape = 'u8[512]{0}', space=vmem, size = 0x400, scoped, tag = 'input window, operand 11, single buffered']
    #allocation24 [shape = 's32[1]{0}', space=sflag, size = 0x4, scoped, tag = 'scoped memory for tpu_custom_call.1']
    #allocation25 [shape = 'u8[8192]{0}', space=vmem, size = 0x2000, scoped, tag = 'output window, operand 0']
    %17 = vsyncpa [#allocation6], 0
    %s18 = scalar_lea.sflag [#allocation6], 1
    %19 = vsyncpa %s18, 0
    %20 = vsyncpa [#allocation9], 0
    %21 = vsyncpa [#allocation12], 0
    %22 = vsyncpa [#allocation15], 0
    %23 = vsyncpa [#allocation18], 0
    %24 = vsyncpa [#allocation21], 0
    %25 = vsyncpa [#allocation24], 0
    %26 = vsyncpa [#allocation7], 0
    %s27 = scalar_lea.sflag [#allocation7], 1
    %28 = vsyncpa %s27, 0
    loop: start=0, step=1, limit=4
    $region2: #{tpu_custom_call.1} parent=1 // loop_pre_header
      _
    $region3: #{tpu_custom_call.1} parent=1 // loop_header
      %s30 = sphi 0, %s34
      %p31 = scmp.ge.s32.totalorder %s30, 4
      %s37 = sphi 0, %s49
      %s38 = sphi 0, %s45
      %s39 = sphi 0, %s37
      %s40 = sphi 0, %s38
      %s41 = sphi 0, %s39
      %s42 = sphi 0, %s40
      %s54 = sphi 0, %s56
      %s57 = sphi 0, %s54
      %s58 = sphi 0, %s57
      %s74 = sphi 0, %s58
      %s80 = sphi 0, %s82
      %s83 = sphi 0, %s80
      %s84 = sphi 0, %s83
      %s100 = sphi 0, %s84
      %s106 = sphi 0, %s108
      %s109 = sphi 0, %s106
      %s110 = sphi 0, %s109
      %s126 = sphi 0, %s110
      %s132 = sphi 0, %s134
      %s135 = sphi 0, %s132
      %s136 = sphi 0, %s135
      %s152 = sphi 0, %s136
      %s156 = sphi 0, %s156
      %s158 = sphi 0, %s156
      %s159 = sphi 0, %s158
      %s173 = sphi 0, %s159
      %s177 = sphi 0, %s177
      %s179 = sphi 0, %s177
      %s180 = sphi 0, %s179
      %s194 = sphi 0, %s180
      %s198 = sphi 0, %s198
      %s200 = sphi 0, %s198
      %s201 = sphi 0, %s200
      %s215 = sphi 0, %s201
      %s219 = sphi 0, %s219
      %s221 = sphi 0, %s219
      %s222 = sphi 0, %s221
      %s236 = sphi 0, %s222
      %s240 = sphi 0, %s240
      %s242 = sphi 0, %s240
      %s243 = sphi 0, %s242
      %s257 = sphi 0, %s243
      %s261 = sphi 0, %s261
      %s263 = sphi 0, %s261
      %s264 = sphi 0, %s263
      %s278 = sphi 0, %s264
      %s282 = sphi 0, %s282
      %s284 = sphi 0, %s282
      %s285 = sphi 0, %s284
      %s299 = sphi 0, %s285
      %s303 = sphi 0, %s303
      %s305 = sphi 0, %s303
      %s306 = sphi 0, %s305
      %s320 = sphi 0, %s306
      %s328 = sphi 0, %s330
      %s331 = sphi 0, %s328
      %s332 = sphi 0, %s331
      %s348 = sphi 0, %s332
    $region4: #{tpu_custom_call.1} parent=1 // loop_header_branch
      %33 = sbr.rel (%p31) target = $region8
    $region5: #{tpu_custom_call.1} parent=1 // loop_body
      %s35 = ssub.s32 %s30, 1
      %s36 = ssub.s32 %s30, 2
      %s43 = sadd.s32 1, %s38
      %p44 = scmp.ge.s32.totalorder %s43, 1
      %s45 = scalar_select %p44, 0, %s43
      %s46 = sadd.s32 1, %s37
      %s47 = scalar_select %p44, %s46, %s37
      %p48 = scmp.ge.s32.totalorder %s47, 2
      %s49 = scalar_select %p48, 0, %s47
      %s50 = ssub.s32 %s37, %s49
      %s51 = ssub.s32 %s38, %s45
      %s52 = sor.u32 %s50, %s51
      %p53 = scmp.eq.s32.totalorder %s52, 0
      %s55 = sadd.s32 %s54, 1
      %s56 = scalar_select %p53, %s54, %s55
      %p59 = pneg %p53
      %p60 = scmp.eq.s32.totalorder %s30, 1
      %p61 = por %p59, %p60
      %p62 = scmp.ne.s32.totalorder %s54, %s57
      %p63 = scmp.eq.s32.totalorder %s30, 0
      %p64 = por %p62, %p63
      %p65 = scmp.ne.s32.totalorder %s54, %s57
      %p66 = scmp.eq.s32.totalorder %s35, 1
      %p67 = por %p65, %p66
      %p68 = scmp.ne.s32.totalorder %s57, %s58
      %p69 = scmp.eq.s32.totalorder %s35, 0
      %p70 = por %p68, %p69
      %p71 = scmp.ne.s32.totalorder %s57, %s58
      %p72 = scmp.eq.s32.totalorder %s36, 1
      %p73 = por %p71, %p72
      %p75 = scmp.ne.s32.totalorder %s58, %s74
      %p76 = scmp.eq.s32.totalorder %s36, 0
      %p77 = por %p75, %p76
      %s78 = ssub.s32 %s37, %s49
      %p79 = scmp.eq.s32.totalorder %s78, 0
      %s81 = sadd.s32 %s80, 1
      %s82 = scalar_select %p79, %s80, %s81
      %p85 = pneg %p79
      %p86 = scmp.eq.s32.totalorder %s30, 1
      %p87 = por %p85, %p86
      %p88 = scmp.ne.s32.totalorder %s80, %s83
      %p89 = scmp.eq.s32.totalorder %s30, 0
      %p90 = por %p88, %p89
      %p91 = scmp.ne.s32.totalorder %s80, %s83
      %p92 = scmp.eq.s32.totalorder %s35, 1
      %p93 = por %p91, %p92
      %p94 = scmp.ne.s32.totalorder %s83, %s84
      %p95 = scmp.eq.s32.totalorder %s35, 0
      %p96 = por %p94, %p95
      %p97 = scmp.ne.s32.totalorder %s83, %s84
      %p98 = scmp.eq.s32.totalorder %s36, 1
      %p99 = por %p97, %p98
      %p101 = scmp.ne.s32.totalorder %s84, %s100
      %p102 = scmp.eq.s32.totalorder %s36, 0
      %p103 = por %p101, %p102
      %s104 = ssub.s32 %s37, %s49
      %p105 = scmp.eq.s32.totalorder %s104, 0
      %s107 = sadd.s32 %s106, 1
      %s108 = scalar_select %p105, %s106, %s107
      %p111 = pneg %p105
      %p112 = scmp.eq.s32.totalorder %s30, 1
      %p113 = por %p111, %p112
      %p114 = scmp.ne.s32.totalorder %s106, %s109
      %p115 = scmp.eq.s32.totalorder %s30, 0
      %p116 = por %p114, %p115
      %p117 = scmp.ne.s32.totalorder %s106, %s109
      %p118 = scmp.eq.s32.totalorder %s35, 1
      %p119 = por %p117, %p118
      %p120 = scmp.ne.s32.totalorder %s109, %s110
      %p121 = scmp.eq.s32.totalorder %s35, 0
      %p122 = por %p120, %p121
      %p123 = scmp.ne.s32.totalorder %s109, %s110
      %p124 = scmp.eq.s32.totalorder %s36, 1
      %p125 = por %p123, %p124
      %p127 = scmp.ne.s32.totalorder %s110, %s126
      %p128 = scmp.eq.s32.totalorder %s36, 0
      %p129 = por %p127, %p128
      %s130 = ssub.s32 %s37, %s49
      %p131 = scmp.eq.s32.totalorder %s130, 0
      %s133 = sadd.s32 %s132, 1
      %s134 = scalar_select %p131, %s132, %s133
      %p137 = pneg %p131
      %p138 = scmp.eq.s32.totalorder %s30, 1
      %p139 = por %p137, %p138
      %p140 = scmp.ne.s32.totalorder %s132, %s135
      %p141 = scmp.eq.s32.totalorder %s30, 0
      %p142 = por %p140, %p141
      %p143 = scmp.ne.s32.totalorder %s132, %s135
      %p144 = scmp.eq.s32.totalorder %s35, 1
      %p145 = por %p143, %p144
      %p146 = scmp.ne.s32.totalorder %s135, %s136
      %p147 = scmp.eq.s32.totalorder %s35, 0
      %p148 = por %p146, %p147
      %p149 = scmp.ne.s32.totalorder %s135, %s136
      %p150 = scmp.eq.s32.totalorder %s36, 1
      %p151 = por %p149, %p150
      %p153 = scmp.ne.s32.totalorder %s136, %s152
      %p154 = scmp.eq.s32.totalorder %s36, 0
      %p155 = por %p153, %p154
      %s157 = sadd.s32 %s156, 1
      %p160 = scmp.eq.s32.totalorder %s30, 1
      %p161 = scmp.ne.s32.totalorder %s156, %s158
      %p162 = scmp.eq.s32.totalorder %s30, 0
      %p163 = por %p161, %p162
      %p164 = scmp.ne.s32.totalorder %s156, %s158
      %p165 = scmp.eq.s32.totalorder %s35, 1
      %p166 = por %p164, %p165
      %p167 = scmp.ne.s32.totalorder %s158, %s159
      %p168 = scmp.eq.s32.totalorder %s35, 0
      %p169 = por %p167, %p168
      %p170 = scmp.ne.s32.totalorder %s158, %s159
      %p171 = scmp.eq.s32.totalorder %s36, 1
      %p172 = por %p170, %p171
      %p174 = scmp.ne.s32.totalorder %s159, %s173
      %p175 = scmp.eq.s32.totalorder %s36, 0
      %p176 = por %p174, %p175
      %s178 = sadd.s32 %s177, 1
      %p181 = scmp.eq.s32.totalorder %s30, 1
      %p182 = scmp.ne.s32.totalorder %s177, %s179
      %p183 = scmp.eq.s32.totalorder %s30, 0
      %p184 = por %p182, %p183
      %p185 = scmp.ne.s32.totalorder %s177, %s179
      %p186 = scmp.eq.s32.totalorder %s35, 1
      %p187 = por %p185, %p186
      %p188 = scmp.ne.s32.totalorder %s179, %s180
      %p189 = scmp.eq.s32.totalorder %s35, 0
      %p190 = por %p188, %p189
      %p191 = scmp.ne.s32.totalorder %s179, %s180
      %p192 = scmp.eq.s32.totalorder %s36, 1
      %p193 = por %p191, %p192
      %p195 = scmp.ne.s32.totalorder %s180, %s194
      %p196 = scmp.eq.s32.totalorder %s36, 0
      %p197 = por %p195, %p196
      %s199 = sadd.s32 %s198, 1
      %p202 = scmp.eq.s32.totalorder %s30, 1
      %p203 = scmp.ne.s32.totalorder %s198, %s200
      %p204 = scmp.eq.s32.totalorder %s30, 0
      %p205 = por %p203, %p204
      %p206 = scmp.ne.s32.totalorder %s198, %s200
      %p207 = scmp.eq.s32.totalorder %s35, 1
      %p208 = por %p206, %p207
      %p209 = scmp.ne.s32.totalorder %s200, %s201
      %p210 = scmp.eq.s32.totalorder %s35, 0
      %p211 = por %p209, %p210
      %p212 = scmp.ne.s32.totalorder %s200, %s201
      %p213 = scmp.eq.s32.totalorder %s36, 1
      %p214 = por %p212, %p213
      %p216 = scmp.ne.s32.totalorder %s201, %s215
      %p217 = scmp.eq.s32.totalorder %s36, 0
      %p218 = por %p216, %p217
      %s220 = sadd.s32 %s219, 1
      %p223 = scmp.eq.s32.totalorder %s30, 1
      %p224 = scmp.ne.s32.totalorder %s219, %s221
      %p225 = scmp.eq.s32.totalorder %s30, 0
      %p226 = por %p224, %p225
      %p227 = scmp.ne.s32.totalorder %s219, %s221
      %p228 = scmp.eq.s32.totalorder %s35, 1
      %p229 = por %p227, %p228
      %p230 = scmp.ne.s32.totalorder %s221, %s222
      %p231 = scmp.eq.s32.totalorder %s35, 0
      %p232 = por %p230, %p231
      %p233 = scmp.ne.s32.totalorder %s221, %s222
      %p234 = scmp.eq.s32.totalorder %s36, 1
      %p235 = por %p233, %p234
      %p237 = scmp.ne.s32.totalorder %s222, %s236
      %p238 = scmp.eq.s32.totalorder %s36, 0
      %p239 = por %p237, %p238
      %s241 = sadd.s32 %s240, 1
      %p244 = scmp.eq.s32.totalorder %s30, 1
      %p245 = scmp.ne.s32.totalorder %s240, %s242
      %p246 = scmp.eq.s32.totalorder %s30, 0
      %p247 = por %p245, %p246
      %p248 = scmp.ne.s32.totalorder %s240, %s242
      %p249 = scmp.eq.s32.totalorder %s35, 1
      %p250 = por %p248, %p249
      %p251 = scmp.ne.s32.totalorder %s242, %s243
      %p252 = scmp.eq.s32.totalorder %s35, 0
      %p253 = por %p251, %p252
      %p254 = scmp.ne.s32.totalorder %s242, %s243
      %p255 = scmp.eq.s32.totalorder %s36, 1
      %p256 = por %p254, %p255
      %p258 = scmp.ne.s32.totalorder %s243, %s257
      %p259 = scmp.eq.s32.totalorder %s36, 0
      %p260 = por %p258, %p259
      %s262 = sadd.s32 %s261, 1
      %p265 = scmp.eq.s32.totalorder %s30, 1
      %p266 = scmp.ne.s32.totalorder %s261, %s263
      %p267 = scmp.eq.s32.totalorder %s30, 0
      %p268 = por %p266, %p267
      %p269 = scmp.ne.s32.totalorder %s261, %s263
      %p270 = scmp.eq.s32.totalorder %s35, 1
      %p271 = por %p269, %p270
      %p272 = scmp.ne.s32.totalorder %s263, %s264
      %p273 = scmp.eq.s32.totalorder %s35, 0
      %p274 = por %p272, %p273
      %p275 = scmp.ne.s32.totalorder %s263, %s264
      %p276 = scmp.eq.s32.totalorder %s36, 1
      %p277 = por %p275, %p276
      %p279 = scmp.ne.s32.totalorder %s264, %s278
      %p280 = scmp.eq.s32.totalorder %s36, 0
      %p281 = por %p279, %p280
      %s283 = sadd.s32 %s282, 1
      %p286 = scmp.eq.s32.totalorder %s30, 1
      %p287 = scmp.ne.s32.totalorder %s282, %s284
      %p288 = scmp.eq.s32.totalorder %s30, 0
      %p289 = por %p287, %p288
      %p290 = scmp.ne.s32.totalorder %s282, %s284
      %p291 = scmp.eq.s32.totalorder %s35, 1
      %p292 = por %p290, %p291
      %p293 = scmp.ne.s32.totalorder %s284, %s285
      %p294 = scmp.eq.s32.totalorder %s35, 0
      %p295 = por %p293, %p294
      %p296 = scmp.ne.s32.totalorder %s284, %s285
      %p297 = scmp.eq.s32.totalorder %s36, 1
      %p298 = por %p296, %p297
      %p300 = scmp.ne.s32.totalorder %s285, %s299
      %p301 = scmp.eq.s32.totalorder %s36, 0
      %p302 = por %p300, %p301
      %s304 = sadd.s32 %s303, 1
      %p307 = scmp.eq.s32.totalorder %s30, 1
      %p308 = scmp.ne.s32.totalorder %s303, %s305
      %p309 = scmp.eq.s32.totalorder %s30, 0
      %p310 = por %p308, %p309
      %p311 = scmp.ne.s32.totalorder %s303, %s305
      %p312 = scmp.eq.s32.totalorder %s35, 1
      %p313 = por %p311, %p312
      %p314 = scmp.ne.s32.totalorder %s305, %s306
      %p315 = scmp.eq.s32.totalorder %s35, 0
      %p316 = por %p314, %p315
      %p317 = scmp.ne.s32.totalorder %s305, %s306
      %p318 = scmp.eq.s32.totalorder %s36, 1
      %p319 = por %p317, %p318
      %p321 = scmp.ne.s32.totalorder %s306, %s320
      %p322 = scmp.eq.s32.totalorder %s36, 0
      %p323 = por %p321, %p322
      %s324 = ssub.s32 %s37, %s49
      %s325 = ssub.s32 %s38, %s45
      %s326 = sor.u32 %s324, %s325
      %p327 = scmp.eq.s32.totalorder %s326, 0
      %s329 = sadd.s32 %s328, 1
      %s330 = scalar_select %p327, %s328, %s329
      %p333 = pneg %p327
      %p334 = scmp.eq.s32.totalorder %s30, 1
      %p335 = por %p333, %p334
      %p336 = scmp.ne.s32.totalorder %s328, %s331
      %p337 = scmp.eq.s32.totalorder %s30, 0
      %p338 = por %p336, %p337
      %p339 = scmp.ne.s32.totalorder %s328, %s331
      %p340 = scmp.eq.s32.totalorder %s35, 1
      %p341 = por %p339, %p340
      %p342 = scmp.ne.s32.totalorder %s331, %s332
      %p343 = scmp.eq.s32.totalorder %s35, 0
      %p344 = por %p342, %p343
      %p345 = scmp.ne.s32.totalorder %s331, %s332
      %p346 = scmp.eq.s32.totalorder %s36, 1
      %p347 = por %p345, %p346
      %p349 = scmp.ne.s32.totalorder %s332, %s348
      %p350 = scmp.eq.s32.totalorder %s36, 0
      %p351 = por %p349, %p350
      %p352 = scmp.le.s32.totalorder 1, %s30
      %p353 = scmp.lt.s32.totalorder %s30, 3
      %p354 = pnand %p352, %p353
      %p355 = pneg %p354
      // Predicated region
      $region9: #{tpu_custom_call.1} parent=5 // pred_check
        _
      $region10: #{tpu_custom_call.1} parent=5 // pred_check_branch
        %357 = sbr.rel (%p354) target = $region12
      $region11: #{tpu_custom_call.1} parent=5 // pred_region
        %s358 = ssub.s32 %s30, 1
        // Predicated region
        $region13: #{tpu_custom_call.1} parent=11 // pred_check
          %p359 = pneg %p96
        $region14: #{tpu_custom_call.1} parent=11 // pred_check_branch
          %361 = sbr.rel (%p359) target = $region16
        $region15: #{tpu_custom_call.1} parent=11 // pred_region
          %s363 = ssub.s32 128, 128
          %364 = vsyncadd [#allocation9], %s363
          %s365 = smul.addr %s39, 128
          %s366 = scalar_lea.hbm %s1, %s365
          %s368 = sshll.u32 [#allocation8], 4
          %s369 = int_to_ptr.vmem [resolvable:$true] %s368
          %371 = dma.hbm_to_vmem [thread:$0]  %s366, 128, %s369, [#allocation9]
        $region16: #{tpu_custom_call.1} parent=11 // pred_fallthru
          _
        // Predicated region
        $region17: #{tpu_custom_call.1} parent=11 // pred_check
          %p372 = pneg %p122
        $region18: #{tpu_custom_call.1} parent=11 // pred_check_branch
          %374 = sbr.rel (%p372) target = $region20
        $region19: #{tpu_custom_call.1} parent=11 // pred_region
          %s376 = ssub.s32 128, 128
          %377 = vsyncadd [#allocation9], %s376
          %s378 = smul.addr %s39, 128
          %s379 = scalar_lea.hbm %s2, %s378
          %s381 = sshll.u32 [#allocation10], 4
          %s382 = int_to_ptr.vmem [resolvable:$true] %s381
          %384 = dma.hbm_to_vmem [thread:$0]  %s379, 128, %s382, [#allocation9]
        $region20: #{tpu_custom_call.1} parent=11 // pred_fallthru
          _
        // Predicated region
        $region21: #{tpu_custom_call.1} parent=11 // pred_check
          %p385 = pneg %p148
        $region22: #{tpu_custom_call.1} parent=11 // pred_check_branch
          %387 = sbr.rel (%p385) target = $region24
        $region23: #{tpu_custom_call.1} parent=11 // pred_region
          %s389 = ssub.s32 16, 16
          %390 = vsyncadd [#allocation12], %s389
          %s391 = smul.addr %s39, 16
          %s392 = scalar_lea.hbm %s3, %s391
          %s394 = sshll.u32 [#allocation11], 4
          %s395 = int_to_ptr.vmem [resolvable:$true] %s394
          %397 = dma.hbm_to_vmem [thread:$0]  %s392, 16, %s395, [#allocation12]
        $region24: #{tpu_custom_call.1} parent=11 // pred_fallthru
          _
        // Predicated region
        $region25: #{tpu_custom_call.1} parent=11 // pred_check
          %p398 = pneg %p169
        $region26: #{tpu_custom_call.1} parent=11 // pred_check_branch
          %400 = sbr.rel (%p398) target = $region28
        $region27: #{tpu_custom_call.1} parent=11 // pred_region
          %s402 = ssub.s32 512, 512
          %403 = vsyncadd [#allocation12], %s402
          %s404 = sshll.u32 [#allocation13], 4
          %s405 = int_to_ptr.vmem [resolvable:$true] %s404
          %410 = dma.hbm_to_vmem [thread:$0]  %s4, 512, %s405, [#allocation12], 128, 128, 8
        $region28: #{tpu_custom_call.1} parent=11 // pred_fallthru
          _
        // Predicated region
        $region29: #{tpu_custom_call.1} parent=11 // pred_check
          %p411 = pneg %p190
        $region30: #{tpu_custom_call.1} parent=11 // pred_check_branch
          %413 = sbr.rel (%p411) target = $region32
        $region31: #{tpu_custom_call.1} parent=11 // pred_region
          %s415 = ssub.s32 16, 16
          %416 = vsyncadd [#allocation15], %s415
          %s418 = sshll.u32 [#allocation14], 4
          %s419 = int_to_ptr.vmem [resolvable:$true] %s418
          %421 = dma.hbm_to_vmem [thread:$0]  %s5, 16, %s419, [#allocation15]
        $region32: #{tpu_custom_call.1} parent=11 // pred_fallthru
          _
        // Predicated region
        $region33: #{tpu_custom_call.1} parent=11 // pred_check
          %p422 = pneg %p211
        $region34: #{tpu_custom_call.1} parent=11 // pred_check_branch
          %424 = sbr.rel (%p422) target = $region36
        $region35: #{tpu_custom_call.1} parent=11 // pred_region
          %s426 = ssub.s32 512, 512
          %427 = vsyncadd [#allocation15], %s426
          %s428 = sshll.u32 [#allocation16], 4
          %s429 = int_to_ptr.vmem [resolvable:$true] %s428
          %434 = dma.hbm_to_vmem [thread:$0]  %s6, 512, %s429, [#allocation15], 128, 128, 8
        $region36: #{tpu_custom_call.1} parent=11 // pred_fallthru
          _
        // Predicated region
        $region37: #{tpu_custom_call.1} parent=11 // pred_check
          %p435 = pneg %p232
        $region38: #{tpu_custom_call.1} parent=11 // pred_check_branch
          %437 = sbr.rel (%p435) target = $region40
        $region39: #{tpu_custom_call.1} parent=11 // pred_region
          %s439 = ssub.s32 16, 16
          %440 = vsyncadd [#allocation18], %s439
          %s442 = sshll.u32 [#allocation17], 4
          %s443 = int_to_ptr.vmem [resolvable:$true] %s442
          %445 = dma.hbm_to_vmem [thread:$0]  %s7, 16, %s443, [#allocation18]
        $region40: #{tpu_custom_call.1} parent=11 // pred_fallthru
          _
        // Predicated region
        $region41: #{tpu_custom_call.1} parent=11 // pred_check
          %p446 = pneg %p253
        $region42: #{tpu_custom_call.1} parent=11 // pred_check_branch
          %448 = sbr.rel (%p446) target = $region44
        $region43: #{tpu_custom_call.1} parent=11 // pred_region
          %s450 = ssub.s32 512, 512
          %451 = vsyncadd [#allocation18], %s450
          %s452 = sshll.u32 [#allocation19], 4
          %s453 = int_to_ptr.vmem [resolvable:$true] %s452
          %458 = dma.hbm_to_vmem [thread:$0]  %s8, 512, %s453, [#allocation18], 128, 128, 8
        $region44: #{tpu_custom_call.1} parent=11 // pred_fallthru
          _
        // Predicated region
        $region45: #{tpu_custom_call.1} parent=11 // pred_check
          %p459 = pneg %p274
        $region46: #{tpu_custom_call.1} parent=11 // pred_check_branch
          %461 = sbr.rel (%p459) target = $region48
        $region47: #{tpu_custom_call.1} parent=11 // pred_region
          %s463 = ssub.s32 16, 16
          %464 = vsyncadd [#allocation21], %s463
          %s466 = sshll.u32 [#allocation20], 4
          %s467 = int_to_ptr.vmem [resolvable:$true] %s466
          %469 = dma.hbm_to_vmem [thread:$0]  %s9, 16, %s467, [#allocation21]
        $region48: #{tpu_custom_call.1} parent=11 // pred_fallthru
          _
        // Predicated region
        $region49: #{tpu_custom_call.1} parent=11 // pred_check
          %p470 = pneg %p295
        $region50: #{tpu_custom_call.1} parent=11 // pred_check_branch
          %472 = sbr.rel (%p470) target = $region52
        $region51: #{tpu_custom_call.1} parent=11 // pred_region
          %s474 = ssub.s32 512, 512
          %475 = vsyncadd [#allocation21], %s474
          %s476 = sshll.u32 [#allocation22], 4
          %s477 = int_to_ptr.vmem [resolvable:$true] %s476
          %482 = dma.hbm_to_vmem [thread:$0]  %s10, 512, %s477, [#allocation21], 128, 128, 8
        $region52: #{tpu_custom_call.1} parent=11 // pred_fallthru
          _
        // Predicated region
        $region53: #{tpu_custom_call.1} parent=11 // pred_check
          %p483 = pneg %p316
        $region54: #{tpu_custom_call.1} parent=11 // pred_check_branch
          %485 = sbr.rel (%p483) target = $region56
        $region55: #{tpu_custom_call.1} parent=11 // pred_region
          %s487 = ssub.s32 16, 16
          %488 = vsyncadd [#allocation24], %s487
          %s490 = sshll.u32 [#allocation23], 4
          %s491 = int_to_ptr.vmem [resolvable:$true] %s490
          %493 = dma.hbm_to_vmem [thread:$0]  %s11, 16, %s491, [#allocation24]
        $region56: #{tpu_custom_call.1} parent=11 // pred_fallthru
          _
      $region12: #{tpu_custom_call.1} parent=5 // pred_fallthru
        _
      %p494 = scmp.lt.s32.totalorder %s30, 2
      // Predicated region
      $region57: #{tpu_custom_call.1} parent=5 // pred_check
        %p495 = pneg %p494
      $region58: #{tpu_custom_call.1} parent=5 // pred_check_branch
        %497 = sbr.rel (%p495) target = $region60
      $region59: #{tpu_custom_call.1} parent=5 // pred_region
        // Predicated region
        $region61: #{tpu_custom_call.1} parent=59 // pred_check
          %p498 = pneg %p64
        $region62: #{tpu_custom_call.1} parent=59 // pred_check_branch
          %500 = sbr.rel (%p498) target = $region64
        $region63: #{tpu_custom_call.1} parent=59 // pred_region
          %s501 = sand.u32 %s54, 1
          %s502 = scalar_lea.sflag [#allocation6], %s501
          %s503 = sand.u32 %s54, 1
          %s504 = smul.addr %s503, 8
          %s505 = scalar_lea.vmem [#allocation5], %s504
          %s507 = ssub.s32 128, 128
          %508 = vsyncadd %s502, %s507
          %s509 = sadd.s32 %s38, %s37
          %s510 = smul.addr %s509, 128
          %s511 = scalar_lea.hbm %s0, %s510
          %s513 = sshll.u32 %s505, 4
          %s514 = int_to_ptr.vmem [resolvable:$true] %s513
          %516 = dma.hbm_to_vmem [thread:$0]  %s511, 128, %s514, %s502
        $region64: #{tpu_custom_call.1} parent=59 // pred_fallthru
          _
      $region60: #{tpu_custom_call.1} parent=5 // pred_fallthru
        _
      %p517 = scmp.le.s32.totalorder 1, %s30
      %p518 = scmp.lt.s32.totalorder %s30, 3
      %p519 = pnand %p517, %p518
      %p520 = pneg %p519
      // Predicated region
      $region65: #{tpu_custom_call.1} parent=5 // pred_check
        _
      $region66: #{tpu_custom_call.1} parent=5 // pred_check_branch
        %522 = sbr.rel (%p519) target = $region68
      $region67: #{tpu_custom_call.1} parent=5 // pred_region
        %s523 = ssub.s32 %s30, 1
        %s524 = sand.u32 %s57, 1
        %s525 = scalar_lea.sflag [#allocation6], %s524
        %s526 = sand.u32 %s57, 1
        %s527 = smul.addr %s526, 8
        %s528 = scalar_lea.vmem [#allocation5], %s527
        // Predicated region
        $region69: #{tpu_custom_call.1} parent=67 // pred_check
          %p529 = pneg %p70
        $region70: #{tpu_custom_call.1} parent=67 // pred_check_branch
          %531 = sbr.rel (%p529) target = $region72
        $region71: #{tpu_custom_call.1} parent=67 // pred_region
          %532 = dma.done %s525, 128
        $region72: #{tpu_custom_call.1} parent=67 // pred_fallthru
          _
        // Predicated region
        $region73: #{tpu_custom_call.1} parent=67 // pred_check
          %p533 = pneg %p96
        $region74: #{tpu_custom_call.1} parent=67 // pred_check_branch
          %535 = sbr.rel (%p533) target = $region76
        $region75: #{tpu_custom_call.1} parent=67 // pred_region
          %536 = dma.done [#allocation9], 128
        $region76: #{tpu_custom_call.1} parent=67 // pred_fallthru
          _
        // Predicated region
        $region77: #{tpu_custom_call.1} parent=67 // pred_check
          %p537 = pneg %p122
        $region78: #{tpu_custom_call.1} parent=67 // pred_check_branch
          %539 = sbr.rel (%p537) target = $region80
        $region79: #{tpu_custom_call.1} parent=67 // pred_region
          %540 = dma.done [#allocation9], 128
        $region80: #{tpu_custom_call.1} parent=67 // pred_fallthru
          _
        // Predicated region
        $region81: #{tpu_custom_call.1} parent=67 // pred_check
          %p541 = pneg %p148
        $region82: #{tpu_custom_call.1} parent=67 // pred_check_branch
          %543 = sbr.rel (%p541) target = $region84
        $region83: #{tpu_custom_call.1} parent=67 // pred_region
          %544 = dma.done [#allocation12], 16
        $region84: #{tpu_custom_call.1} parent=67 // pred_fallthru
          _
        // Predicated region
        $region85: #{tpu_custom_call.1} parent=67 // pred_check
          %p545 = pneg %p169
        $region86: #{tpu_custom_call.1} parent=67 // pred_check_branch
          %547 = sbr.rel (%p545) target = $region88
        $region87: #{tpu_custom_call.1} parent=67 // pred_region
          %548 = dma.done [#allocation12], 512
        $region88: #{tpu_custom_call.1} parent=67 // pred_fallthru
          _
        // Predicated region
        $region89: #{tpu_custom_call.1} parent=67 // pred_check
          %p549 = pneg %p190
        $region90: #{tpu_custom_call.1} parent=67 // pred_check_branch
          %551 = sbr.rel (%p549) target = $region92
        $region91: #{tpu_custom_call.1} parent=67 // pred_region
          %552 = dma.done [#allocation15], 16
        $region92: #{tpu_custom_call.1} parent=67 // pred_fallthru
          _
        // Predicated region
        $region93: #{tpu_custom_call.1} parent=67 // pred_check
          %p553 = pneg %p211
        $region94: #{tpu_custom_call.1} parent=67 // pred_check_branch
          %555 = sbr.rel (%p553) target = $region96
        $region95: #{tpu_custom_call.1} parent=67 // pred_region
          %556 = dma.done [#allocation15], 512
        $region96: #{tpu_custom_call.1} parent=67 // pred_fallthru
          _
        // Predicated region
        $region97: #{tpu_custom_call.1} parent=67 // pred_check
          %p557 = pneg %p232
        $region98: #{tpu_custom_call.1} parent=67 // pred_check_branch
          %559 = sbr.rel (%p557) target = $region100
        $region99: #{tpu_custom_call.1} parent=67 // pred_region
          %560 = dma.done [#allocation18], 16
        $region100: #{tpu_custom_call.1} parent=67 // pred_fallthru
          _
        // Predicated region
        $region101: #{tpu_custom_call.1} parent=67 // pred_check
          %p561 = pneg %p253
        $region102: #{tpu_custom_call.1} parent=67 // pred_check_branch
          %563 = sbr.rel (%p561) target = $region104
        $region103: #{tpu_custom_call.1} parent=67 // pred_region
          %564 = dma.done [#allocation18], 512
        $region104: #{tpu_custom_call.1} parent=67 // pred_fallthru
          _
        // Predicated region
        $region105: #{tpu_custom_call.1} parent=67 // pred_check
          %p565 = pneg %p274
        $region106: #{tpu_custom_call.1} parent=67 // pred_check_branch
          %567 = sbr.rel (%p565) target = $region108
        $region107: #{tpu_custom_call.1} parent=67 // pred_region
          %568 = dma.done [#allocation21], 16
        $region108: #{tpu_custom_call.1} parent=67 // pred_fallthru
          _
        // Predicated region
        $region109: #{tpu_custom_call.1} parent=67 // pred_check
          %p569 = pneg %p295
        $region110: #{tpu_custom_call.1} parent=67 // pred_check_branch
          %571 = sbr.rel (%p569) target = $region112
        $region111: #{tpu_custom_call.1} parent=67 // pred_region
          %572 = dma.done [#allocation21], 512
        $region112: #{tpu_custom_call.1} parent=67 // pred_fallthru
          _
        // Predicated region
        $region113: #{tpu_custom_call.1} parent=67 // pred_check
          %p573 = pneg %p316
        $region114: #{tpu_custom_call.1} parent=67 // pred_check_branch
          %575 = sbr.rel (%p573) target = $region116
        $region115: #{tpu_custom_call.1} parent=67 // pred_region
          %576 = dma.done [#allocation24], 16
        $region116: #{tpu_custom_call.1} parent=67 // pred_fallthru
          _
        %s577 = sand.u32 %s57, 1
        %s578 = scalar_lea.sflag [#allocation6], %s577
        %s579 = sand.u32 %s57, 1
        %s580 = smul.addr %s579, 8
        %s581 = scalar_lea.vmem [#allocation5], %s580
        %p582 = pneg %p70
        %p583 = pneg %p67
        %p584 = pneg %p96
        %p585 = pneg %p93
        %p586 = pneg %p122
        %p587 = pneg %p119
        %p588 = pneg %p148
        %p589 = pneg %p145
        %p590 = pneg %p169
        %p591 = pneg %p166
        %p592 = pneg %p190
        %p593 = pneg %p187
        %p594 = pneg %p211
        %p595 = pneg %p208
        %p596 = pneg %p232
        %p597 = pneg %p229
        %p598 = pneg %p253
        %p599 = pneg %p250
        %p600 = pneg %p274
        %p601 = pneg %p271
        %p602 = pneg %p295
        %p603 = pneg %p292
        %p604 = pneg %p316
        %p605 = pneg %p313
        %p606 = pneg %p344
        %p607 = pneg %p341
        %s608 = sand.u32 %s331, 1
        %s609 = scalar_lea.sflag [#allocation7], %s608
        %s610 = sand.u32 %s331, 1
        %s611 = smul.addr %s610, 8
        %s612 = scalar_lea.vmem [#allocation25], %s611
        %p613 = scmp.eq.s32.totalorder %s40, 0
        // Predicated region
        $region117: #{tpu_custom_call.1} parent=67 // pred_check
          %p614 = pneg %p613
        $region118: #{tpu_custom_call.1} parent=67 // pred_check_branch
          %616 = sbr.rel (%p614) target = $region120
        $region119: #{tpu_custom_call.1} parent=67 // pred_region
          %v617 = vld [vmem:[#allocation8] sm:$0xff]
          %v618 = vld [vmem:[#allocation16] sm:$0xff]
          %v619 = vld [vmem:[#allocation16 + $0x8] sm:$0xff]
          %v620 = vld [vmem:[#allocation16 + $0x10] sm:$0xff]
          %v621 = vld [vmem:[#allocation16 + $0x18] sm:$0xff]
          %v622 = vld [vmem:[#allocation17] sm:$0x1]
          %v624 = vlaneseq
          %v625 = vshrl.u32 %v624, 7
          %v626 = vsub.s32 0, %v625
          %v627 = vrot.slane %v622, %v626
          %vm629 = vcmask 261120
          %v631 = vsel %vm629, %v617, 0
          %633 = vmatprep.subr.mxu0 0.0
          %634 = vmatpush1.msra.mxu0 %v618
          %635 = vmatprep.subr.mxu0 0.0
          %636 = vmatpush1.msra.mxu0 %v619
          %637 = vmatprep.subr.mxu0 0.0
          %638 = vmatpush1.msra.mxu0 %v620
          %639 = vmatprep.subr.mxu0 0.0
          %640 = vmatpush1.msra.mxu0 %v621
          %641 = vmatprep.subr.mxu0 0.0
          %642 = vmatpush1.msra.mxu0 0.0
          %643 = vmatprep.subr.mxu0 0.0
          %644 = vmatpush1.msra.mxu0 0.0
          %645 = vmatprep.subr.mxu0 0.0
          %646 = vmatpush1.msra.mxu0 0.0
          %647 = vmatprep.subr.mxu0 0.0
          %648 = vmatpush1.msra.mxu0 0.0
          %649 = vmatprep.subr.mxu0 0.0
          %650 = vmatpush1.msra.mxu0 0.0
          %651 = vmatprep.subr.mxu0 0.0
          %652 = vmatpush1.msra.mxu0 0.0
          %653 = vmatprep.subr.mxu0 0.0
          %654 = vmatpush1.msra.mxu0 0.0
          %655 = vmatprep.subr.mxu0 0.0
          %656 = vmatpush1.msra.mxu0 0.0
          %657 = vmatprep.subr.mxu0 0.0
          %658 = vmatpush1.msra.mxu0 0.0
          %659 = vmatprep.subr.mxu0 0.0
          %660 = vmatpush1.msra.mxu0 0.0
          %661 = vmatprep.subr.mxu0 0.0
          %662 = vmatpush1.msra.mxu0 0.0
          %663 = vmatprep.subr.mxu0 0.0
          %664 = vmatpush1.msra.mxu0 0.0
          %665 = vmatprep.subr.mxu0 0.0
          %666 = vmatpush1.msra.mxu0 0.0
          %667 = vmatprep.subr.mxu0 0.0
          %668 = vmatpush1.msra.mxu0 0.0
          %669 = vmatprep.subr.mxu0 0.0
          %670 = vmatpush1.msra.mxu0 0.0
          %671 = vmatprep.subr.mxu0 0.0
          %672 = vmatpush1.msra.mxu0 0.0
          %673 = vmatprep.subr.mxu0 0.0
          %674 = vmatpush1.msra.mxu0 0.0
          %675 = vmatprep.subr.mxu0 0.0
          %676 = vmatpush1.msra.mxu0 0.0
          %677 = vmatprep.subr.mxu0 0.0
          %678 = vmatpush1.msra.mxu0 0.0
          %679 = vmatprep.subr.mxu0 0.0
          %680 = vmatpush1.msra.mxu0 0.0
          %681 = vmatprep.subr.mxu0 0.0
          %682 = vmatpush1.msra.mxu0 0.0
          %683 = vmatprep.subr.mxu0 0.0
          %684 = vmatpush1.msra.mxu0 0.0
          %685 = vmatprep.subr.mxu0 0.0
          %686 = vmatpush1.msra.mxu0 0.0
          %687 = vmatprep.subr.mxu0 0.0
          %688 = vmatpush1.msra.mxu0 0.0
          %689 = vmatprep.subr.mxu0 0.0
          %690 = vmatpush1.msra.mxu0 0.0
          %691 = vmatprep.subr.mxu0 0.0
          %692 = vmatpush1.msra.mxu0 0.0
          %693 = vmatprep.subr.mxu0 0.0
          %694 = vmatpush1.msra.mxu0 0.0
          %695 = vmatprep.subr.mxu0 0.0
          %696 = vmatpush1.msra.mxu0 0.0
          %697 = vmatprep.mubr.f32.mxu0 0.0
          %698 = vmatmul.mubr.f32.gmra.mrb[0].mxu0 %v631
          %v699 = vpop.f32.mrb[0].mxu0
          %v700 = vadd.f32 %v627, %v699
          %v701 = vpop.f32.mrb[0].mxu0
          %702 = vdwg.mxu0
          %v703 = vld [vmem:[#allocation10] sm:$0xff]
          %v704 = vld [vmem:[#allocation19] sm:$0xff]
          %v705 = vld [vmem:[#allocation19 + $0x8] sm:$0xff]
          %v706 = vld [vmem:[#allocation19 + $0x10] sm:$0xff]
          %v707 = vld [vmem:[#allocation19 + $0x18] sm:$0xff]
          %v708 = vld [vmem:[#allocation20] sm:$0x1]
          %v710 = vlaneseq
          %v711 = vshrl.u32 %v710, 7
          %v712 = vsub.s32 0, %v711
          %v713 = vrot.slane %v708, %v712
          %v716 = vsel %vm629, %v703, 0
          %718 = vmatprep.subr.mxu0 0.0
          %719 = vmatpush1.msra.mxu0 %v704
          %720 = vmatprep.subr.mxu0 0.0
          %721 = vmatpush1.msra.mxu0 %v705
          %722 = vmatprep.subr.mxu0 0.0
          %723 = vmatpush1.msra.mxu0 %v706
          %724 = vmatprep.subr.mxu0 0.0
          %725 = vmatpush1.msra.mxu0 %v707
          %726 = vmatprep.subr.mxu0 0.0
          %727 = vmatpush1.msra.mxu0 0.0
          %728 = vmatprep.subr.mxu0 0.0
          %729 = vmatpush1.msra.mxu0 0.0
          %730 = vmatprep.subr.mxu0 0.0
          %731 = vmatpush1.msra.mxu0 0.0
          %732 = vmatprep.subr.mxu0 0.0
          %733 = vmatpush1.msra.mxu0 0.0
          %734 = vmatprep.subr.mxu0 0.0
          %735 = vmatpush1.msra.mxu0 0.0
          %736 = vmatprep.subr.mxu0 0.0
          %737 = vmatpush1.msra.mxu0 0.0
          %738 = vmatprep.subr.mxu0 0.0
          %739 = vmatpush1.msra.mxu0 0.0
          %740 = vmatprep.subr.mxu0 0.0
          %741 = vmatpush1.msra.mxu0 0.0
          %742 = vmatprep.subr.mxu0 0.0
          %743 = vmatpush1.msra.mxu0 0.0
          %744 = vmatprep.subr.mxu0 0.0
          %745 = vmatpush1.msra.mxu0 0.0
          %746 = vmatprep.subr.mxu0 0.0
          %747 = vmatpush1.msra.mxu0 0.0
          %748 = vmatprep.subr.mxu0 0.0
          %749 = vmatpush1.msra.mxu0 0.0
          %750 = vmatprep.subr.mxu0 0.0
          %751 = vmatpush1.msra.mxu0 0.0
          %752 = vmatprep.subr.mxu0 0.0
          %753 = vmatpush1.msra.mxu0 0.0
          %754 = vmatprep.subr.mxu0 0.0
          %755 = vmatpush1.msra.mxu0 0.0
          %756 = vmatprep.subr.mxu0 0.0
          %757 = vmatpush1.msra.mxu0 0.0
          %758 = vmatprep.subr.mxu0 0.0
          %759 = vmatpush1.msra.mxu0 0.0
          %760 = vmatprep.subr.mxu0 0.0
          %761 = vmatpush1.msra.mxu0 0.0
          %762 = vmatprep.subr.mxu0 0.0
          %763 = vmatpush1.msra.mxu0 0.0
          %764 = vmatprep.subr.mxu0 0.0
          %765 = vmatpush1.msra.mxu0 0.0
          %766 = vmatprep.subr.mxu0 0.0
          %767 = vmatpush1.msra.mxu0 0.0
          %768 = vmatprep.subr.mxu0 0.0
          %769 = vmatpush1.msra.mxu0 0.0
          %770 = vmatprep.subr.mxu0 0.0
          %771 = vmatpush1.msra.mxu0 0.0
          %772 = vmatprep.subr.mxu0 0.0
          %773 = vmatpush1.msra.mxu0 0.0
          %774 = vmatprep.subr.mxu0 0.0
          %775 = vmatpush1.msra.mxu0 0.0
          %776 = vmatprep.subr.mxu0 0.0
          %777 = vmatpush1.msra.mxu0 0.0
          %778 = vmatprep.subr.mxu0 0.0
          %779 = vmatpush1.msra.mxu0 0.0
          %780 = vmatprep.subr.mxu0 0.0
          %781 = vmatpush1.msra.mxu0 0.0
          %782 = vmatprep.mubr.f32.mxu0 0.0
          %783 = vmatmul.mubr.f32.gmra.mrb[0].mxu0 %v716
          %v784 = vpop.f32.mrb[0].mxu0
          %v785 = vadd.f32 %v713, %v784
          %v786 = vpop.f32.mrb[0].mxu0
          %787 = vdwg.mxu0
          %788 = vst.msk [vmem:[#allocation2] sm:$0xff] %vm629, %v700
          %789 = vst.msk [vmem:[#allocation3] sm:$0xff] %vm629, %v785
        $region120: #{tpu_custom_call.1} parent=67 // pred_fallthru
          _
        %v790 = vld [vmem:[%s528] sm:$0xff]
        %v791 = vld [vmem:[#allocation13] sm:$0xff]
        %v792 = vld [vmem:[#allocation13 + $0x8] sm:$0xff]
        %v793 = vld [vmem:[#allocation13 + $0x10] sm:$0xff]
        %v794 = vld [vmem:[#allocation13 + $0x18] sm:$0xff]
        %v795 = vld [vmem:[#allocation14] sm:$0x1]
        %v797 = vlaneseq
        %v798 = vshrl.u32 %v797, 7
        %v799 = vsub.s32 0, %v798
        %v800 = vrot.slane %v795, %v799
        %vm802 = vcmask 261120
        %v804 = vsel %vm802, %v790, 0
        %806 = vmatprep.subr.mxu0 0.0
        %807 = vmatpush1.msra.mxu0 %v791
        %808 = vmatprep.subr.mxu0 0.0
        %809 = vmatpush1.msra.mxu0 %v792
        %810 = vmatprep.subr.mxu0 0.0
        %811 = vmatpush1.msra.mxu0 %v793
        %812 = vmatprep.subr.mxu0 0.0
        %813 = vmatpush1.msra.mxu0 %v794
        %814 = vmatprep.subr.mxu0 0.0
        %815 = vmatpush1.msra.mxu0 0.0
        %816 = vmatprep.subr.mxu0 0.0
        %817 = vmatpush1.msra.mxu0 0.0
        %818 = vmatprep.subr.mxu0 0.0
        %819 = vmatpush1.msra.mxu0 0.0
        %820 = vmatprep.subr.mxu0 0.0
        %821 = vmatpush1.msra.mxu0 0.0
        %822 = vmatprep.subr.mxu0 0.0
        %823 = vmatpush1.msra.mxu0 0.0
        %824 = vmatprep.subr.mxu0 0.0
        %825 = vmatpush1.msra.mxu0 0.0
        %826 = vmatprep.subr.mxu0 0.0
        %827 = vmatpush1.msra.mxu0 0.0
        %828 = vmatprep.subr.mxu0 0.0
        %829 = vmatpush1.msra.mxu0 0.0
        %830 = vmatprep.subr.mxu0 0.0
        %831 = vmatpush1.msra.mxu0 0.0
        %832 = vmatprep.subr.mxu0 0.0
        %833 = vmatpush1.msra.mxu0 0.0
        %834 = vmatprep.subr.mxu0 0.0
        %835 = vmatpush1.msra.mxu0 0.0
        %836 = vmatprep.subr.mxu0 0.0
        %837 = vmatpush1.msra.mxu0 0.0
        %838 = vmatprep.subr.mxu0 0.0
        %839 = vmatpush1.msra.mxu0 0.0
        %840 = vmatprep.subr.mxu0 0.0
        %841 = vmatpush1.msra.mxu0 0.0
        %842 = vmatprep.subr.mxu0 0.0
        %843 = vmatpush1.msra.mxu0 0.0
        %844 = vmatprep.subr.mxu0 0.0
        %845 = vmatpush1.msra.mxu0 0.0
        %846 = vmatprep.subr.mxu0 0.0
        %847 = vmatpush1.msra.mxu0 0.0
        %848 = vmatprep.subr.mxu0 0.0
        %849 = vmatpush1.msra.mxu0 0.0
        %850 = vmatprep.subr.mxu0 0.0
        %851 = vmatpush1.msra.mxu0 0.0
        %852 = vmatprep.subr.mxu0 0.0
        %853 = vmatpush1.msra.mxu0 0.0
        %854 = vmatprep.subr.mxu0 0.0
        %855 = vmatpush1.msra.mxu0 0.0
        %856 = vmatprep.subr.mxu0 0.0
        %857 = vmatpush1.msra.mxu0 0.0
        %858 = vmatprep.subr.mxu0 0.0
        %859 = vmatpush1.msra.mxu0 0.0
        %860 = vmatprep.subr.mxu0 0.0
        %861 = vmatpush1.msra.mxu0 0.0
        %862 = vmatprep.subr.mxu0 0.0
        %863 = vmatpush1.msra.mxu0 0.0
        %864 = vmatprep.subr.mxu0 0.0
        %865 = vmatpush1.msra.mxu0 0.0
        %866 = vmatprep.subr.mxu0 0.0
        %867 = vmatpush1.msra.mxu0 0.0
        %868 = vmatprep.subr.mxu0 0.0
        %869 = vmatpush1.msra.mxu0 0.0
        %870 = vmatprep.mubr.f32.mxu0 0.0
        %871 = vmatmul.mubr.f32.gmra.mrb[0].mxu0 %v804
        %v872 = vpop.f32.mrb[0].mxu0
        %v873 = vadd.f32 %v800, %v872
        %v874 = vpop.f32.mrb[0].mxu0
        %875 = vdwg.mxu0
        %v876 = vmul.f32 %v873, 0.35355338
        %v877 = vld [vmem:[#allocation2] sm:$0xff]
        %v878 = vld [vmem:[#allocation3] sm:$0xff]
        %v879 = vld [vmem:[#allocation11] sm:$0x1]
        %vm880 = vcmp.eq.s32.totalorder %v879, 0
        %v881 = vsel %vm880, 1, 0
        %v882 = vlaneseq
        %v883 = vshrl.u32 %v882, 7
        %v884 = vsub.s32 0, %v883
        %v885 = vrot.slane %v881, %v884
        %vm886 = vcmp.eq.s32.totalorder %v885, 1
        %vm887 = vcmask 64512
        %v889 = vsel %vm887, %v876, 0
        %v892 = vsel %vm887, %v877, 0
        %894 = vmatprep.subr.mxu0 0.0
        %895 = vmatpush1.xpose.msra.mxu0 %v892
        %896 = vmatprep.subr.mxu0 0.0
        %897 = vmatpush1.xpose.msra.mxu0 0.0
        %898 = vmatprep.subr.mxu0 0.0
        %899 = vmatpush1.xpose.msra.mxu0 0.0
        %900 = vmatprep.subr.mxu0 0.0
        %901 = vmatpush1.xpose.msra.mxu0 0.0
        %902 = vmatprep.subr.mxu0 0.0
        %903 = vmatpush1.xpose.msra.mxu0 0.0
        %904 = vmatprep.subr.mxu0 0.0
        %905 = vmatpush1.xpose.msra.mxu0 0.0
        %906 = vmatprep.subr.mxu0 0.0
        %907 = vmatpush1.xpose.msra.mxu0 0.0
        %908 = vmatprep.subr.mxu0 0.0
        %909 = vmatpush1.xpose.msra.mxu0 0.0
        %910 = vmatprep.subr.mxu0 0.0
        %911 = vmatpush1.xpose.msra.mxu0 0.0
        %912 = vmatprep.subr.mxu0 0.0
        %913 = vmatpush1.xpose.msra.mxu0 0.0
        %914 = vmatprep.subr.mxu0 0.0
        %915 = vmatpush1.xpose.msra.mxu0 0.0
        %916 = vmatprep.subr.mxu0 0.0
        %917 = vmatpush1.xpose.msra.mxu0 0.0
        %918 = vmatprep.subr.mxu0 0.0
        %919 = vmatpush1.xpose.msra.mxu0 0.0
        %920 = vmatprep.subr.mxu0 0.0
        %921 = vmatpush1.xpose.msra.mxu0 0.0
        %922 = vmatprep.subr.mxu0 0.0
        %923 = vmatpush1.xpose.msra.mxu0 0.0
        %924 = vmatprep.subr.mxu0 0.0
        %925 = vmatpush1.xpose.msra.mxu0 0.0
        %926 = vmatprep.subr.mxu0 0.0
        %927 = vmatpush1.xpose.msra.mxu0 0.0
        %928 = vmatprep.subr.mxu0 0.0
        %929 = vmatpush1.xpose.msra.mxu0 0.0
        %930 = vmatprep.subr.mxu0 0.0
        %931 = vmatpush1.xpose.msra.mxu0 0.0
        %932 = vmatprep.subr.mxu0 0.0
        %933 = vmatpush1.xpose.msra.mxu0 0.0
        %934 = vmatprep.subr.mxu0 0.0
        %935 = vmatpush1.xpose.msra.mxu0 0.0
        %936 = vmatprep.subr.mxu0 0.0
        %937 = vmatpush1.xpose.msra.mxu0 0.0
        %938 = vmatprep.subr.mxu0 0.0
        %939 = vmatpush1.xpose.msra.mxu0 0.0
        %940 = vmatprep.subr.mxu0 0.0
        %941 = vmatpush1.xpose.msra.mxu0 0.0
        %942 = vmatprep.subr.mxu0 0.0
        %943 = vmatpush1.xpose.msra.mxu0 0.0
        %944 = vmatprep.subr.mxu0 0.0
        %945 = vmatpush1.xpose.msra.mxu0 0.0
        %946 = vmatprep.subr.mxu0 0.0
        %947 = vmatpush1.xpose.msra.mxu0 0.0
        %948 = vmatprep.subr.mxu0 0.0
        %949 = vmatpush1.xpose.msra.mxu0 0.0
        %950 = vmatprep.subr.mxu0 0.0
        %951 = vmatpush1.xpose.msra.mxu0 0.0
        %952 = vmatprep.subr.mxu0 0.0
        %953 = vmatpush1.xpose.msra.mxu0 0.0
        %954 = vmatprep.subr.mxu0 0.0
        %955 = vmatpush1.xpose.msra.mxu0 0.0
        %956 = vmatprep.subr.mxu0 0.0
        %957 = vmatpush1.xpose.msra.mxu0 0.0
        %958 = vmatprep.mubr.f32.mxu0 0.0
        %959 = vmatmul.mubr.f32.gmra.mrb[0].mxu0 %v889
        %v960 = vpop.f32.mrb[0].mxu0
        %v961 = vadd.f32 0.0, %v960
        %v962 = vpop.f32.mrb[0].mxu0
        %963 = vdwg.mxu0
        %v964 = vsel %vm886, -1e+09, %v961
        %v965 = vsel %vm887, %v964, -inf
        %966 = vmax.xlane.f32.xlu0 %v965
        %v967 = vpop.xlane.xlu0 %966
        %v968 = vsub.f32 %v964, %v967
        %v969 = vmul.f32 %v968, 1.442695
        %v970 = vpow.pop %v969
        %v971 = vsel %vm887, %v970, 0.0
        %972 = vadd.xlane.f32.xlu0 %v971
        %v973 = vpop.xlane.xlu0 %972
        %v974 = vrcp.pop %v973
        %v975 = vmul.f32 %v970, %v974
        %v977 = vsel %vm887, %v975, 0
        %979 = vmatprep.subr.mxu0 0.0
        %980 = vmatpush1.msra.mxu0 %v878
        %981 = vmatprep.subr.mxu0 0.0
        %982 = vmatpush1.msra.mxu0 0.0
        %983 = vmatprep.subr.mxu0 0.0
        %984 = vmatpush1.msra.mxu0 0.0
        %985 = vmatprep.subr.mxu0 0.0
        %986 = vmatpush1.msra.mxu0 0.0
        %987 = vmatprep.subr.mxu0 0.0
        %988 = vmatpush1.msra.mxu0 0.0
        %989 = vmatprep.subr.mxu0 0.0
        %990 = vmatpush1.msra.mxu0 0.0
        %991 = vmatprep.subr.mxu0 0.0
        %992 = vmatpush1.msra.mxu0 0.0
        %993 = vmatprep.subr.mxu0 0.0
        %994 = vmatpush1.msra.mxu0 0.0
        %995 = vmatprep.subr.mxu0 0.0
        %996 = vmatpush1.msra.mxu0 0.0
        %997 = vmatprep.subr.mxu0 0.0
        %998 = vmatpush1.msra.mxu0 0.0
        %999 = vmatprep.subr.mxu0 0.0
        %1000 = vmatpush1.msra.mxu0 0.0
        %1001 = vmatprep.subr.mxu0 0.0
        %1002 = vmatpush1.msra.mxu0 0.0
        %1003 = vmatprep.subr.mxu0 0.0
        %1004 = vmatpush1.msra.mxu0 0.0
        %1005 = vmatprep.subr.mxu0 0.0
        %1006 = vmatpush1.msra.mxu0 0.0
        %1007 = vmatprep.subr.mxu0 0.0
        %1008 = vmatpush1.msra.mxu0 0.0
        %1009 = vmatprep.subr.mxu0 0.0
        %1010 = vmatpush1.msra.mxu0 0.0
        %1011 = vmatprep.subr.mxu0 0.0
        %1012 = vmatpush1.msra.mxu0 0.0
        %1013 = vmatprep.subr.mxu0 0.0
        %1014 = vmatpush1.msra.mxu0 0.0
        %1015 = vmatprep.subr.mxu0 0.0
        %1016 = vmatpush1.msra.mxu0 0.0
        %1017 = vmatprep.subr.mxu0 0.0
        %1018 = vmatpush1.msra.mxu0 0.0
        %1019 = vmatprep.subr.mxu0 0.0
        %1020 = vmatpush1.msra.mxu0 0.0
        %1021 = vmatprep.subr.mxu0 0.0
        %1022 = vmatpush1.msra.mxu0 0.0
        %1023 = vmatprep.subr.mxu0 0.0
        %1024 = vmatpush1.msra.mxu0 0.0
        %1025 = vmatprep.subr.mxu0 0.0
        %1026 = vmatpush1.msra.mxu0 0.0
        %1027 = vmatprep.subr.mxu0 0.0
        %1028 = vmatpush1.msra.mxu0 0.0
        %1029 = vmatprep.subr.mxu0 0.0
        %1030 = vmatpush1.msra.mxu0 0.0
        %1031 = vmatprep.subr.mxu0 0.0
        %1032 = vmatpush1.msra.mxu0 0.0
        %1033 = vmatprep.subr.mxu0 0.0
        %1034 = vmatpush1.msra.mxu0 0.0
        %1035 = vmatprep.subr.mxu0 0.0
        %1036 = vmatpush1.msra.mxu0 0.0
        %1037 = vmatprep.subr.mxu0 0.0
        %1038 = vmatpush1.msra.mxu0 0.0
        %1039 = vmatprep.subr.mxu0 0.0
        %1040 = vmatpush1.msra.mxu0 0.0
        %1041 = vmatprep.subr.mxu0 0.0
        %1042 = vmatpush1.msra.mxu0 0.0
        %1043 = vmatprep.mubr.f32.mxu0 0.0
        %1044 = vmatmul.mubr.f32.gmra.mrb[0].mxu0 %v977
        %v1045 = vpop.f32.mrb[0].mxu0
        %v1046 = vadd.f32 0.0, %v1045
        %v1047 = vpop.f32.mrb[0].mxu0
        %1048 = vdwg.mxu0
        %1049 = vst.msk [vmem:[#allocation4] sm:$0xff] %vm887, %v1046
        %1050 = vrot.lane.b32.xlu0 %v876, 120
        %v1051 = vpop.permute.xlu0 %1050
        %1052 = vrot.lane.b32.xlu0 %v877, 120
        %v1053 = vpop.permute.xlu0 %1052
        %v1054 = vsel %vm887, %v1051, 0
        %v1056 = vsel %vm887, %v1053, 0
        %1058 = vmatprep.subr.mxu0 0.0
        %1059 = vmatpush1.xpose.msra.mxu0 %v1056
        %1060 = vmatprep.subr.mxu0 0.0
        %1061 = vmatpush1.xpose.msra.mxu0 0.0
        %1062 = vmatprep.subr.mxu0 0.0
        %1063 = vmatpush1.xpose.msra.mxu0 0.0
        %1064 = vmatprep.subr.mxu0 0.0
        %1065 = vmatpush1.xpose.msra.mxu0 0.0
        %1066 = vmatprep.subr.mxu0 0.0
        %1067 = vmatpush1.xpose.msra.mxu0 0.0
        %1068 = vmatprep.subr.mxu0 0.0
        %1069 = vmatpush1.xpose.msra.mxu0 0.0
        %1070 = vmatprep.subr.mxu0 0.0
        %1071 = vmatpush1.xpose.msra.mxu0 0.0
        %1072 = vmatprep.subr.mxu0 0.0
        %1073 = vmatpush1.xpose.msra.mxu0 0.0
        %1074 = vmatprep.subr.mxu0 0.0
        %1075 = vmatpush1.xpose.msra.mxu0 0.0
        %1076 = vmatprep.subr.mxu0 0.0
        %1077 = vmatpush1.xpose.msra.mxu0 0.0
        %1078 = vmatprep.subr.mxu0 0.0
        %1079 = vmatpush1.xpose.msra.mxu0 0.0
        %1080 = vmatprep.subr.mxu0 0.0
        %1081 = vmatpush1.xpose.msra.mxu0 0.0
        %1082 = vmatprep.subr.mxu0 0.0
        %1083 = vmatpush1.xpose.msra.mxu0 0.0
        %1084 = vmatprep.subr.mxu0 0.0
        %1085 = vmatpush1.xpose.msra.mxu0 0.0
        %1086 = vmatprep.subr.mxu0 0.0
        %1087 = vmatpush1.xpose.msra.mxu0 0.0
        %1088 = vmatprep.subr.mxu0 0.0
        %1089 = vmatpush1.xpose.msra.mxu0 0.0
        %1090 = vmatprep.subr.mxu0 0.0
        %1091 = vmatpush1.xpose.msra.mxu0 0.0
        %1092 = vmatprep.subr.mxu0 0.0
        %1093 = vmatpush1.xpose.msra.mxu0 0.0
        %1094 = vmatprep.subr.mxu0 0.0
        %1095 = vmatpush1.xpose.msra.mxu0 0.0
        %1096 = vmatprep.subr.mxu0 0.0
        %1097 = vmatpush1.xpose.msra.mxu0 0.0
        %1098 = vmatprep.subr.mxu0 0.0
        %1099 = vmatpush1.xpose.msra.mxu0 0.0
        %1100 = vmatprep.subr.mxu0 0.0
        %1101 = vmatpush1.xpose.msra.mxu0 0.0
        %1102 = vmatprep.subr.mxu0 0.0
        %1103 = vmatpush1.xpose.msra.mxu0 0.0
        %1104 = vmatprep.subr.mxu0 0.0
        %1105 = vmatpush1.xpose.msra.mxu0 0.0
        %1106 = vmatprep.subr.mxu0 0.0
        %1107 = vmatpush1.xpose.msra.mxu0 0.0
        %1108 = vmatprep.subr.mxu0 0.0
        %1109 = vmatpush1.xpose.msra.mxu0 0.0
        %1110 = vmatprep.subr.mxu0 0.0
        %1111 = vmatpush1.xpose.msra.mxu0 0.0
        %1112 = vmatprep.subr.mxu0 0.0
        %1113 = vmatpush1.xpose.msra.mxu0 0.0
        %1114 = vmatprep.subr.mxu0 0.0
        %1115 = vmatpush1.xpose.msra.mxu0 0.0
        %1116 = vmatprep.subr.mxu0 0.0
        %1117 = vmatpush1.xpose.msra.mxu0 0.0
        %1118 = vmatprep.subr.mxu0 0.0
        %1119 = vmatpush1.xpose.msra.mxu0 0.0
        %1120 = vmatprep.subr.mxu0 0.0
        %1121 = vmatpush1.xpose.msra.mxu0 0.0
        %1122 = vmatprep.mubr.f32.mxu0 0.0
        %1123 = vmatmul.mubr.f32.gmra.mrb[0].mxu0 %v1054
        %v1124 = vpop.f32.mrb[0].mxu0
        %v1125 = vadd.f32 0.0, %v1124
        %v1126 = vpop.f32.mrb[0].mxu0
        %1127 = vdwg.mxu0
        %v1128 = vsel %vm886, -1e+09, %v1125
        %v1129 = vsel %vm887, %v1128, -inf
        %1130 = vmax.xlane.f32.xlu0 %v1129
        %v1131 = vpop.xlane.xlu0 %1130
        %v1132 = vsub.f32 %v1128, %v1131
        %v1133 = vmul.f32 %v1132, 1.442695
        %v1134 = vpow.pop %v1133
        %v1135 = vsel %vm887, %v1134, 0.0
        %1136 = vadd.xlane.f32.xlu0 %v1135
        %v1137 = vpop.xlane.xlu0 %1136
        %v1138 = vrcp.pop %v1137
        %v1139 = vmul.f32 %v1134, %v1138
        %1141 = vrot.lane.b32.xlu0 %v878, 120
        %v1142 = vpop.permute.xlu0 %1141
        %v1145 = vsel %vm887, %v1139, 0
        %1147 = vmatprep.subr.mxu0 0.0
        %1148 = vmatpush1.msra.mxu0 %v1142
        %1149 = vmatprep.subr.mxu0 0.0
        %1150 = vmatpush1.msra.mxu0 0.0
        %1151 = vmatprep.subr.mxu0 0.0
        %1152 = vmatpush1.msra.mxu0 0.0
        %1153 = vmatprep.subr.mxu0 0.0
        %1154 = vmatpush1.msra.mxu0 0.0
        %1155 = vmatprep.subr.mxu0 0.0
        %1156 = vmatpush1.msra.mxu0 0.0
        %1157 = vmatprep.subr.mxu0 0.0
        %1158 = vmatpush1.msra.mxu0 0.0
        %1159 = vmatprep.subr.mxu0 0.0
        %1160 = vmatpush1.msra.mxu0 0.0
        %1161 = vmatprep.subr.mxu0 0.0
        %1162 = vmatpush1.msra.mxu0 0.0
        %1163 = vmatprep.subr.mxu0 0.0
        %1164 = vmatpush1.msra.mxu0 0.0
        %1165 = vmatprep.subr.mxu0 0.0
        %1166 = vmatpush1.msra.mxu0 0.0
        %1167 = vmatprep.subr.mxu0 0.0
        %1168 = vmatpush1.msra.mxu0 0.0
        %1169 = vmatprep.subr.mxu0 0.0
        %1170 = vmatpush1.msra.mxu0 0.0
        %1171 = vmatprep.subr.mxu0 0.0
        %1172 = vmatpush1.msra.mxu0 0.0
        %1173 = vmatprep.subr.mxu0 0.0
        %1174 = vmatpush1.msra.mxu0 0.0
        %1175 = vmatprep.subr.mxu0 0.0
        %1176 = vmatpush1.msra.mxu0 0.0
        %1177 = vmatprep.subr.mxu0 0.0
        %1178 = vmatpush1.msra.mxu0 0.0
        %1179 = vmatprep.subr.mxu0 0.0
        %1180 = vmatpush1.msra.mxu0 0.0
        %1181 = vmatprep.subr.mxu0 0.0
        %1182 = vmatpush1.msra.mxu0 0.0
        %1183 = vmatprep.subr.mxu0 0.0
        %1184 = vmatpush1.msra.mxu0 0.0
        %1185 = vmatprep.subr.mxu0 0.0
        %1186 = vmatpush1.msra.mxu0 0.0
        %1187 = vmatprep.subr.mxu0 0.0
        %1188 = vmatpush1.msra.mxu0 0.0
        %1189 = vmatprep.subr.mxu0 0.0
        %1190 = vmatpush1.msra.mxu0 0.0
        %1191 = vmatprep.subr.mxu0 0.0
        %1192 = vmatpush1.msra.mxu0 0.0
        %1193 = vmatprep.subr.mxu0 0.0
        %1194 = vmatpush1.msra.mxu0 0.0
        %1195 = vmatprep.subr.mxu0 0.0
        %1196 = vmatpush1.msra.mxu0 0.0
        %1197 = vmatprep.subr.mxu0 0.0
        %1198 = vmatpush1.msra.mxu0 0.0
        %1199 = vmatprep.subr.mxu0 0.0
        %1200 = vmatpush1.msra.mxu0 0.0
        %1201 = vmatprep.subr.mxu0 0.0
        %1202 = vmatpush1.msra.mxu0 0.0
        %1203 = vmatprep.subr.mxu0 0.0
        %1204 = vmatpush1.msra.mxu0 0.0
        %1205 = vmatprep.subr.mxu0 0.0
        %1206 = vmatpush1.msra.mxu0 0.0
        %1207 = vmatprep.subr.mxu0 0.0
        %1208 = vmatpush1.msra.mxu0 0.0
        %1209 = vmatprep.subr.mxu0 0.0
        %1210 = vmatpush1.msra.mxu0 0.0
        %1211 = vmatprep.mubr.f32.mxu0 0.0
        %1212 = vmatmul.mubr.f32.gmra.mrb[0].mxu0 %v1145
        %v1213 = vpop.f32.mrb[0].mxu0
        %v1214 = vadd.f32 0.0, %v1213
        %v1215 = vpop.f32.mrb[0].mxu0
        %1216 = vdwg.mxu0
        %1218 = vrot.lane.b32.xlu0 %v1214, 8
        %v1219 = vpop.permute.xlu0 %1218
        %vm1221 = vcmask 130112
        %1222 = vst.msk [vmem:[#allocation4] sm:$0xff] %vm1221, %v1219
        %1223 = vrot.lane.b32.xlu0 %v876, 112
        %v1224 = vpop.permute.xlu0 %1223
        %1225 = vrot.lane.b32.xlu0 %v877, 112
        %v1226 = vpop.permute.xlu0 %1225
        %v1227 = vsel %vm887, %v1224, 0
        %v1229 = vsel %vm887, %v1226, 0
        %1231 = vmatprep.subr.mxu0 0.0
        %1232 = vmatpush1.xpose.msra.mxu0 %v1229
        %1233 = vmatprep.subr.mxu0 0.0
        %1234 = vmatpush1.xpose.msra.mxu0 0.0
        %1235 = vmatprep.subr.mxu0 0.0
        %1236 = vmatpush1.xpose.msra.mxu0 0.0
        %1237 = vmatprep.subr.mxu0 0.0
        %1238 = vmatpush1.xpose.msra.mxu0 0.0
        %1239 = vmatprep.subr.mxu0 0.0
        %1240 = vmatpush1.xpose.msra.mxu0 0.0
        %1241 = vmatprep.subr.mxu0 0.0
        %1242 = vmatpush1.xpose.msra.mxu0 0.0
        %1243 = vmatprep.subr.mxu0 0.0
        %1244 = vmatpush1.xpose.msra.mxu0 0.0
        %1245 = vmatprep.subr.mxu0 0.0
        %1246 = vmatpush1.xpose.msra.mxu0 0.0
        %1247 = vmatprep.subr.mxu0 0.0
        %1248 = vmatpush1.xpose.msra.mxu0 0.0
        %1249 = vmatprep.subr.mxu0 0.0
        %1250 = vmatpush1.xpose.msra.mxu0 0.0
        %1251 = vmatprep.subr.mxu0 0.0
        %1252 = vmatpush1.xpose.msra.mxu0 0.0
        %1253 = vmatprep.subr.mxu0 0.0
        %1254 = vmatpush1.xpose.msra.mxu0 0.0
        %1255 = vmatprep.subr.mxu0 0.0
        %1256 = vmatpush1.xpose.msra.mxu0 0.0
        %1257 = vmatprep.subr.mxu0 0.0
        %1258 = vmatpush1.xpose.msra.mxu0 0.0
        %1259 = vmatprep.subr.mxu0 0.0
        %1260 = vmatpush1.xpose.msra.mxu0 0.0
        %1261 = vmatprep.subr.mxu0 0.0
        %1262 = vmatpush1.xpose.msra.mxu0 0.0
        %1263 = vmatprep.subr.mxu0 0.0
        %1264 = vmatpush1.xpose.msra.mxu0 0.0
        %1265 = vmatprep.subr.mxu0 0.0
        %1266 = vmatpush1.xpose.msra.mxu0 0.0
        %1267 = vmatprep.subr.mxu0 0.0
        %1268 = vmatpush1.xpose.msra.mxu0 0.0
        %1269 = vmatprep.subr.mxu0 0.0
        %1270 = vmatpush1.xpose.msra.mxu0 0.0
        %1271 = vmatprep.subr.mxu0 0.0
        %1272 = vmatpush1.xpose.msra.mxu0 0.0
        %1273 = vmatprep.subr.mxu0 0.0
        %1274 = vmatpush1.xpose.msra.mxu0 0.0
        %1275 = vmatprep.subr.mxu0 0.0
        %1276 = vmatpush1.xpose.msra.mxu0 0.0
        %1277 = vmatprep.subr.mxu0 0.0
        %1278 = vmatpush1.xpose.msra.mxu0 0.0
        %1279 = vmatprep.subr.mxu0 0.0
        %1280 = vmatpush1.xpose.msra.mxu0 0.0
        %1281 = vmatprep.subr.mxu0 0.0
        %1282 = vmatpush1.xpose.msra.mxu0 0.0
        %1283 = vmatprep.subr.mxu0 0.0
        %1284 = vmatpush1.xpose.msra.mxu0 0.0
        %1285 = vmatprep.subr.mxu0 0.0
        %1286 = vmatpush1.xpose.msra.mxu0 0.0
        %1287 = vmatprep.subr.mxu0 0.0
        %1288 = vmatpush1.xpose.msra.mxu0 0.0
        %1289 = vmatprep.subr.mxu0 0.0
        %1290 = vmatpush1.xpose.msra.mxu0 0.0
        %1291 = vmatprep.subr.mxu0 0.0
        %1292 = vmatpush1.xpose.msra.mxu0 0.0
        %1293 = vmatprep.subr.mxu0 0.0
        %1294 = vmatpush1.xpose.msra.mxu0 0.0
        %1295 = vmatprep.mubr.f32.mxu0 0.0
        %1296 = vmatmul.mubr.f32.gmra.mrb[0].mxu0 %v1227
        %v1297 = vpop.f32.mrb[0].mxu0
        %v1298 = vadd.f32 0.0, %v1297
        %v1299 = vpop.f32.mrb[0].mxu0
        %1300 = vdwg.mxu0
        %v1301 = vsel %vm886, -1e+09, %v1298
        %v1302 = vsel %vm887, %v1301, -inf
        %1303 = vmax.xlane.f32.xlu0 %v1302
        %v1304 = vpop.xlane.xlu0 %1303
        %v1305 = vsub.f32 %v1301, %v1304
        %v1306 = vmul.f32 %v1305, 1.442695
        %v1307 = vpow.pop %v1306
        %v1308 = vsel %vm887, %v1307, 0.0
        %1309 = vadd.xlane.f32.xlu0 %v1308
        %v1310 = vpop.xlane.xlu0 %1309
        %v1311 = vrcp.pop %v1310
        %v1312 = vmul.f32 %v1307, %v1311
        %1313 = vrot.lane.b32.xlu0 %v878, 112
        %v1314 = vpop.permute.xlu0 %1313
        %v1317 = vsel %vm887, %v1312, 0
        %1319 = vmatprep.subr.mxu0 0.0
        %1320 = vmatpush1.msra.mxu0 %v1314
        %1321 = vmatprep.subr.mxu0 0.0
        %1322 = vmatpush1.msra.mxu0 0.0
        %1323 = vmatprep.subr.mxu0 0.0
        %1324 = vmatpush1.msra.mxu0 0.0
        %1325 = vmatprep.subr.mxu0 0.0
        %1326 = vmatpush1.msra.mxu0 0.0
        %1327 = vmatprep.subr.mxu0 0.0
        %1328 = vmatpush1.msra.mxu0 0.0
        %1329 = vmatprep.subr.mxu0 0.0
        %1330 = vmatpush1.msra.mxu0 0.0
        %1331 = vmatprep.subr.mxu0 0.0
        %1332 = vmatpush1.msra.mxu0 0.0
        %1333 = vmatprep.subr.mxu0 0.0
        %1334 = vmatpush1.msra.mxu0 0.0
        %1335 = vmatprep.subr.mxu0 0.0
        %1336 = vmatpush1.msra.mxu0 0.0
        %1337 = vmatprep.subr.mxu0 0.0
        %1338 = vmatpush1.msra.mxu0 0.0
        %1339 = vmatprep.subr.mxu0 0.0
        %1340 = vmatpush1.msra.mxu0 0.0
        %1341 = vmatprep.subr.mxu0 0.0
        %1342 = vmatpush1.msra.mxu0 0.0
        %1343 = vmatprep.subr.mxu0 0.0
        %1344 = vmatpush1.msra.mxu0 0.0
        %1345 = vmatprep.subr.mxu0 0.0
        %1346 = vmatpush1.msra.mxu0 0.0
        %1347 = vmatprep.subr.mxu0 0.0
        %1348 = vmatpush1.msra.mxu0 0.0
        %1349 = vmatprep.subr.mxu0 0.0
        %1350 = vmatpush1.msra.mxu0 0.0
        %1351 = vmatprep.subr.mxu0 0.0
        %1352 = vmatpush1.msra.mxu0 0.0
        %1353 = vmatprep.subr.mxu0 0.0
        %1354 = vmatpush1.msra.mxu0 0.0
        %1355 = vmatprep.subr.mxu0 0.0
        %1356 = vmatpush1.msra.mxu0 0.0
        %1357 = vmatprep.subr.mxu0 0.0
        %1358 = vmatpush1.msra.mxu0 0.0
        %1359 = vmatprep.subr.mxu0 0.0
        %1360 = vmatpush1.msra.mxu0 0.0
        %1361 = vmatprep.subr.mxu0 0.0
        %1362 = vmatpush1.msra.mxu0 0.0
        %1363 = vmatprep.subr.mxu0 0.0
        %1364 = vmatpush1.msra.mxu0 0.0
        %1365 = vmatprep.subr.mxu0 0.0
        %1366 = vmatpush1.msra.mxu0 0.0
        %1367 = vmatprep.subr.mxu0 0.0
        %1368 = vmatpush1.msra.mxu0 0.0
        %1369 = vmatprep.subr.mxu0 0.0
        %1370 = vmatpush1.msra.mxu0 0.0
        %1371 = vmatprep.subr.mxu0 0.0
        %1372 = vmatpush1.msra.mxu0 0.0
        %1373 = vmatprep.subr.mxu0 0.0
        %1374 = vmatpush1.msra.mxu0 0.0
        %1375 = vmatprep.subr.mxu0 0.0
        %1376 = vmatpush1.msra.mxu0 0.0
        %1377 = vmatprep.subr.mxu0 0.0
        %1378 = vmatpush1.msra.mxu0 0.0
        %1379 = vmatprep.subr.mxu0 0.0
        %1380 = vmatpush1.msra.mxu0 0.0
        %1381 = vmatprep.subr.mxu0 0.0
        %1382 = vmatpush1.msra.mxu0 0.0
        %1383 = vmatprep.mubr.f32.mxu0 0.0
        %1384 = vmatmul.mubr.f32.gmra.mrb[0].mxu0 %v1317
        %v1385 = vpop.f32.mrb[0].mxu0
        %v1386 = vadd.f32 0.0, %v1385
        %v1387 = vpop.f32.mrb[0].mxu0
        %1388 = vdwg.mxu0
        %1390 = vrot.lane.b32.xlu0 %v1386, 16
        %v1391 = vpop.permute.xlu0 %1390
        %vm1393 = vcmask 195712
        %1394 = vst.msk [vmem:[#allocation4] sm:$0xff] %vm1393, %v1391
        %1395 = vrot.lane.b32.xlu0 %v876, 104
        %v1396 = vpop.permute.xlu0 %1395
        %1397 = vrot.lane.b32.xlu0 %v877, 104
        %v1398 = vpop.permute.xlu0 %1397
        %v1399 = vsel %vm887, %v1396, 0
        %v1401 = vsel %vm887, %v1398, 0
        %1403 = vmatprep.subr.mxu0 0.0
        %1404 = vmatpush1.xpose.msra.mxu0 %v1401
        %1405 = vmatprep.subr.mxu0 0.0
        %1406 = vmatpush1.xpose.msra.mxu0 0.0
        %1407 = vmatprep.subr.mxu0 0.0
        %1408 = vmatpush1.xpose.msra.mxu0 0.0
        %1409 = vmatprep.subr.mxu0 0.0
        %1410 = vmatpush1.xpose.msra.mxu0 0.0
        %1411 = vmatprep.subr.mxu0 0.0
        %1412 = vmatpush1.xpose.msra.mxu0 0.0
        %1413 = vmatprep.subr.mxu0 0.0
        %1414 = vmatpush1.xpose.msra.mxu0 0.0
        %1415 = vmatprep.subr.mxu0 0.0
        %1416 = vmatpush1.xpose.msra.mxu0 0.0
        %1417 = vmatprep.subr.mxu0 0.0
        %1418 = vmatpush1.xpose.msra.mxu0 0.0
        %1419 = vmatprep.subr.mxu0 0.0
        %1420 = vmatpush1.xpose.msra.mxu0 0.0
        %1421 = vmatprep.subr.mxu0 0.0
        %1422 = vmatpush1.xpose.msra.mxu0 0.0
        %1423 = vmatprep.subr.mxu0 0.0
        %1424 = vmatpush1.xpose.msra.mxu0 0.0
        %1425 = vmatprep.subr.mxu0 0.0
        %1426 = vmatpush1.xpose.msra.mxu0 0.0
        %1427 = vmatprep.subr.mxu0 0.0
        %1428 = vmatpush1.xpose.msra.mxu0 0.0
        %1429 = vmatprep.subr.mxu0 0.0
        %1430 = vmatpush1.xpose.msra.mxu0 0.0
        %1431 = vmatprep.subr.mxu0 0.0
        %1432 = vmatpush1.xpose.msra.mxu0 0.0
        %1433 = vmatprep.subr.mxu0 0.0
        %1434 = vmatpush1.xpose.msra.mxu0 0.0
        %1435 = vmatprep.subr.mxu0 0.0
        %1436 = vmatpush1.xpose.msra.mxu0 0.0
        %1437 = vmatprep.subr.mxu0 0.0
        %1438 = vmatpush1.xpose.msra.mxu0 0.0
        %1439 = vmatprep.subr.mxu0 0.0
        %1440 = vmatpush1.xpose.msra.mxu0 0.0
        %1441 = vmatprep.subr.mxu0 0.0
        %1442 = vmatpush1.xpose.msra.mxu0 0.0
        %1443 = vmatprep.subr.mxu0 0.0
        %1444 = vmatpush1.xpose.msra.mxu0 0.0
        %1445 = vmatprep.subr.mxu0 0.0
        %1446 = vmatpush1.xpose.msra.mxu0 0.0
        %1447 = vmatprep.subr.mxu0 0.0
        %1448 = vmatpush1.xpose.msra.mxu0 0.0
        %1449 = vmatprep.subr.mxu0 0.0
        %1450 = vmatpush1.xpose.msra.mxu0 0.0
        %1451 = vmatprep.subr.mxu0 0.0
        %1452 = vmatpush1.xpose.msra.mxu0 0.0
        %1453 = vmatprep.subr.mxu0 0.0
        %1454 = vmatpush1.xpose.msra.mxu0 0.0
        %1455 = vmatprep.subr.mxu0 0.0
        %1456 = vmatpush1.xpose.msra.mxu0 0.0
        %1457 = vmatprep.subr.mxu0 0.0
        %1458 = vmatpush1.xpose.msra.mxu0 0.0
        %1459 = vmatprep.subr.mxu0 0.0
        %1460 = vmatpush1.xpose.msra.mxu0 0.0
        %1461 = vmatprep.subr.mxu0 0.0
        %1462 = vmatpush1.xpose.msra.mxu0 0.0
        %1463 = vmatprep.subr.mxu0 0.0
        %1464 = vmatpush1.xpose.msra.mxu0 0.0
        %1465 = vmatprep.subr.mxu0 0.0
        %1466 = vmatpush1.xpose.msra.mxu0 0.0
        %1467 = vmatprep.mubr.f32.mxu0 0.0
        %1468 = vmatmul.mubr.f32.gmra.mrb[0].mxu0 %v1399
        %v1469 = vpop.f32.mrb[0].mxu0
        %v1470 = vadd.f32 0.0, %v1469
        %v1471 = vpop.f32.mrb[0].mxu0
        %1472 = vdwg.mxu0
        %v1473 = vsel %vm886, -1e+09, %v1470
        %v1474 = vsel %vm887, %v1473, -inf
        %1475 = vmax.xlane.f32.xlu0 %v1474
        %v1476 = vpop.xlane.xlu0 %1475
        %v1477 = vsub.f32 %v1473, %v1476
        %v1478 = vmul.f32 %v1477, 1.442695
        %v1479 = vpow.pop %v1478
        %v1480 = vsel %vm887, %v1479, 0.0
        %1481 = vadd.xlane.f32.xlu0 %v1480
        %v1482 = vpop.xlane.xlu0 %1481
        %v1483 = vrcp.pop %v1482
        %v1484 = vmul.f32 %v1479, %v1483
        %1485 = vrot.lane.b32.xlu0 %v878, 104
        %v1486 = vpop.permute.xlu0 %1485
        %v1489 = vsel %vm887, %v1484, 0
        %1491 = vmatprep.subr.mxu0 0.0
        %1492 = vmatpush1.msra.mxu0 %v1486
        %1493 = vmatprep.subr.mxu0 0.0
        %1494 = vmatpush1.msra.mxu0 0.0
        %1495 = vmatprep.subr.mxu0 0.0
        %1496 = vmatpush1.msra.mxu0 0.0
        %1497 = vmatprep.subr.mxu0 0.0
        %1498 = vmatpush1.msra.mxu0 0.0
        %1499 = vmatprep.subr.mxu0 0.0
        %1500 = vmatpush1.msra.mxu0 0.0
        %1501 = vmatprep.subr.mxu0 0.0
        %1502 = vmatpush1.msra.mxu0 0.0
        %1503 = vmatprep.subr.mxu0 0.0
        %1504 = vmatpush1.msra.mxu0 0.0
        %1505 = vmatprep.subr.mxu0 0.0
        %1506 = vmatpush1.msra.mxu0 0.0
        %1507 = vmatprep.subr.mxu0 0.0
        %1508 = vmatpush1.msra.mxu0 0.0
        %1509 = vmatprep.subr.mxu0 0.0
        %1510 = vmatpush1.msra.mxu0 0.0
        %1511 = vmatprep.subr.mxu0 0.0
        %1512 = vmatpush1.msra.mxu0 0.0
        %1513 = vmatprep.subr.mxu0 0.0
        %1514 = vmatpush1.msra.mxu0 0.0
        %1515 = vmatprep.subr.mxu0 0.0
        %1516 = vmatpush1.msra.mxu0 0.0
        %1517 = vmatprep.subr.mxu0 0.0
        %1518 = vmatpush1.msra.mxu0 0.0
        %1519 = vmatprep.subr.mxu0 0.0
        %1520 = vmatpush1.msra.mxu0 0.0
        %1521 = vmatprep.subr.mxu0 0.0
        %1522 = vmatpush1.msra.mxu0 0.0
        %1523 = vmatprep.subr.mxu0 0.0
        %1524 = vmatpush1.msra.mxu0 0.0
        %1525 = vmatprep.subr.mxu0 0.0
        %1526 = vmatpush1.msra.mxu0 0.0
        %1527 = vmatprep.subr.mxu0 0.0
        %1528 = vmatpush1.msra.mxu0 0.0
        %1529 = vmatprep.subr.mxu0 0.0
        %1530 = vmatpush1.msra.mxu0 0.0
        %1531 = vmatprep.subr.mxu0 0.0
        %1532 = vmatpush1.msra.mxu0 0.0
        %1533 = vmatprep.subr.mxu0 0.0
        %1534 = vmatpush1.msra.mxu0 0.0
        %1535 = vmatprep.subr.mxu0 0.0
        %1536 = vmatpush1.msra.mxu0 0.0
        %1537 = vmatprep.subr.mxu0 0.0
        %1538 = vmatpush1.msra.mxu0 0.0
        %1539 = vmatprep.subr.mxu0 0.0
        %1540 = vmatpush1.msra.mxu0 0.0
        %1541 = vmatprep.subr.mxu0 0.0
        %1542 = vmatpush1.msra.mxu0 0.0
        %1543 = vmatprep.subr.mxu0 0.0
        %1544 = vmatpush1.msra.mxu0 0.0
        %1545 = vmatprep.subr.mxu0 0.0
        %1546 = vmatpush1.msra.mxu0 0.0
        %1547 = vmatprep.subr.mxu0 0.0
        %1548 = vmatpush1.msra.mxu0 0.0
        %1549 = vmatprep.subr.mxu0 0.0
        %1550 = vmatpush1.msra.mxu0 0.0
        %1551 = vmatprep.subr.mxu0 0.0
        %1552 = vmatpush1.msra.mxu0 0.0
        %1553 = vmatprep.subr.mxu0 0.0
        %1554 = vmatpush1.msra.mxu0 0.0
        %1555 = vmatprep.mubr.f32.mxu0 0.0
        %1556 = vmatmul.mubr.f32.gmra.mrb[0].mxu0 %v1489
        %v1557 = vpop.f32.mrb[0].mxu0
        %v1558 = vadd.f32 0.0, %v1557
        %v1559 = vpop.f32.mrb[0].mxu0
        %1560 = vdwg.mxu0
        %1562 = vrot.lane.b32.xlu0 %v1558, 24
        %v1563 = vpop.permute.xlu0 %1562
        %vm1565 = vcmask 261312
        %1566 = vst.msk [vmem:[#allocation4] sm:$0xff] %vm1565, %v1563
        %v1567 = vld [vmem:[#allocation4] sm:$0xff]
        %v1568 = vld [vmem:[#allocation22] sm:$0xff]
        %v1569 = vld [vmem:[#allocation22 + $0x8] sm:$0xff]
        %v1570 = vld [vmem:[#allocation22 + $0x10] sm:$0xff]
        %v1571 = vld [vmem:[#allocation22 + $0x18] sm:$0xff]
        %v1572 = vld [vmem:[#allocation23] sm:$0x1]
        %v1574 = vlaneseq
        %v1575 = vshrl.u32 %v1574, 7
        %v1576 = vsub.s32 0, %v1575
        %v1577 = vrot.slane %v1572, %v1576
        %v1580 = vsel %vm802, %v1567, 0
        %1582 = vmatprep.subr.mxu0 0.0
        %1583 = vmatpush1.msra.mxu0 %v1568
        %1584 = vmatprep.subr.mxu0 0.0
        %1585 = vmatpush1.msra.mxu0 %v1569
        %1586 = vmatprep.subr.mxu0 0.0
        %1587 = vmatpush1.msra.mxu0 %v1570
        %1588 = vmatprep.subr.mxu0 0.0
        %1589 = vmatpush1.msra.mxu0 %v1571
        %1590 = vmatprep.subr.mxu0 0.0
        %1591 = vmatpush1.msra.mxu0 0.0
        %1592 = vmatprep.subr.mxu0 0.0
        %1593 = vmatpush1.msra.mxu0 0.0
        %1594 = vmatprep.subr.mxu0 0.0
        %1595 = vmatpush1.msra.mxu0 0.0
        %1596 = vmatprep.subr.mxu0 0.0
        %1597 = vmatpush1.msra.mxu0 0.0
        %1598 = vmatprep.subr.mxu0 0.0
        %1599 = vmatpush1.msra.mxu0 0.0
        %1600 = vmatprep.subr.mxu0 0.0
        %1601 = vmatpush1.msra.mxu0 0.0
        %1602 = vmatprep.subr.mxu0 0.0
        %1603 = vmatpush1.msra.mxu0 0.0
        %1604 = vmatprep.subr.mxu0 0.0
        %1605 = vmatpush1.msra.mxu0 0.0
        %1606 = vmatprep.subr.mxu0 0.0
        %1607 = vmatpush1.msra.mxu0 0.0
        %1608 = vmatprep.subr.mxu0 0.0
        %1609 = vmatpush1.msra.mxu0 0.0
        %1610 = vmatprep.subr.mxu0 0.0
        %1611 = vmatpush1.msra.mxu0 0.0
        %1612 = vmatprep.subr.mxu0 0.0
        %1613 = vmatpush1.msra.mxu0 0.0
        %1614 = vmatprep.subr.mxu0 0.0
        %1615 = vmatpush1.msra.mxu0 0.0
        %1616 = vmatprep.subr.mxu0 0.0
        %1617 = vmatpush1.msra.mxu0 0.0
        %1618 = vmatprep.subr.mxu0 0.0
        %1619 = vmatpush1.msra.mxu0 0.0
        %1620 = vmatprep.subr.mxu0 0.0
        %1621 = vmatpush1.msra.mxu0 0.0
        %1622 = vmatprep.subr.mxu0 0.0
        %1623 = vmatpush1.msra.mxu0 0.0
        %1624 = vmatprep.subr.mxu0 0.0
        %1625 = vmatpush1.msra.mxu0 0.0
        %1626 = vmatprep.subr.mxu0 0.0
        %1627 = vmatpush1.msra.mxu0 0.0
        %1628 = vmatprep.subr.mxu0 0.0
        %1629 = vmatpush1.msra.mxu0 0.0
        %1630 = vmatprep.subr.mxu0 0.0
        %1631 = vmatpush1.msra.mxu0 0.0
        %1632 = vmatprep.subr.mxu0 0.0
        %1633 = vmatpush1.msra.mxu0 0.0
        %1634 = vmatprep.subr.mxu0 0.0
        %1635 = vmatpush1.msra.mxu0 0.0
        %1636 = vmatprep.subr.mxu0 0.0
        %1637 = vmatpush1.msra.mxu0 0.0
        %1638 = vmatprep.subr.mxu0 0.0
        %1639 = vmatpush1.msra.mxu0 0.0
        %1640 = vmatprep.subr.mxu0 0.0
        %1641 = vmatpush1.msra.mxu0 0.0
        %1642 = vmatprep.subr.mxu0 0.0
        %1643 = vmatpush1.msra.mxu0 0.0
        %1644 = vmatprep.subr.mxu0 0.0
        %1645 = vmatpush1.msra.mxu0 0.0
        %1646 = vmatprep.mubr.f32.mxu0 0.0
        %1647 = vmatmul.mubr.f32.gmra.mrb[0].mxu0 %v1580
        %v1648 = vpop.f32.mrb[0].mxu0
        %v1649 = vadd.f32 %v1577, %v1648
        %v1650 = vpop.f32.mrb[0].mxu0
        %1651 = vdwg.mxu0
        %1652 = vst.msk [vmem:[%s612] sm:$0xff] %vm802, %v1649
        %s1653 = sand.u32 %s331, 1
        %s1654 = scalar_lea.sflag [#allocation7], %s1653
        %s1655 = sand.u32 %s331, 1
        %s1656 = smul.addr %s1655, 8
        %s1657 = scalar_lea.vmem [#allocation25], %s1656
        // Predicated region
        $region121: #{tpu_custom_call.1} parent=67 // pred_check
          %p1658 = pneg %p341
        $region122: #{tpu_custom_call.1} parent=67 // pred_check_branch
          %1660 = sbr.rel (%p1658) target = $region124
        $region123: #{tpu_custom_call.1} parent=67 // pred_region
          %s1662 = ssub.s32 128, 128
          %1663 = vsyncadd %s1654, %s1662
          %s1664 = sadd.s32 %s40, %s39
          %s1665 = smul.addr %s1664, 128
          %s1666 = scalar_lea.hbm %s12, %s1665
          %s1668 = sshll.u32 %s1657, 4
          %s1669 = int_to_ptr.vmem [resolvable:$true] %s1668
          %1671 = dma.vmem_to_hbm [thread:$0]  %s1669, 128, %s1666, %s1654
        $region124: #{tpu_custom_call.1} parent=67 // pred_fallthru
          _
      $region68: #{tpu_custom_call.1} parent=5 // pred_fallthru
        _
      %p1672 = scmp.le.s32.totalorder 2, %s30
      // Predicated region
      $region125: #{tpu_custom_call.1} parent=5 // pred_check
        %p1673 = pneg %p1672
      $region126: #{tpu_custom_call.1} parent=5 // pred_check_branch
        %1675 = sbr.rel (%p1673) target = $region128
      $region127: #{tpu_custom_call.1} parent=5 // pred_region
        %s1676 = ssub.s32 %s30, 2
        // Predicated region
        $region129: #{tpu_custom_call.1} parent=127 // pred_check
          %p1677 = pneg %p347
        $region130: #{tpu_custom_call.1} parent=127 // pred_check_branch
          %1679 = sbr.rel (%p1677) target = $region132
        $region131: #{tpu_custom_call.1} parent=127 // pred_region
          %s1680 = sand.u32 %s332, 1
          %s1681 = scalar_lea.sflag [#allocation7], %s1680
          %s1682 = sand.u32 %s332, 1
          %s1683 = smul.addr %s1682, 8
          %s1684 = scalar_lea.vmem [#allocation25], %s1683
          %1685 = dma.done %s1681, 128
        $region132: #{tpu_custom_call.1} parent=127 // pred_fallthru
          _
      $region128: #{tpu_custom_call.1} parent=5 // pred_fallthru
        _
    $region6: #{tpu_custom_call.1} parent=1 // loop_footer
      %s34 = sadd.s32 1, %s30
    $region7: #{tpu_custom_call.1} parent=1 // loop_footer_branch
      %29 = sbr.rel target = $region3
    $region8: #{tpu_custom_call.1} parent=1 // loop_exit
      _
    %1686 = vsyncpa [#allocation6], 1
    %s1687 = scalar_lea.sflag [#allocation6], 1
    %1688 = vsyncpa %s1687, 1
    %1689 = vsyncpa [#allocation9], 1
    %1690 = vsyncpa [#allocation12], 1
    %1691 = vsyncpa [#allocation15], 1
    %1692 = vsyncpa [#allocation18], 1
    %1693 = vsyncpa [#allocation21], 1
    %1694 = vsyncpa [#allocation24], 1
    %1695 = vsyncpa [#allocation7], 1
    %s1696 = scalar_lea.sflag [#allocation7], 1
    %1697 = vsyncpa %s1696, 1

// kernel: tpu_custom_call.1
$region0: #{tpu_custom_call.1}
  #allocation0 [shape = 'u32[]', space=smem, size = 0x4, offset = 0x4, fixed_abs, tag = 'smem constant byte address 0x4 - core index']
  #allocation1 [shape = 'u32[144,128]{1,0:T(1,128)}', space=vmem, size = 0x12000, scoped, tag = 'internal scratch']
  #allocation2 [shape = 'f32[8,32]{1,0:T(8,128)}', space=vmem, size = 0x1000, scoped, tag = 'scratch operand']
  #allocation3 [shape = 'f32[8,32]{1,0:T(8,128)}', space=vmem, size = 0x1000, scoped, tag = 'scratch operand']
  #allocation4 [shape = 'f32[8,32]{1,0:T(8,128)}', space=vmem, size = 0x1000, scoped, tag = 'scratch operand']
  %s0 = inlined_call_operand.hbm [shape: f32[2,8,32], index: 0, kind: input, shape index: {}]
  %s1 = inlined_call_operand.hbm [shape: f32[2,8,32], index: 1, kind: input, shape index: {}]
  %s2 = inlined_call_operand.hbm [shape: f32[2,8,32], index: 2, kind: input, shape index: {}]
  %s3 = inlined_call_operand.hbm [shape: s32[2,1,8], index: 3, kind: input, shape index: {}]
  %s4 = inlined_call_operand.hbm [shape: f32[32,32], index: 4, kind: input, shape index: {}]
  %s5 = inlined_call_operand.hbm [shape: f32[1,32], index: 5, kind: input, shape index: {}]
  %s6 = inlined_call_operand.hbm [shape: f32[32,32], index: 6, kind: input, shape index: {}]
  %s7 = inlined_call_operand.hbm [shape: f32[1,32], index: 7, kind: input, shape index: {}]
  %s8 = inlined_call_operand.hbm [shape: f32[32,32], index: 8, kind: input, shape index: {}]
  %s9 = inlined_call_operand.hbm [shape: f32[1,32], index: 9, kind: input, shape index: {}]
  %s10 = inlined_call_operand.hbm [shape: f32[32,32], index: 10, kind: input, shape index: {}]
  %s11 = inlined_call_operand.hbm [shape: f32[1,32], index: 11, kind: input, shape index: {}]
  %s12 = inlined_call_operand.hbm [shape: f32[2,8,32], index: 12, kind: output, shape index: {}]
  %s13 = sld [smem:[#allocation0]]
  $region133: #{tpu_custom_call.1} parent=0
    _
  %s15 = ssub.s32 1, %s13
  %s16 = scalar_select 0, %s15, %s13
  $region1: #{tpu_custom_call.1} parent=0
    #allocation5 [shape = 'u8[8192]{0}', space=vmem, size = 0x2000, scoped, tag = 'input window, operand 0']
    #allocation6 [shape = 's32[2]{0}', space=sflag, size = 0x8, scoped, tag = 'scoped memory for tpu_custom_call.1']
    #allocation7 [shape = 's32[2]{0}', space=sflag, size = 0x8, scoped, tag = 'scoped memory for tpu_custom_call.1']
    #allocation8 [shape = 'u8[8192]{0}', space=vmem, size = 0x2000, scoped, tag = 'input window, operand 1']
    #allocation9 [shape = 's32[2]{0}', space=sflag, size = 0x8, scoped, tag = 'scoped memory for tpu_custom_call.1']
    #allocation10 [shape = 'u8[8192]{0}', space=vmem, size = 0x2000, scoped, tag = 'input window, operand 2']
    #allocation11 [shape = 'u8[1024]{0}', space=vmem, size = 0x400, scoped, tag = 'input window, operand 3']
    #allocation12 [shape = 's32[2]{0}', space=sflag, size = 0x8, scoped, tag = 'scoped memory for tpu_custom_call.1']
    #allocation13 [shape = 'u8[16384]{0}', space=vmem, size = 0x4000, scoped, tag = 'input window, operand 4, single buffered']
    #allocation14 [shape = 'u8[512]{0}', space=vmem, size = 0x400, scoped, tag = 'input window, operand 5, single buffered']
    #allocation15 [shape = 's32[1]{0}', space=sflag, size = 0x4, scoped, tag = 'scoped memory for tpu_custom_call.1']
    #allocation16 [shape = 'u8[16384]{0}', space=vmem, size = 0x4000, scoped, tag = 'input window, operand 6, single buffered']
    #allocation17 [shape = 'u8[512]{0}', space=vmem, size = 0x400, scoped, tag = 'input window, operand 7, single buffered']
    #allocation18 [shape = 's32[1]{0}', space=sflag, size = 0x4, scoped, tag = 'scoped memory for tpu_custom_call.1']
    #allocation19 [shape = 'u8[16384]{0}', space=vmem, size = 0x4000, scoped, tag = 'input window, operand 8, single buffered']
    #allocation20 [shape = 'u8[512]{0}', space=vmem, size = 0x400, scoped, tag = 'input window, operand 9, single buffered']
    #allocation21 [shape = 's32[1]{0}', space=sflag, size = 0x4, scoped, tag = 'scoped memory for tpu_custom_call.1']
    #allocation22 [shape = 'u8[16384]{0}', space=vmem, size = 0x4000, scoped, tag = 'input window, operand 10, single buffered']
    #allocation23 [shape = 'u8[512]{0}', space=vmem, size = 0x400, scoped, tag = 'input window, operand 11, single buffered']
    #allocation24 [shape = 's32[1]{0}', space=sflag, size = 0x4, scoped, tag = 'scoped memory for tpu_custom_call.1']
    #allocation25 [shape = 'u8[8192]{0}', space=vmem, size = 0x2000, scoped, tag = 'output window, operand 0']
    %17 = vsyncpa [#allocation6], 0
    %s18 = scalar_lea.sflag [#allocation6], 1
    %19 = vsyncpa %s18, 0
    %20 = vsyncpa [#allocation9], 0
    %s21 = scalar_lea.sflag [#allocation9], 1
    %22 = vsyncpa %s21, 0
    %23 = vsyncpa [#allocation12], 0
    %s24 = scalar_lea.sflag [#allocation12], 1
    %25 = vsyncpa %s24, 0
    %26 = vsyncpa [#allocation15], 0
    %27 = vsyncpa [#allocation18], 0
    %28 = vsyncpa [#allocation21], 0
    %29 = vsyncpa [#allocation24], 0
    %30 = vsyncpa [#allocation7], 0
    %s31 = scalar_lea.sflag [#allocation7], 1
    %32 = vsyncpa %s31, 0
    loop: start=0, step=1, limit=4
    $region2: #{tpu_custom_call.1} parent=1 // loop_pre_header
      _
    $region3: #{tpu_custom_call.1} parent=1 // loop_header
      %s34 = sphi 0, %s38
      %p35 = scmp.ge.s32.totalorder %s34, 4
      %s41 = sphi 0, %s53
      %s42 = sphi 0, %s49
      %s43 = sphi 0, %s41
      %s44 = sphi 0, %s42
      %s45 = sphi 0, %s43
      %s46 = sphi 0, %s44
      %s58 = sphi 0, %s60
      %s61 = sphi 0, %s58
      %s62 = sphi 0, %s61
      %s78 = sphi 0, %s62
      %s84 = sphi 0, %s86
      %s87 = sphi 0, %s84
      %s88 = sphi 0, %s87
      %s104 = sphi 0, %s88
      %s110 = sphi 0, %s112
      %s113 = sphi 0, %s110
      %s114 = sphi 0, %s113
      %s130 = sphi 0, %s114
      %s136 = sphi 0, %s138
      %s139 = sphi 0, %s136
      %s140 = sphi 0, %s139
      %s156 = sphi 0, %s140
      %s160 = sphi 0, %s160
      %s162 = sphi 0, %s160
      %s163 = sphi 0, %s162
      %s177 = sphi 0, %s163
      %s181 = sphi 0, %s181
      %s183 = sphi 0, %s181
      %s184 = sphi 0, %s183
      %s198 = sphi 0, %s184
      %s202 = sphi 0, %s202
      %s204 = sphi 0, %s202
      %s205 = sphi 0, %s204
      %s219 = sphi 0, %s205
      %s223 = sphi 0, %s223
      %s225 = sphi 0, %s223
      %s226 = sphi 0, %s225
      %s240 = sphi 0, %s226
      %s244 = sphi 0, %s244
      %s246 = sphi 0, %s244
      %s247 = sphi 0, %s246
      %s261 = sphi 0, %s247
      %s265 = sphi 0, %s265
      %s267 = sphi 0, %s265
      %s268 = sphi 0, %s267
      %s282 = sphi 0, %s268
      %s286 = sphi 0, %s286
      %s288 = sphi 0, %s286
      %s289 = sphi 0, %s288
      %s303 = sphi 0, %s289
      %s307 = sphi 0, %s307
      %s309 = sphi 0, %s307
      %s310 = sphi 0, %s309
      %s324 = sphi 0, %s310
      %s332 = sphi 0, %s334
      %s335 = sphi 0, %s332
      %s336 = sphi 0, %s335
      %s352 = sphi 0, %s336
    $region4: #{tpu_custom_call.1} parent=1 // loop_header_branch
      %37 = sbr.rel (%p35) target = $region8
    $region5: #{tpu_custom_call.1} parent=1 // loop_body
      %s39 = ssub.s32 %s34, 1
      %s40 = ssub.s32 %s34, 2
      %s47 = sadd.s32 1, %s42
      %p48 = scmp.ge.s32.totalorder %s47, 1
      %s49 = scalar_select %p48, 0, %s47
      %s50 = sadd.s32 1, %s41
      %s51 = scalar_select %p48, %s50, %s41
      %p52 = scmp.ge.s32.totalorder %s51, 2
      %s53 = scalar_select %p52, 0, %s51
      %s54 = ssub.s32 %s41, %s53
      %s55 = ssub.s32 %s42, %s49
      %s56 = sor.u32 %s54, %s55
      %p57 = scmp.eq.s32.totalorder %s56, 0
      %s59 = sadd.s32 %s58, 1
      %s60 = scalar_select %p57, %s58, %s59
      %p63 = pneg %p57
      %p64 = scmp.eq.s32.totalorder %s34, 1
      %p65 = por %p63, %p64
      %p66 = scmp.ne.s32.totalorder %s58, %s61
      %p67 = scmp.eq.s32.totalorder %s34, 0
      %p68 = por %p66, %p67
      %p69 = scmp.ne.s32.totalorder %s58, %s61
      %p70 = scmp.eq.s32.totalorder %s39, 1
      %p71 = por %p69, %p70
      %p72 = scmp.ne.s32.totalorder %s61, %s62
      %p73 = scmp.eq.s32.totalorder %s39, 0
      %p74 = por %p72, %p73
      %p75 = scmp.ne.s32.totalorder %s61, %s62
      %p76 = scmp.eq.s32.totalorder %s40, 1
      %p77 = por %p75, %p76
      %p79 = scmp.ne.s32.totalorder %s62, %s78
      %p80 = scmp.eq.s32.totalorder %s40, 0
      %p81 = por %p79, %p80
      %s82 = ssub.s32 %s41, %s53
      %p83 = scmp.eq.s32.totalorder %s82, 0
      %s85 = sadd.s32 %s84, 1
      %s86 = scalar_select %p83, %s84, %s85
      %p89 = pneg %p83
      %p90 = scmp.eq.s32.totalorder %s34, 1
      %p91 = por %p89, %p90
      %p92 = scmp.ne.s32.totalorder %s84, %s87
      %p93 = scmp.eq.s32.totalorder %s34, 0
      %p94 = por %p92, %p93
      %p95 = scmp.ne.s32.totalorder %s84, %s87
      %p96 = scmp.eq.s32.totalorder %s39, 1
      %p97 = por %p95, %p96
      %p98 = scmp.ne.s32.totalorder %s87, %s88
      %p99 = scmp.eq.s32.totalorder %s39, 0
      %p100 = por %p98, %p99
      %p101 = scmp.ne.s32.totalorder %s87, %s88
      %p102 = scmp.eq.s32.totalorder %s40, 1
      %p103 = por %p101, %p102
      %p105 = scmp.ne.s32.totalorder %s88, %s104
      %p106 = scmp.eq.s32.totalorder %s40, 0
      %p107 = por %p105, %p106
      %s108 = ssub.s32 %s41, %s53
      %p109 = scmp.eq.s32.totalorder %s108, 0
      %s111 = sadd.s32 %s110, 1
      %s112 = scalar_select %p109, %s110, %s111
      %p115 = pneg %p109
      %p116 = scmp.eq.s32.totalorder %s34, 1
      %p117 = por %p115, %p116
      %p118 = scmp.ne.s32.totalorder %s110, %s113
      %p119 = scmp.eq.s32.totalorder %s34, 0
      %p120 = por %p118, %p119
      %p121 = scmp.ne.s32.totalorder %s110, %s113
      %p122 = scmp.eq.s32.totalorder %s39, 1
      %p123 = por %p121, %p122
      %p124 = scmp.ne.s32.totalorder %s113, %s114
      %p125 = scmp.eq.s32.totalorder %s39, 0
      %p126 = por %p124, %p125
      %p127 = scmp.ne.s32.totalorder %s113, %s114
      %p128 = scmp.eq.s32.totalorder %s40, 1
      %p129 = por %p127, %p128
      %p131 = scmp.ne.s32.totalorder %s114, %s130
      %p132 = scmp.eq.s32.totalorder %s40, 0
      %p133 = por %p131, %p132
      %s134 = ssub.s32 %s41, %s53
      %p135 = scmp.eq.s32.totalorder %s134, 0
      %s137 = sadd.s32 %s136, 1
      %s138 = scalar_select %p135, %s136, %s137
      %p141 = pneg %p135
      %p142 = scmp.eq.s32.totalorder %s34, 1
      %p143 = por %p141, %p142
      %p144 = scmp.ne.s32.totalorder %s136, %s139
      %p145 = scmp.eq.s32.totalorder %s34, 0
      %p146 = por %p144, %p145
      %p147 = scmp.ne.s32.totalorder %s136, %s139
      %p148 = scmp.eq.s32.totalorder %s39, 1
      %p149 = por %p147, %p148
      %p150 = scmp.ne.s32.totalorder %s139, %s140
      %p151 = scmp.eq.s32.totalorder %s39, 0
      %p152 = por %p150, %p151
      %p153 = scmp.ne.s32.totalorder %s139, %s140
      %p154 = scmp.eq.s32.totalorder %s40, 1
      %p155 = por %p153, %p154
      %p157 = scmp.ne.s32.totalorder %s140, %s156
      %p158 = scmp.eq.s32.totalorder %s40, 0
      %p159 = por %p157, %p158
      %s161 = sadd.s32 %s160, 1
      %p164 = scmp.eq.s32.totalorder %s34, 1
      %p165 = scmp.ne.s32.totalorder %s160, %s162
      %p166 = scmp.eq.s32.totalorder %s34, 0
      %p167 = por %p165, %p166
      %p168 = scmp.ne.s32.totalorder %s160, %s162
      %p169 = scmp.eq.s32.totalorder %s39, 1
      %p170 = por %p168, %p169
      %p171 = scmp.ne.s32.totalorder %s162, %s163
      %p172 = scmp.eq.s32.totalorder %s39, 0
      %p173 = por %p171, %p172
      %p174 = scmp.ne.s32.totalorder %s162, %s163
      %p175 = scmp.eq.s32.totalorder %s40, 1
      %p176 = por %p174, %p175
      %p178 = scmp.ne.s32.totalorder %s163, %s177
      %p179 = scmp.eq.s32.totalorder %s40, 0
      %p180 = por %p178, %p179
      %s182 = sadd.s32 %s181, 1
      %p185 = scmp.eq.s32.totalorder %s34, 1
      %p186 = scmp.ne.s32.totalorder %s181, %s183
      %p187 = scmp.eq.s32.totalorder %s34, 0
      %p188 = por %p186, %p187
      %p189 = scmp.ne.s32.totalorder %s181, %s183
      %p190 = scmp.eq.s32.totalorder %s39, 1
      %p191 = por %p189, %p190
      %p192 = scmp.ne.s32.totalorder %s183, %s184
      %p193 = scmp.eq.s32.totalorder %s39, 0
      %p194 = por %p192, %p193
      %p195 = scmp.ne.s32.totalorder %s183, %s184
      %p196 = scmp.eq.s32.totalorder %s40, 1
      %p197 = por %p195, %p196
      %p199 = scmp.ne.s32.totalorder %s184, %s198
      %p200 = scmp.eq.s32.totalorder %s40, 0
      %p201 = por %p199, %p200
      %s203 = sadd.s32 %s202, 1
      %p206 = scmp.eq.s32.totalorder %s34, 1
      %p207 = scmp.ne.s32.totalorder %s202, %s204
      %p208 = scmp.eq.s32.totalorder %s34, 0
      %p209 = por %p207, %p208
      %p210 = scmp.ne.s32.totalorder %s202, %s204
      %p211 = scmp.eq.s32.totalorder %s39, 1
      %p212 = por %p210, %p211
      %p213 = scmp.ne.s32.totalorder %s204, %s205
      %p214 = scmp.eq.s32.totalorder %s39, 0
      %p215 = por %p213, %p214
      %p216 = scmp.ne.s32.totalorder %s204, %s205
      %p217 = scmp.eq.s32.totalorder %s40, 1
      %p218 = por %p216, %p217
      %p220 = scmp.ne.s32.totalorder %s205, %s219
      %p221 = scmp.eq.s32.totalorder %s40, 0
      %p222 = por %p220, %p221
      %s224 = sadd.s32 %s223, 1
      %p227 = scmp.eq.s32.totalorder %s34, 1
      %p228 = scmp.ne.s32.totalorder %s223, %s225
      %p229 = scmp.eq.s32.totalorder %s34, 0
      %p230 = por %p228, %p229
      %p231 = scmp.ne.s32.totalorder %s223, %s225
      %p232 = scmp.eq.s32.totalorder %s39, 1
      %p233 = por %p231, %p232
      %p234 = scmp.ne.s32.totalorder %s225, %s226
      %p235 = scmp.eq.s32.totalorder %s39, 0
      %p236 = por %p234, %p235
      %p237 = scmp.ne.s32.totalorder %s225, %s226
      %p238 = scmp.eq.s32.totalorder %s40, 1
      %p239 = por %p237, %p238
      %p241 = scmp.ne.s32.totalorder %s226, %s240
      %p242 = scmp.eq.s32.totalorder %s40, 0
      %p243 = por %p241, %p242
      %s245 = sadd.s32 %s244, 1
      %p248 = scmp.eq.s32.totalorder %s34, 1
      %p249 = scmp.ne.s32.totalorder %s244, %s246
      %p250 = scmp.eq.s32.totalorder %s34, 0
      %p251 = por %p249, %p250
      %p252 = scmp.ne.s32.totalorder %s244, %s246
      %p253 = scmp.eq.s32.totalorder %s39, 1
      %p254 = por %p252, %p253
      %p255 = scmp.ne.s32.totalorder %s246, %s247
      %p256 = scmp.eq.s32.totalorder %s39, 0
      %p257 = por %p255, %p256
      %p258 = scmp.ne.s32.totalorder %s246, %s247
      %p259 = scmp.eq.s32.totalorder %s40, 1
      %p260 = por %p258, %p259
      %p262 = scmp.ne.s32.totalorder %s247, %s261
      %p263 = scmp.eq.s32.totalorder %s40, 0
      %p264 = por %p262, %p263
      %s266 = sadd.s32 %s265, 1
      %p269 = scmp.eq.s32.totalorder %s34, 1
      %p270 = scmp.ne.s32.totalorder %s265, %s267
      %p271 = scmp.eq.s32.totalorder %s34, 0
      %p272 = por %p270, %p271
      %p273 = scmp.ne.s32.totalorder %s265, %s267
      %p274 = scmp.eq.s32.totalorder %s39, 1
      %p275 = por %p273, %p274
      %p276 = scmp.ne.s32.totalorder %s267, %s268
      %p277 = scmp.eq.s32.totalorder %s39, 0
      %p278 = por %p276, %p277
      %p279 = scmp.ne.s32.totalorder %s267, %s268
      %p280 = scmp.eq.s32.totalorder %s40, 1
      %p281 = por %p279, %p280
      %p283 = scmp.ne.s32.totalorder %s268, %s282
      %p284 = scmp.eq.s32.totalorder %s40, 0
      %p285 = por %p283, %p284
      %s287 = sadd.s32 %s286, 1
      %p290 = scmp.eq.s32.totalorder %s34, 1
      %p291 = scmp.ne.s32.totalorder %s286, %s288
      %p292 = scmp.eq.s32.totalorder %s34, 0
      %p293 = por %p291, %p292
      %p294 = scmp.ne.s32.totalorder %s286, %s288
      %p295 = scmp.eq.s32.totalorder %s39, 1
      %p296 = por %p294, %p295
      %p297 = scmp.ne.s32.totalorder %s288, %s289
      %p298 = scmp.eq.s32.totalorder %s39, 0
      %p299 = por %p297, %p298
      %p300 = scmp.ne.s32.totalorder %s288, %s289
      %p301 = scmp.eq.s32.totalorder %s40, 1
      %p302 = por %p300, %p301
      %p304 = scmp.ne.s32.totalorder %s289, %s303
      %p305 = scmp.eq.s32.totalorder %s40, 0
      %p306 = por %p304, %p305
      %s308 = sadd.s32 %s307, 1
      %p311 = scmp.eq.s32.totalorder %s34, 1
      %p312 = scmp.ne.s32.totalorder %s307, %s309
      %p313 = scmp.eq.s32.totalorder %s34, 0
      %p314 = por %p312, %p313
      %p315 = scmp.ne.s32.totalorder %s307, %s309
      %p316 = scmp.eq.s32.totalorder %s39, 1
      %p317 = por %p315, %p316
      %p318 = scmp.ne.s32.totalorder %s309, %s310
      %p319 = scmp.eq.s32.totalorder %s39, 0
      %p320 = por %p318, %p319
      %p321 = scmp.ne.s32.totalorder %s309, %s310
      %p322 = scmp.eq.s32.totalorder %s40, 1
      %p323 = por %p321, %p322
      %p325 = scmp.ne.s32.totalorder %s310, %s324
      %p326 = scmp.eq.s32.totalorder %s40, 0
      %p327 = por %p325, %p326
      %s328 = ssub.s32 %s41, %s53
      %s329 = ssub.s32 %s42, %s49
      %s330 = sor.u32 %s328, %s329
      %p331 = scmp.eq.s32.totalorder %s330, 0
      %s333 = sadd.s32 %s332, 1
      %s334 = scalar_select %p331, %s332, %s333
      %p337 = pneg %p331
      %p338 = scmp.eq.s32.totalorder %s34, 1
      %p339 = por %p337, %p338
      %p340 = scmp.ne.s32.totalorder %s332, %s335
      %p341 = scmp.eq.s32.totalorder %s34, 0
      %p342 = por %p340, %p341
      %p343 = scmp.ne.s32.totalorder %s332, %s335
      %p344 = scmp.eq.s32.totalorder %s39, 1
      %p345 = por %p343, %p344
      %p346 = scmp.ne.s32.totalorder %s335, %s336
      %p347 = scmp.eq.s32.totalorder %s39, 0
      %p348 = por %p346, %p347
      %p349 = scmp.ne.s32.totalorder %s335, %s336
      %p350 = scmp.eq.s32.totalorder %s40, 1
      %p351 = por %p349, %p350
      %p353 = scmp.ne.s32.totalorder %s336, %s352
      %p354 = scmp.eq.s32.totalorder %s40, 0
      %p355 = por %p353, %p354
      %p356 = scmp.le.s32.totalorder 1, %s34
      %p357 = scmp.lt.s32.totalorder %s34, 3
      %p358 = pnand %p356, %p357
      %p359 = pneg %p358
      // Predicated region
      $region9: #{tpu_custom_call.1} parent=5 // pred_check
        _
      $region10: #{tpu_custom_call.1} parent=5 // pred_check_branch
        %361 = sbr.rel (%p358) target = $region12
      $region11: #{tpu_custom_call.1} parent=5 // pred_region
        %s362 = ssub.s32 %s34, 1
        // Predicated region
        $region13: #{tpu_custom_call.1} parent=11 // pred_check
          %p363 = pneg %p173
        $region14: #{tpu_custom_call.1} parent=11 // pred_check_branch
          %365 = sbr.rel (%p363) target = $region16
        $region15: #{tpu_custom_call.1} parent=11 // pred_region
          %s367 = ssub.s32 512, 512
          %368 = vsyncadd [#allocation12], %s367
          %s369 = sshll.u32 [#allocation13], 4
          %s370 = int_to_ptr.vmem [resolvable:$true] %s369
          %375 = dma.hbm_to_vmem [thread:$0]  %s4, 512, %s370, [#allocation12], 128, 128, 8
        $region16: #{tpu_custom_call.1} parent=11 // pred_fallthru
          _
        // Predicated region
        $region17: #{tpu_custom_call.1} parent=11 // pred_check
          %p376 = pneg %p194
        $region18: #{tpu_custom_call.1} parent=11 // pred_check_branch
          %378 = sbr.rel (%p376) target = $region20
        $region19: #{tpu_custom_call.1} parent=11 // pred_region
          %s380 = ssub.s32 16, 16
          %381 = vsyncadd [#allocation15], %s380
          %s383 = sshll.u32 [#allocation14], 4
          %s384 = int_to_ptr.vmem [resolvable:$true] %s383
          %386 = dma.hbm_to_vmem [thread:$0]  %s5, 16, %s384, [#allocation15]
        $region20: #{tpu_custom_call.1} parent=11 // pred_fallthru
          _
        // Predicated region
        $region21: #{tpu_custom_call.1} parent=11 // pred_check
          %p387 = pneg %p215
        $region22: #{tpu_custom_call.1} parent=11 // pred_check_branch
          %389 = sbr.rel (%p387) target = $region24
        $region23: #{tpu_custom_call.1} parent=11 // pred_region
          %s391 = ssub.s32 512, 512
          %392 = vsyncadd [#allocation15], %s391
          %s393 = sshll.u32 [#allocation16], 4
          %s394 = int_to_ptr.vmem [resolvable:$true] %s393
          %399 = dma.hbm_to_vmem [thread:$0]  %s6, 512, %s394, [#allocation15], 128, 128, 8
        $region24: #{tpu_custom_call.1} parent=11 // pred_fallthru
          _
        // Predicated region
        $region25: #{tpu_custom_call.1} parent=11 // pred_check
          %p400 = pneg %p236
        $region26: #{tpu_custom_call.1} parent=11 // pred_check_branch
          %402 = sbr.rel (%p400) target = $region28
        $region27: #{tpu_custom_call.1} parent=11 // pred_region
          %s404 = ssub.s32 16, 16
          %405 = vsyncadd [#allocation18], %s404
          %s407 = sshll.u32 [#allocation17], 4
          %s408 = int_to_ptr.vmem [resolvable:$true] %s407
          %410 = dma.hbm_to_vmem [thread:$0]  %s7, 16, %s408, [#allocation18]
        $region28: #{tpu_custom_call.1} parent=11 // pred_fallthru
          _
        // Predicated region
        $region29: #{tpu_custom_call.1} parent=11 // pred_check
          %p411 = pneg %p257
        $region30: #{tpu_custom_call.1} parent=11 // pred_check_branch
          %413 = sbr.rel (%p411) target = $region32
        $region31: #{tpu_custom_call.1} parent=11 // pred_region
          %s415 = ssub.s32 512, 512
          %416 = vsyncadd [#allocation18], %s415
          %s417 = sshll.u32 [#allocation19], 4
          %s418 = int_to_ptr.vmem [resolvable:$true] %s417
          %423 = dma.hbm_to_vmem [thread:$0]  %s8, 512, %s418, [#allocation18], 128, 128, 8
        $region32: #{tpu_custom_call.1} parent=11 // pred_fallthru
          _
        // Predicated region
        $region33: #{tpu_custom_call.1} parent=11 // pred_check
          %p424 = pneg %p278
        $region34: #{tpu_custom_call.1} parent=11 // pred_check_branch
          %426 = sbr.rel (%p424) target = $region36
        $region35: #{tpu_custom_call.1} parent=11 // pred_region
          %s428 = ssub.s32 16, 16
          %429 = vsyncadd [#allocation21], %s428
          %s431 = sshll.u32 [#allocation20], 4
          %s432 = int_to_ptr.vmem [resolvable:$true] %s431
          %434 = dma.hbm_to_vmem [thread:$0]  %s9, 16, %s432, [#allocation21]
        $region36: #{tpu_custom_call.1} parent=11 // pred_fallthru
          _
        // Predicated region
        $region37: #{tpu_custom_call.1} parent=11 // pred_check
          %p435 = pneg %p299
        $region38: #{tpu_custom_call.1} parent=11 // pred_check_branch
          %437 = sbr.rel (%p435) target = $region40
        $region39: #{tpu_custom_call.1} parent=11 // pred_region
          %s439 = ssub.s32 512, 512
          %440 = vsyncadd [#allocation21], %s439
          %s441 = sshll.u32 [#allocation22], 4
          %s442 = int_to_ptr.vmem [resolvable:$true] %s441
          %447 = dma.hbm_to_vmem [thread:$0]  %s10, 512, %s442, [#allocation21], 128, 128, 8
        $region40: #{tpu_custom_call.1} parent=11 // pred_fallthru
          _
        // Predicated region
        $region41: #{tpu_custom_call.1} parent=11 // pred_check
          %p448 = pneg %p320
        $region42: #{tpu_custom_call.1} parent=11 // pred_check_branch
          %450 = sbr.rel (%p448) target = $region44
        $region43: #{tpu_custom_call.1} parent=11 // pred_region
          %s452 = ssub.s32 16, 16
          %453 = vsyncadd [#allocation24], %s452
          %s455 = sshll.u32 [#allocation23], 4
          %s456 = int_to_ptr.vmem [resolvable:$true] %s455
          %458 = dma.hbm_to_vmem [thread:$0]  %s11, 16, %s456, [#allocation24]
        $region44: #{tpu_custom_call.1} parent=11 // pred_fallthru
          _
      $region12: #{tpu_custom_call.1} parent=5 // pred_fallthru
        _
      %p459 = scmp.lt.s32.totalorder %s34, 2
      // Predicated region
      $region45: #{tpu_custom_call.1} parent=5 // pred_check
        %p460 = pneg %p459
      $region46: #{tpu_custom_call.1} parent=5 // pred_check_branch
        %462 = sbr.rel (%p460) target = $region48
      $region47: #{tpu_custom_call.1} parent=5 // pred_region
        // Predicated region
        $region49: #{tpu_custom_call.1} parent=47 // pred_check
          %p463 = pneg %p68
        $region50: #{tpu_custom_call.1} parent=47 // pred_check_branch
          %465 = sbr.rel (%p463) target = $region52
        $region51: #{tpu_custom_call.1} parent=47 // pred_region
          %s466 = sand.u32 %s58, 1
          %s467 = scalar_lea.sflag [#allocation6], %s466
          %s468 = sand.u32 %s58, 1
          %s469 = smul.addr %s468, 8
          %s470 = scalar_lea.vmem [#allocation5], %s469
          %s472 = ssub.s32 128, 128
          %473 = vsyncadd %s467, %s472
          %s474 = sadd.s32 %s42, %s41
          %s475 = smul.addr %s474, 128
          %s476 = scalar_lea.hbm %s0, %s475
          %s478 = sshll.u32 %s470, 4
          %s479 = int_to_ptr.vmem [resolvable:$true] %s478
          %481 = dma.hbm_to_vmem [thread:$0]  %s476, 128, %s479, %s467
        $region52: #{tpu_custom_call.1} parent=47 // pred_fallthru
          _
        // Predicated region
        $region53: #{tpu_custom_call.1} parent=47 // pred_check
          %p482 = pneg %p94
        $region54: #{tpu_custom_call.1} parent=47 // pred_check_branch
          %484 = sbr.rel (%p482) target = $region56
        $region55: #{tpu_custom_call.1} parent=47 // pred_region
          %s485 = sand.u32 %s34, 1
          %s486 = scalar_lea.sflag [#allocation9], %s485
          %s487 = sand.u32 %s84, 1
          %s488 = smul.addr %s487, 8
          %s489 = scalar_lea.vmem [#allocation8], %s488
          %s491 = ssub.s32 128, 128
          %492 = vsyncadd %s486, %s491
          %s493 = smul.addr %s41, 128
          %s494 = scalar_lea.hbm %s1, %s493
          %s496 = sshll.u32 %s489, 4
          %s497 = int_to_ptr.vmem [resolvable:$true] %s496
          %499 = dma.hbm_to_vmem [thread:$0]  %s494, 128, %s497, %s486
        $region56: #{tpu_custom_call.1} parent=47 // pred_fallthru
          _
        // Predicated region
        $region57: #{tpu_custom_call.1} parent=47 // pred_check
          %p500 = pneg %p120
        $region58: #{tpu_custom_call.1} parent=47 // pred_check_branch
          %502 = sbr.rel (%p500) target = $region60
        $region59: #{tpu_custom_call.1} parent=47 // pred_region
          %s503 = sand.u32 %s34, 1
          %s504 = scalar_lea.sflag [#allocation9], %s503
          %s505 = sand.u32 %s110, 1
          %s506 = smul.addr %s505, 8
          %s507 = scalar_lea.vmem [#allocation10], %s506
          %s509 = ssub.s32 128, 128
          %510 = vsyncadd %s504, %s509
          %s511 = smul.addr %s41, 128
          %s512 = scalar_lea.hbm %s2, %s511
          %s514 = sshll.u32 %s507, 4
          %s515 = int_to_ptr.vmem [resolvable:$true] %s514
          %517 = dma.hbm_to_vmem [thread:$0]  %s512, 128, %s515, %s504
        $region60: #{tpu_custom_call.1} parent=47 // pred_fallthru
          _
        // Predicated region
        $region61: #{tpu_custom_call.1} parent=47 // pred_check
          %p518 = pneg %p146
        $region62: #{tpu_custom_call.1} parent=47 // pred_check_branch
          %520 = sbr.rel (%p518) target = $region64
        $region63: #{tpu_custom_call.1} parent=47 // pred_region
          %s521 = sand.u32 %s34, 1
          %s522 = scalar_lea.sflag [#allocation12], %s521
          %s523 = sand.u32 %s136, 1
          %s524 = scalar_lea.vmem [#allocation11], %s523
          %s526 = ssub.s32 16, 16
          %527 = vsyncadd %s522, %s526
          %s528 = smul.addr %s41, 16
          %s529 = scalar_lea.hbm %s3, %s528
          %s531 = sshll.u32 %s524, 4
          %s532 = int_to_ptr.vmem [resolvable:$true] %s531
          %534 = dma.hbm_to_vmem [thread:$0]  %s529, 16, %s532, %s522
        $region64: #{tpu_custom_call.1} parent=47 // pred_fallthru
          _
      $region48: #{tpu_custom_call.1} parent=5 // pred_fallthru
        _
      %p535 = scmp.le.s32.totalorder 1, %s34
      %p536 = scmp.lt.s32.totalorder %s34, 3
      %p537 = pnand %p535, %p536
      %p538 = pneg %p537
      // Predicated region
      $region65: #{tpu_custom_call.1} parent=5 // pred_check
        _
      $region66: #{tpu_custom_call.1} parent=5 // pred_check_branch
        %540 = sbr.rel (%p537) target = $region68
      $region67: #{tpu_custom_call.1} parent=5 // pred_region
        %s541 = ssub.s32 %s34, 1
        %s542 = sand.u32 %s61, 1
        %s543 = scalar_lea.sflag [#allocation6], %s542
        %s544 = sand.u32 %s61, 1
        %s545 = smul.addr %s544, 8
        %s546 = scalar_lea.vmem [#allocation5], %s545
        // Predicated region
        $region69: #{tpu_custom_call.1} parent=67 // pred_check
          %p547 = pneg %p74
        $region70: #{tpu_custom_call.1} parent=67 // pred_check_branch
          %549 = sbr.rel (%p547) target = $region72
        $region71: #{tpu_custom_call.1} parent=67 // pred_region
          %550 = dma.done %s543, 128
        $region72: #{tpu_custom_call.1} parent=67 // pred_fallthru
          _
        %s551 = sand.u32 %s39, 1
        %s552 = scalar_lea.sflag [#allocation9], %s551
        %s553 = sand.u32 %s87, 1
        %s554 = smul.addr %s553, 8
        %s555 = scalar_lea.vmem [#allocation8], %s554
        // Predicated region
        $region73: #{tpu_custom_call.1} parent=67 // pred_check
          %p556 = pneg %p100
        $region74: #{tpu_custom_call.1} parent=67 // pred_check_branch
          %558 = sbr.rel (%p556) target = $region76
        $region75: #{tpu_custom_call.1} parent=67 // pred_region
          %559 = dma.done %s552, 128
        $region76: #{tpu_custom_call.1} parent=67 // pred_fallthru
          _
        %s560 = sand.u32 %s39, 1
        %s561 = scalar_lea.sflag [#allocation9], %s560
        %s562 = sand.u32 %s113, 1
        %s563 = smul.addr %s562, 8
        %s564 = scalar_lea.vmem [#allocation10], %s563
        // Predicated region
        $region77: #{tpu_custom_call.1} parent=67 // pred_check
          %p565 = pneg %p126
        $region78: #{tpu_custom_call.1} parent=67 // pred_check_branch
          %567 = sbr.rel (%p565) target = $region80
        $region79: #{tpu_custom_call.1} parent=67 // pred_region
          %568 = dma.done %s561, 128
        $region80: #{tpu_custom_call.1} parent=67 // pred_fallthru
          _
        %s569 = sand.u32 %s39, 1
        %s570 = scalar_lea.sflag [#allocation12], %s569
        %s571 = sand.u32 %s139, 1
        %s572 = scalar_lea.vmem [#allocation11], %s571
        // Predicated region
        $region81: #{tpu_custom_call.1} parent=67 // pred_check
          %p573 = pneg %p152
        $region82: #{tpu_custom_call.1} parent=67 // pred_check_branch
          %575 = sbr.rel (%p573) target = $region84
        $region83: #{tpu_custom_call.1} parent=67 // pred_region
          %576 = dma.done %s570, 16
        $region84: #{tpu_custom_call.1} parent=67 // pred_fallthru
          _
        // Predicated region
        $region85: #{tpu_custom_call.1} parent=67 // pred_check
          %p577 = pneg %p173
        $region86: #{tpu_custom_call.1} parent=67 // pred_check_branch
          %579 = sbr.rel (%p577) target = $region88
        $region87: #{tpu_custom_call.1} parent=67 // pred_region
          %580 = dma.done [#allocation12], 512
        $region88: #{tpu_custom_call.1} parent=67 // pred_fallthru
          _
        // Predicated region
        $region89: #{tpu_custom_call.1} parent=67 // pred_check
          %p581 = pneg %p194
        $region90: #{tpu_custom_call.1} parent=67 // pred_check_branch
          %583 = sbr.rel (%p581) target = $region92
        $region91: #{tpu_custom_call.1} parent=67 // pred_region
          %584 = dma.done [#allocation15], 16
        $region92: #{tpu_custom_call.1} parent=67 // pred_fallthru
          _
        // Predicated region
        $region93: #{tpu_custom_call.1} parent=67 // pred_check
          %p585 = pneg %p215
        $region94: #{tpu_custom_call.1} parent=67 // pred_check_branch
          %587 = sbr.rel (%p585) target = $region96
        $region95: #{tpu_custom_call.1} parent=67 // pred_region
          %588 = dma.done [#allocation15], 512
        $region96: #{tpu_custom_call.1} parent=67 // pred_fallthru
          _
        // Predicated region
        $region97: #{tpu_custom_call.1} parent=67 // pred_check
          %p589 = pneg %p236
        $region98: #{tpu_custom_call.1} parent=67 // pred_check_branch
          %591 = sbr.rel (%p589) target = $region100
        $region99: #{tpu_custom_call.1} parent=67 // pred_region
          %592 = dma.done [#allocation18], 16
        $region100: #{tpu_custom_call.1} parent=67 // pred_fallthru
          _
        // Predicated region
        $region101: #{tpu_custom_call.1} parent=67 // pred_check
          %p593 = pneg %p257
        $region102: #{tpu_custom_call.1} parent=67 // pred_check_branch
          %595 = sbr.rel (%p593) target = $region104
        $region103: #{tpu_custom_call.1} parent=67 // pred_region
          %596 = dma.done [#allocation18], 512
        $region104: #{tpu_custom_call.1} parent=67 // pred_fallthru
          _
        // Predicated region
        $region105: #{tpu_custom_call.1} parent=67 // pred_check
          %p597 = pneg %p278
        $region106: #{tpu_custom_call.1} parent=67 // pred_check_branch
          %599 = sbr.rel (%p597) target = $region108
        $region107: #{tpu_custom_call.1} parent=67 // pred_region
          %600 = dma.done [#allocation21], 16
        $region108: #{tpu_custom_call.1} parent=67 // pred_fallthru
          _
        // Predicated region
        $region109: #{tpu_custom_call.1} parent=67 // pred_check
          %p601 = pneg %p299
        $region110: #{tpu_custom_call.1} parent=67 // pred_check_branch
          %603 = sbr.rel (%p601) target = $region112
        $region111: #{tpu_custom_call.1} parent=67 // pred_region
          %604 = dma.done [#allocation21], 512
        $region112: #{tpu_custom_call.1} parent=67 // pred_fallthru
          _
        // Predicated region
        $region113: #{tpu_custom_call.1} parent=67 // pred_check
          %p605 = pneg %p320
        $region114: #{tpu_custom_call.1} parent=67 // pred_check_branch
          %607 = sbr.rel (%p605) target = $region116
        $region115: #{tpu_custom_call.1} parent=67 // pred_region
          %608 = dma.done [#allocation24], 16
        $region116: #{tpu_custom_call.1} parent=67 // pred_fallthru
          _
        %s609 = sand.u32 %s61, 1
        %s610 = scalar_lea.sflag [#allocation6], %s609
        %s611 = sand.u32 %s61, 1
        %s612 = smul.addr %s611, 8
        %s613 = scalar_lea.vmem [#allocation5], %s612
        %p614 = pneg %p74
        %p615 = pneg %p71
        %s616 = sand.u32 %s39, 1
        %s617 = scalar_lea.sflag [#allocation9], %s616
        %s618 = sand.u32 %s87, 1
        %s619 = smul.addr %s618, 8
        %s620 = scalar_lea.vmem [#allocation8], %s619
        %p621 = pneg %p100
        %p622 = pneg %p97
        %s623 = sand.u32 %s39, 1
        %s624 = scalar_lea.sflag [#allocation9], %s623
        %s625 = sand.u32 %s113, 1
        %s626 = smul.addr %s625, 8
        %s627 = scalar_lea.vmem [#allocation10], %s626
        %p628 = pneg %p126
        %p629 = pneg %p123
        %s630 = sand.u32 %s39, 1
        %s631 = scalar_lea.sflag [#allocation12], %s630
        %s632 = sand.u32 %s139, 1
        %s633 = scalar_lea.vmem [#allocation11], %s632
        %p634 = pneg %p152
        %p635 = pneg %p149
        %p636 = pneg %p173
        %p637 = pneg %p170
        %p638 = pneg %p194
        %p639 = pneg %p191
        %p640 = pneg %p215
        %p641 = pneg %p212
        %p642 = pneg %p236
        %p643 = pneg %p233
        %p644 = pneg %p257
        %p645 = pneg %p254
        %p646 = pneg %p278
        %p647 = pneg %p275
        %p648 = pneg %p299
        %p649 = pneg %p296
        %p650 = pneg %p320
        %p651 = pneg %p317
        %p652 = pneg %p348
        %p653 = pneg %p345
        %s654 = sand.u32 %s335, 1
        %s655 = scalar_lea.sflag [#allocation7], %s654
        %s656 = sand.u32 %s335, 1
        %s657 = smul.addr %s656, 8
        %s658 = scalar_lea.vmem [#allocation25], %s657
        %p659 = scmp.eq.s32.totalorder %s44, 0
        // Predicated region
        $region117: #{tpu_custom_call.1} parent=67 // pred_check
          %p660 = pneg %p659
        $region118: #{tpu_custom_call.1} parent=67 // pred_check_branch
          %662 = sbr.rel (%p660) target = $region120
        $region119: #{tpu_custom_call.1} parent=67 // pred_region
          %v663 = vld [vmem:[%s555] sm:$0xff]
          %v664 = vld [vmem:[#allocation16] sm:$0xff]
          %v665 = vld [vmem:[#allocation16 + $0x8] sm:$0xff]
          %v666 = vld [vmem:[#allocation16 + $0x10] sm:$0xff]
          %v667 = vld [vmem:[#allocation16 + $0x18] sm:$0xff]
          %v668 = vld [vmem:[#allocation17] sm:$0x1]
          %v670 = vlaneseq
          %v671 = vshrl.u32 %v670, 7
          %v672 = vsub.s32 0, %v671
          %v673 = vrot.slane %v668, %v672
          %vm675 = vcmask 261120
          %v677 = vsel %vm675, %v663, 0
          %679 = vmatprep.subr.mxu0 0.0
          %680 = vmatpush1.msra.mxu0 %v664
          %681 = vmatprep.subr.mxu0 0.0
          %682 = vmatpush1.msra.mxu0 %v665
          %683 = vmatprep.subr.mxu0 0.0
          %684 = vmatpush1.msra.mxu0 %v666
          %685 = vmatprep.subr.mxu0 0.0
          %686 = vmatpush1.msra.mxu0 %v667
          %687 = vmatprep.subr.mxu0 0.0
          %688 = vmatpush1.msra.mxu0 0.0
          %689 = vmatprep.subr.mxu0 0.0
          %690 = vmatpush1.msra.mxu0 0.0
          %691 = vmatprep.subr.mxu0 0.0
          %692 = vmatpush1.msra.mxu0 0.0
          %693 = vmatprep.subr.mxu0 0.0
          %694 = vmatpush1.msra.mxu0 0.0
          %695 = vmatprep.subr.mxu0 0.0
          %696 = vmatpush1.msra.mxu0 0.0
          %697 = vmatprep.subr.mxu0 0.0
          %698 = vmatpush1.msra.mxu0 0.0
          %699 = vmatprep.subr.mxu0 0.0
          %700 = vmatpush1.msra.mxu0 0.0
          %701 = vmatprep.subr.mxu0 0.0
          %702 = vmatpush1.msra.mxu0 0.0
          %703 = vmatprep.subr.mxu0 0.0
          %704 = vmatpush1.msra.mxu0 0.0
          %705 = vmatprep.subr.mxu0 0.0
          %706 = vmatpush1.msra.mxu0 0.0
          %707 = vmatprep.subr.mxu0 0.0
          %708 = vmatpush1.msra.mxu0 0.0
          %709 = vmatprep.subr.mxu0 0.0
          %710 = vmatpush1.msra.mxu0 0.0
          %711 = vmatprep.subr.mxu0 0.0
          %712 = vmatpush1.msra.mxu0 0.0
          %713 = vmatprep.subr.mxu0 0.0
          %714 = vmatpush1.msra.mxu0 0.0
          %715 = vmatprep.subr.mxu0 0.0
          %716 = vmatpush1.msra.mxu0 0.0
          %717 = vmatprep.subr.mxu0 0.0
          %718 = vmatpush1.msra.mxu0 0.0
          %719 = vmatprep.subr.mxu0 0.0
          %720 = vmatpush1.msra.mxu0 0.0
          %721 = vmatprep.subr.mxu0 0.0
          %722 = vmatpush1.msra.mxu0 0.0
          %723 = vmatprep.subr.mxu0 0.0
          %724 = vmatpush1.msra.mxu0 0.0
          %725 = vmatprep.subr.mxu0 0.0
          %726 = vmatpush1.msra.mxu0 0.0
          %727 = vmatprep.subr.mxu0 0.0
          %728 = vmatpush1.msra.mxu0 0.0
          %729 = vmatprep.subr.mxu0 0.0
          %730 = vmatpush1.msra.mxu0 0.0
          %731 = vmatprep.subr.mxu0 0.0
          %732 = vmatpush1.msra.mxu0 0.0
          %733 = vmatprep.subr.mxu0 0.0
          %734 = vmatpush1.msra.mxu0 0.0
          %735 = vmatprep.subr.mxu0 0.0
          %736 = vmatpush1.msra.mxu0 0.0
          %737 = vmatprep.subr.mxu0 0.0
          %738 = vmatpush1.msra.mxu0 0.0
          %739 = vmatprep.subr.mxu0 0.0
          %740 = vmatpush1.msra.mxu0 0.0
          %741 = vmatprep.subr.mxu0 0.0
          %742 = vmatpush1.msra.mxu0 0.0
          %743 = vmatprep.mubr.f32.mxu0 0.0
          %744 = vmatmul.mubr.f32.gmra.mrb[0].mxu0 %v677
          %v745 = vpop.f32.mrb[0].mxu0
          %v746 = vadd.f32 %v673, %v745
          %v747 = vpop.f32.mrb[0].mxu0
          %748 = vdwg.mxu0
          %v749 = vld [vmem:[%s564] sm:$0xff]
          %v750 = vld [vmem:[#allocation19] sm:$0xff]
          %v751 = vld [vmem:[#allocation19 + $0x8] sm:$0xff]
          %v752 = vld [vmem:[#allocation19 + $0x10] sm:$0xff]
          %v753 = vld [vmem:[#allocation19 + $0x18] sm:$0xff]
          %v754 = vld [vmem:[#allocation20] sm:$0x1]
          %v756 = vlaneseq
          %v757 = vshrl.u32 %v756, 7
          %v758 = vsub.s32 0, %v757
          %v759 = vrot.slane %v754, %v758
          %v762 = vsel %vm675, %v749, 0
          %764 = vmatprep.subr.mxu0 0.0
          %765 = vmatpush1.msra.mxu0 %v750
          %766 = vmatprep.subr.mxu0 0.0
          %767 = vmatpush1.msra.mxu0 %v751
          %768 = vmatprep.subr.mxu0 0.0
          %769 = vmatpush1.msra.mxu0 %v752
          %770 = vmatprep.subr.mxu0 0.0
          %771 = vmatpush1.msra.mxu0 %v753
          %772 = vmatprep.subr.mxu0 0.0
          %773 = vmatpush1.msra.mxu0 0.0
          %774 = vmatprep.subr.mxu0 0.0
          %775 = vmatpush1.msra.mxu0 0.0
          %776 = vmatprep.subr.mxu0 0.0
          %777 = vmatpush1.msra.mxu0 0.0
          %778 = vmatprep.subr.mxu0 0.0
          %779 = vmatpush1.msra.mxu0 0.0
          %780 = vmatprep.subr.mxu0 0.0
          %781 = vmatpush1.msra.mxu0 0.0
          %782 = vmatprep.subr.mxu0 0.0
          %783 = vmatpush1.msra.mxu0 0.0
          %784 = vmatprep.subr.mxu0 0.0
          %785 = vmatpush1.msra.mxu0 0.0
          %786 = vmatprep.subr.mxu0 0.0
          %787 = vmatpush1.msra.mxu0 0.0
          %788 = vmatprep.subr.mxu0 0.0
          %789 = vmatpush1.msra.mxu0 0.0
          %790 = vmatprep.subr.mxu0 0.0
          %791 = vmatpush1.msra.mxu0 0.0
          %792 = vmatprep.subr.mxu0 0.0
          %793 = vmatpush1.msra.mxu0 0.0
          %794 = vmatprep.subr.mxu0 0.0
          %795 = vmatpush1.msra.mxu0 0.0
          %796 = vmatprep.subr.mxu0 0.0
          %797 = vmatpush1.msra.mxu0 0.0
          %798 = vmatprep.subr.mxu0 0.0
          %799 = vmatpush1.msra.mxu0 0.0
          %800 = vmatprep.subr.mxu0 0.0
          %801 = vmatpush1.msra.mxu0 0.0
          %802 = vmatprep.subr.mxu0 0.0
          %803 = vmatpush1.msra.mxu0 0.0
          %804 = vmatprep.subr.mxu0 0.0
          %805 = vmatpush1.msra.mxu0 0.0
          %806 = vmatprep.subr.mxu0 0.0
          %807 = vmatpush1.msra.mxu0 0.0
          %808 = vmatprep.subr.mxu0 0.0
          %809 = vmatpush1.msra.mxu0 0.0
          %810 = vmatprep.subr.mxu0 0.0
          %811 = vmatpush1.msra.mxu0 0.0
          %812 = vmatprep.subr.mxu0 0.0
          %813 = vmatpush1.msra.mxu0 0.0
          %814 = vmatprep.subr.mxu0 0.0
          %815 = vmatpush1.msra.mxu0 0.0
          %816 = vmatprep.subr.mxu0 0.0
          %817 = vmatpush1.msra.mxu0 0.0
          %818 = vmatprep.subr.mxu0 0.0
          %819 = vmatpush1.msra.mxu0 0.0
          %820 = vmatprep.subr.mxu0 0.0
          %821 = vmatpush1.msra.mxu0 0.0
          %822 = vmatprep.subr.mxu0 0.0
          %823 = vmatpush1.msra.mxu0 0.0
          %824 = vmatprep.subr.mxu0 0.0
          %825 = vmatpush1.msra.mxu0 0.0
          %826 = vmatprep.subr.mxu0 0.0
          %827 = vmatpush1.msra.mxu0 0.0
          %828 = vmatprep.mubr.f32.mxu0 0.0
          %829 = vmatmul.mubr.f32.gmra.mrb[0].mxu0 %v762
          %v830 = vpop.f32.mrb[0].mxu0
          %v831 = vadd.f32 %v759, %v830
          %v832 = vpop.f32.mrb[0].mxu0
          %833 = vdwg.mxu0
          %834 = vst.msk [vmem:[#allocation2] sm:$0xff] %vm675, %v746
          %835 = vst.msk [vmem:[#allocation3] sm:$0xff] %vm675, %v831
        $region120: #{tpu_custom_call.1} parent=67 // pred_fallthru
          _
        %v836 = vld [vmem:[%s546] sm:$0xff]
        %v837 = vld [vmem:[#allocation13] sm:$0xff]
        %v838 = vld [vmem:[#allocation13 + $0x8] sm:$0xff]
        %v839 = vld [vmem:[#allocation13 + $0x10] sm:$0xff]
        %v840 = vld [vmem:[#allocation13 + $0x18] sm:$0xff]
        %v841 = vld [vmem:[#allocation14] sm:$0x1]
        %v843 = vlaneseq
        %v844 = vshrl.u32 %v843, 7
        %v845 = vsub.s32 0, %v844
        %v846 = vrot.slane %v841, %v845
        %vm848 = vcmask 261120
        %v850 = vsel %vm848, %v836, 0
        %852 = vmatprep.subr.mxu0 0.0
        %853 = vmatpush1.msra.mxu0 %v837
        %854 = vmatprep.subr.mxu0 0.0
        %855 = vmatpush1.msra.mxu0 %v838
        %856 = vmatprep.subr.mxu0 0.0
        %857 = vmatpush1.msra.mxu0 %v839
        %858 = vmatprep.subr.mxu0 0.0
        %859 = vmatpush1.msra.mxu0 %v840
        %860 = vmatprep.subr.mxu0 0.0
        %861 = vmatpush1.msra.mxu0 0.0
        %862 = vmatprep.subr.mxu0 0.0
        %863 = vmatpush1.msra.mxu0 0.0
        %864 = vmatprep.subr.mxu0 0.0
        %865 = vmatpush1.msra.mxu0 0.0
        %866 = vmatprep.subr.mxu0 0.0
        %867 = vmatpush1.msra.mxu0 0.0
        %868 = vmatprep.subr.mxu0 0.0
        %869 = vmatpush1.msra.mxu0 0.0
        %870 = vmatprep.subr.mxu0 0.0
        %871 = vmatpush1.msra.mxu0 0.0
        %872 = vmatprep.subr.mxu0 0.0
        %873 = vmatpush1.msra.mxu0 0.0
        %874 = vmatprep.subr.mxu0 0.0
        %875 = vmatpush1.msra.mxu0 0.0
        %876 = vmatprep.subr.mxu0 0.0
        %877 = vmatpush1.msra.mxu0 0.0
        %878 = vmatprep.subr.mxu0 0.0
        %879 = vmatpush1.msra.mxu0 0.0
        %880 = vmatprep.subr.mxu0 0.0
        %881 = vmatpush1.msra.mxu0 0.0
        %882 = vmatprep.subr.mxu0 0.0
        %883 = vmatpush1.msra.mxu0 0.0
        %884 = vmatprep.subr.mxu0 0.0
        %885 = vmatpush1.msra.mxu0 0.0
        %886 = vmatprep.subr.mxu0 0.0
        %887 = vmatpush1.msra.mxu0 0.0
        %888 = vmatprep.subr.mxu0 0.0
        %889 = vmatpush1.msra.mxu0 0.0
        %890 = vmatprep.subr.mxu0 0.0
        %891 = vmatpush1.msra.mxu0 0.0
        %892 = vmatprep.subr.mxu0 0.0
        %893 = vmatpush1.msra.mxu0 0.0
        %894 = vmatprep.subr.mxu0 0.0
        %895 = vmatpush1.msra.mxu0 0.0
        %896 = vmatprep.subr.mxu0 0.0
        %897 = vmatpush1.msra.mxu0 0.0
        %898 = vmatprep.subr.mxu0 0.0
        %899 = vmatpush1.msra.mxu0 0.0
        %900 = vmatprep.subr.mxu0 0.0
        %901 = vmatpush1.msra.mxu0 0.0
        %902 = vmatprep.subr.mxu0 0.0
        %903 = vmatpush1.msra.mxu0 0.0
        %904 = vmatprep.subr.mxu0 0.0
        %905 = vmatpush1.msra.mxu0 0.0
        %906 = vmatprep.subr.mxu0 0.0
        %907 = vmatpush1.msra.mxu0 0.0
        %908 = vmatprep.subr.mxu0 0.0
        %909 = vmatpush1.msra.mxu0 0.0
        %910 = vmatprep.subr.mxu0 0.0
        %911 = vmatpush1.msra.mxu0 0.0
        %912 = vmatprep.subr.mxu0 0.0
        %913 = vmatpush1.msra.mxu0 0.0
        %914 = vmatprep.subr.mxu0 0.0
        %915 = vmatpush1.msra.mxu0 0.0
        %916 = vmatprep.mubr.f32.mxu0 0.0
        %917 = vmatmul.mubr.f32.gmra.mrb[0].mxu0 %v850
        %v918 = vpop.f32.mrb[0].mxu0
        %v919 = vadd.f32 %v846, %v918
        %v920 = vpop.f32.mrb[0].mxu0
        %921 = vdwg.mxu0
        %v922 = vmul.f32 %v919, 0.35355338
        %v923 = vld [vmem:[#allocation2] sm:$0xff]
        %v924 = vld [vmem:[#allocation3] sm:$0xff]
        %v925 = vld [vmem:[%s572] sm:$0x1]
        %vm926 = vcmp.eq.s32.totalorder %v925, 0
        %v927 = vsel %vm926, 1, 0
        %v928 = vlaneseq
        %v929 = vshrl.u32 %v928, 7
        %v930 = vsub.s32 0, %v929
        %v931 = vrot.slane %v927, %v930
        %vm932 = vcmp.eq.s32.totalorder %v931, 1
        %vm933 = vcmask 64512
        %v935 = vsel %vm933, %v922, 0
        %v938 = vsel %vm933, %v923, 0
        %940 = vmatprep.subr.mxu0 0.0
        %941 = vmatpush1.xpose.msra.mxu0 %v938
        %942 = vmatprep.subr.mxu0 0.0
        %943 = vmatpush1.xpose.msra.mxu0 0.0
        %944 = vmatprep.subr.mxu0 0.0
        %945 = vmatpush1.xpose.msra.mxu0 0.0
        %946 = vmatprep.subr.mxu0 0.0
        %947 = vmatpush1.xpose.msra.mxu0 0.0
        %948 = vmatprep.subr.mxu0 0.0
        %949 = vmatpush1.xpose.msra.mxu0 0.0
        %950 = vmatprep.subr.mxu0 0.0
        %951 = vmatpush1.xpose.msra.mxu0 0.0
        %952 = vmatprep.subr.mxu0 0.0
        %953 = vmatpush1.xpose.msra.mxu0 0.0
        %954 = vmatprep.subr.mxu0 0.0
        %955 = vmatpush1.xpose.msra.mxu0 0.0
        %956 = vmatprep.subr.mxu0 0.0
        %957 = vmatpush1.xpose.msra.mxu0 0.0
        %958 = vmatprep.subr.mxu0 0.0
        %959 = vmatpush1.xpose.msra.mxu0 0.0
        %960 = vmatprep.subr.mxu0 0.0
        %961 = vmatpush1.xpose.msra.mxu0 0.0
        %962 = vmatprep.subr.mxu0 0.0
        %963 = vmatpush1.xpose.msra.mxu0 0.0
        %964 = vmatprep.subr.mxu0 0.0
        %965 = vmatpush1.xpose.msra.mxu0 0.0
        %966 = vmatprep.subr.mxu0 0.0
        %967 = vmatpush1.xpose.msra.mxu0 0.0
        %968 = vmatprep.subr.mxu0 0.0
        %969 = vmatpush1.xpose.msra.mxu0 0.0
        %970 = vmatprep.subr.mxu0 0.0
        %971 = vmatpush1.xpose.msra.mxu0 0.0
        %972 = vmatprep.subr.mxu0 0.0
        %973 = vmatpush1.xpose.msra.mxu0 0.0
        %974 = vmatprep.subr.mxu0 0.0
        %975 = vmatpush1.xpose.msra.mxu0 0.0
        %976 = vmatprep.subr.mxu0 0.0
        %977 = vmatpush1.xpose.msra.mxu0 0.0
        %978 = vmatprep.subr.mxu0 0.0
        %979 = vmatpush1.xpose.msra.mxu0 0.0
        %980 = vmatprep.subr.mxu0 0.0
        %981 = vmatpush1.xpose.msra.mxu0 0.0
        %982 = vmatprep.subr.mxu0 0.0
        %983 = vmatpush1.xpose.msra.mxu0 0.0
        %984 = vmatprep.subr.mxu0 0.0
        %985 = vmatpush1.xpose.msra.mxu0 0.0
        %986 = vmatprep.subr.mxu0 0.0
        %987 = vmatpush1.xpose.msra.mxu0 0.0
        %988 = vmatprep.subr.mxu0 0.0
        %989 = vmatpush1.xpose.msra.mxu0 0.0
        %990 = vmatprep.subr.mxu0 0.0
        %991 = vmatpush1.xpose.msra.mxu0 0.0
        %992 = vmatprep.subr.mxu0 0.0
        %993 = vmatpush1.xpose.msra.mxu0 0.0
        %994 = vmatprep.subr.mxu0 0.0
        %995 = vmatpush1.xpose.msra.mxu0 0.0
        %996 = vmatprep.subr.mxu0 0.0
        %997 = vmatpush1.xpose.msra.mxu0 0.0
        %998 = vmatprep.subr.mxu0 0.0
        %999 = vmatpush1.xpose.msra.mxu0 0.0
        %1000 = vmatprep.subr.mxu0 0.0
        %1001 = vmatpush1.xpose.msra.mxu0 0.0
        %1002 = vmatprep.subr.mxu0 0.0
        %1003 = vmatpush1.xpose.msra.mxu0 0.0
        %1004 = vmatprep.mubr.f32.mxu0 0.0
        %1005 = vmatmul.mubr.f32.gmra.mrb[0].mxu0 %v935
        %v1006 = vpop.f32.mrb[0].mxu0
        %v1007 = vadd.f32 0.0, %v1006
        %v1008 = vpop.f32.mrb[0].mxu0
        %1009 = vdwg.mxu0
        %v1010 = vsel %vm932, -1e+09, %v1007
        %v1011 = vsel %vm933, %v1010, -inf
        %1012 = vmax.xlane.f32.xlu0 %v1011
        %v1013 = vpop.xlane.xlu0 %1012
        %v1014 = vsub.f32 %v1010, %v1013
        %v1015 = vmul.f32 %v1014, 1.442695
        %v1016 = vpow.pop %v1015
        %v1017 = vsel %vm933, %v1016, 0.0
        %1018 = vadd.xlane.f32.xlu0 %v1017
        %v1019 = vpop.xlane.xlu0 %1018
        %v1020 = vrcp.pop %v1019
        %v1021 = vmul.f32 %v1016, %v1020
        %v1023 = vsel %vm933, %v1021, 0
        %1025 = vmatprep.subr.mxu0 0.0
        %1026 = vmatpush1.msra.mxu0 %v924
        %1027 = vmatprep.subr.mxu0 0.0
        %1028 = vmatpush1.msra.mxu0 0.0
        %1029 = vmatprep.subr.mxu0 0.0
        %1030 = vmatpush1.msra.mxu0 0.0
        %1031 = vmatprep.subr.mxu0 0.0
        %1032 = vmatpush1.msra.mxu0 0.0
        %1033 = vmatprep.subr.mxu0 0.0
        %1034 = vmatpush1.msra.mxu0 0.0
        %1035 = vmatprep.subr.mxu0 0.0
        %1036 = vmatpush1.msra.mxu0 0.0
        %1037 = vmatprep.subr.mxu0 0.0
        %1038 = vmatpush1.msra.mxu0 0.0
        %1039 = vmatprep.subr.mxu0 0.0
        %1040 = vmatpush1.msra.mxu0 0.0
        %1041 = vmatprep.subr.mxu0 0.0
        %1042 = vmatpush1.msra.mxu0 0.0
        %1043 = vmatprep.subr.mxu0 0.0
        %1044 = vmatpush1.msra.mxu0 0.0
        %1045 = vmatprep.subr.mxu0 0.0
        %1046 = vmatpush1.msra.mxu0 0.0
        %1047 = vmatprep.subr.mxu0 0.0
        %1048 = vmatpush1.msra.mxu0 0.0
        %1049 = vmatprep.subr.mxu0 0.0
        %1050 = vmatpush1.msra.mxu0 0.0
        %1051 = vmatprep.subr.mxu0 0.0
        %1052 = vmatpush1.msra.mxu0 0.0
        %1053 = vmatprep.subr.mxu0 0.0
        %1054 = vmatpush1.msra.mxu0 0.0
        %1055 = vmatprep.subr.mxu0 0.0
        %1056 = vmatpush1.msra.mxu0 0.0
        %1057 = vmatprep.subr.mxu0 0.0
        %1058 = vmatpush1.msra.mxu0 0.0
        %1059 = vmatprep.subr.mxu0 0.0
        %1060 = vmatpush1.msra.mxu0 0.0
        %1061 = vmatprep.subr.mxu0 0.0
        %1062 = vmatpush1.msra.mxu0 0.0
        %1063 = vmatprep.subr.mxu0 0.0
        %1064 = vmatpush1.msra.mxu0 0.0
        %1065 = vmatprep.subr.mxu0 0.0
        %1066 = vmatpush1.msra.mxu0 0.0
        %1067 = vmatprep.subr.mxu0 0.0
        %1068 = vmatpush1.msra.mxu0 0.0
        %1069 = vmatprep.subr.mxu0 0.0
        %1070 = vmatpush1.msra.mxu0 0.0
        %1071 = vmatprep.subr.mxu0 0.0
        %1072 = vmatpush1.msra.mxu0 0.0
        %1073 = vmatprep.subr.mxu0 0.0
        %1074 = vmatpush1.msra.mxu0 0.0
        %1075 = vmatprep.subr.mxu0 0.0
        %1076 = vmatpush1.msra.mxu0 0.0
        %1077 = vmatprep.subr.mxu0 0.0
        %1078 = vmatpush1.msra.mxu0 0.0
        %1079 = vmatprep.subr.mxu0 0.0
        %1080 = vmatpush1.msra.mxu0 0.0
        %1081 = vmatprep.subr.mxu0 0.0
        %1082 = vmatpush1.msra.mxu0 0.0
        %1083 = vmatprep.subr.mxu0 0.0
        %1084 = vmatpush1.msra.mxu0 0.0
        %1085 = vmatprep.subr.mxu0 0.0
        %1086 = vmatpush1.msra.mxu0 0.0
        %1087 = vmatprep.subr.mxu0 0.0
        %1088 = vmatpush1.msra.mxu0 0.0
        %1089 = vmatprep.mubr.f32.mxu0 0.0
        %1090 = vmatmul.mubr.f32.gmra.mrb[0].mxu0 %v1023
        %v1091 = vpop.f32.mrb[0].mxu0
        %v1092 = vadd.f32 0.0, %v1091
        %v1093 = vpop.f32.mrb[0].mxu0
        %1094 = vdwg.mxu0
        %1095 = vst.msk [vmem:[#allocation4] sm:$0xff] %vm933, %v1092
        %1096 = vrot.lane.b32.xlu0 %v922, 120
        %v1097 = vpop.permute.xlu0 %1096
        %1098 = vrot.lane.b32.xlu0 %v923, 120
        %v1099 = vpop.permute.xlu0 %1098
        %v1100 = vsel %vm933, %v1097, 0
        %v1102 = vsel %vm933, %v1099, 0
        %1104 = vmatprep.subr.mxu0 0.0
        %1105 = vmatpush1.xpose.msra.mxu0 %v1102
        %1106 = vmatprep.subr.mxu0 0.0
        %1107 = vmatpush1.xpose.msra.mxu0 0.0
        %1108 = vmatprep.subr.mxu0 0.0
        %1109 = vmatpush1.xpose.msra.mxu0 0.0
        %1110 = vmatprep.subr.mxu0 0.0
        %1111 = vmatpush1.xpose.msra.mxu0 0.0
        %1112 = vmatprep.subr.mxu0 0.0
        %1113 = vmatpush1.xpose.msra.mxu0 0.0
        %1114 = vmatprep.subr.mxu0 0.0
        %1115 = vmatpush1.xpose.msra.mxu0 0.0
        %1116 = vmatprep.subr.mxu0 0.0
        %1117 = vmatpush1.xpose.msra.mxu0 0.0
        %1118 = vmatprep.subr.mxu0 0.0
        %1119 = vmatpush1.xpose.msra.mxu0 0.0
        %1120 = vmatprep.subr.mxu0 0.0
        %1121 = vmatpush1.xpose.msra.mxu0 0.0
        %1122 = vmatprep.subr.mxu0 0.0
        %1123 = vmatpush1.xpose.msra.mxu0 0.0
        %1124 = vmatprep.subr.mxu0 0.0
        %1125 = vmatpush1.xpose.msra.mxu0 0.0
        %1126 = vmatprep.subr.mxu0 0.0
        %1127 = vmatpush1.xpose.msra.mxu0 0.0
        %1128 = vmatprep.subr.mxu0 0.0
        %1129 = vmatpush1.xpose.msra.mxu0 0.0
        %1130 = vmatprep.subr.mxu0 0.0
        %1131 = vmatpush1.xpose.msra.mxu0 0.0
        %1132 = vmatprep.subr.mxu0 0.0
        %1133 = vmatpush1.xpose.msra.mxu0 0.0
        %1134 = vmatprep.subr.mxu0 0.0
        %1135 = vmatpush1.xpose.msra.mxu0 0.0
        %1136 = vmatprep.subr.mxu0 0.0
        %1137 = vmatpush1.xpose.msra.mxu0 0.0
        %1138 = vmatprep.subr.mxu0 0.0
        %1139 = vmatpush1.xpose.msra.mxu0 0.0
        %1140 = vmatprep.subr.mxu0 0.0
        %1141 = vmatpush1.xpose.msra.mxu0 0.0
        %1142 = vmatprep.subr.mxu0 0.0
        %1143 = vmatpush1.xpose.msra.mxu0 0.0
        %1144 = vmatprep.subr.mxu0 0.0
        %1145 = vmatpush1.xpose.msra.mxu0 0.0
        %1146 = vmatprep.subr.mxu0 0.0
        %1147 = vmatpush1.xpose.msra.mxu0 0.0
        %1148 = vmatprep.subr.mxu0 0.0
        %1149 = vmatpush1.xpose.msra.mxu0 0.0
        %1150 = vmatprep.subr.mxu0 0.0
        %1151 = vmatpush1.xpose.msra.mxu0 0.0
        %1152 = vmatprep.subr.mxu0 0.0
        %1153 = vmatpush1.xpose.msra.mxu0 0.0
        %1154 = vmatprep.subr.mxu0 0.0
        %1155 = vmatpush1.xpose.msra.mxu0 0.0
        %1156 = vmatprep.subr.mxu0 0.0
        %1157 = vmatpush1.xpose.msra.mxu0 0.0
        %1158 = vmatprep.subr.mxu0 0.0
        %1159 = vmatpush1.xpose.msra.mxu0 0.0
        %1160 = vmatprep.subr.mxu0 0.0
        %1161 = vmatpush1.xpose.msra.mxu0 0.0
        %1162 = vmatprep.subr.mxu0 0.0
        %1163 = vmatpush1.xpose.msra.mxu0 0.0
        %1164 = vmatprep.subr.mxu0 0.0
        %1165 = vmatpush1.xpose.msra.mxu0 0.0
        %1166 = vmatprep.subr.mxu0 0.0
        %1167 = vmatpush1.xpose.msra.mxu0 0.0
        %1168 = vmatprep.mubr.f32.mxu0 0.0
        %1169 = vmatmul.mubr.f32.gmra.mrb[0].mxu0 %v1100
        %v1170 = vpop.f32.mrb[0].mxu0
        %v1171 = vadd.f32 0.0, %v1170
        %v1172 = vpop.f32.mrb[0].mxu0
        %1173 = vdwg.mxu0
        %v1174 = vsel %vm932, -1e+09, %v1171
        %v1175 = vsel %vm933, %v1174, -inf
        %1176 = vmax.xlane.f32.xlu0 %v1175
        %v1177 = vpop.xlane.xlu0 %1176
        %v1178 = vsub.f32 %v1174, %v1177
        %v1179 = vmul.f32 %v1178, 1.442695
        %v1180 = vpow.pop %v1179
        %v1181 = vsel %vm933, %v1180, 0.0
        %1182 = vadd.xlane.f32.xlu0 %v1181
        %v1183 = vpop.xlane.xlu0 %1182
        %v1184 = vrcp.pop %v1183
        %v1185 = vmul.f32 %v1180, %v1184
        %1187 = vrot.lane.b32.xlu0 %v924, 120
        %v1188 = vpop.permute.xlu0 %1187
        %v1191 = vsel %vm933, %v1185, 0
        %1193 = vmatprep.subr.mxu0 0.0
        %1194 = vmatpush1.msra.mxu0 %v1188
        %1195 = vmatprep.subr.mxu0 0.0
        %1196 = vmatpush1.msra.mxu0 0.0
        %1197 = vmatprep.subr.mxu0 0.0
        %1198 = vmatpush1.msra.mxu0 0.0
        %1199 = vmatprep.subr.mxu0 0.0
        %1200 = vmatpush1.msra.mxu0 0.0
        %1201 = vmatprep.subr.mxu0 0.0
        %1202 = vmatpush1.msra.mxu0 0.0
        %1203 = vmatprep.subr.mxu0 0.0
        %1204 = vmatpush1.msra.mxu0 0.0
        %1205 = vmatprep.subr.mxu0 0.0
        %1206 = vmatpush1.msra.mxu0 0.0
        %1207 = vmatprep.subr.mxu0 0.0
        %1208 = vmatpush1.msra.mxu0 0.0
        %1209 = vmatprep.subr.mxu0 0.0
        %1210 = vmatpush1.msra.mxu0 0.0
        %1211 = vmatprep.subr.mxu0 0.0
        %1212 = vmatpush1.msra.mxu0 0.0
        %1213 = vmatprep.subr.mxu0 0.0
        %1214 = vmatpush1.msra.mxu0 0.0
        %1215 = vmatprep.subr.mxu0 0.0
        %1216 = vmatpush1.msra.mxu0 0.0
        %1217 = vmatprep.subr.mxu0 0.0
        %1218 = vmatpush1.msra.mxu0 0.0
        %1219 = vmatprep.subr.mxu0 0.0
        %1220 = vmatpush1.msra.mxu0 0.0
        %1221 = vmatprep.subr.mxu0 0.0
        %1222 = vmatpush1.msra.mxu0 0.0
        %1223 = vmatprep.subr.mxu0 0.0
        %1224 = vmatpush1.msra.mxu0 0.0
        %1225 = vmatprep.subr.mxu0 0.0
        %1226 = vmatpush1.msra.mxu0 0.0
        %1227 = vmatprep.subr.mxu0 0.0
        %1228 = vmatpush1.msra.mxu0 0.0
        %1229 = vmatprep.subr.mxu0 0.0
        %1230 = vmatpush1.msra.mxu0 0.0
        %1231 = vmatprep.subr.mxu0 0.0
        %1232 = vmatpush1.msra.mxu0 0.0
        %1233 = vmatprep.subr.mxu0 0.0
        %1234 = vmatpush1.msra.mxu0 0.0
        %1235 = vmatprep.subr.mxu0 0.0
        %1236 = vmatpush1.msra.mxu0 0.0
        %1237 = vmatprep.subr.mxu0 0.0
        %1238 = vmatpush1.msra.mxu0 0.0
        %1239 = vmatprep.subr.mxu0 0.0
        %1240 = vmatpush1.msra.mxu0 0.0
        %1241 = vmatprep.subr.mxu0 0.0
        %1242 = vmatpush1.msra.mxu0 0.0
        %1243 = vmatprep.subr.mxu0 0.0
        %1244 = vmatpush1.msra.mxu0 0.0
        %1245 = vmatprep.subr.mxu0 0.0
        %1246 = vmatpush1.msra.mxu0 0.0
        %1247 = vmatprep.subr.mxu0 0.0
        %1248 = vmatpush1.msra.mxu0 0.0
        %1249 = vmatprep.subr.mxu0 0.0
        %1250 = vmatpush1.msra.mxu0 0.0
        %1251 = vmatprep.subr.mxu0 0.0
        %1252 = vmatpush1.msra.mxu0 0.0
        %1253 = vmatprep.subr.mxu0 0.0
        %1254 = vmatpush1.msra.mxu0 0.0
        %1255 = vmatprep.subr.mxu0 0.0
        %1256 = vmatpush1.msra.mxu0 0.0
        %1257 = vmatprep.mubr.f32.mxu0 0.0
        %1258 = vmatmul.mubr.f32.gmra.mrb[0].mxu0 %v1191
        %v1259 = vpop.f32.mrb[0].mxu0
        %v1260 = vadd.f32 0.0, %v1259
        %v1261 = vpop.f32.mrb[0].mxu0
        %1262 = vdwg.mxu0
        %1264 = vrot.lane.b32.xlu0 %v1260, 8
        %v1265 = vpop.permute.xlu0 %1264
        %vm1267 = vcmask 130112
        %1268 = vst.msk [vmem:[#allocation4] sm:$0xff] %vm1267, %v1265
        %1269 = vrot.lane.b32.xlu0 %v922, 112
        %v1270 = vpop.permute.xlu0 %1269
        %1271 = vrot.lane.b32.xlu0 %v923, 112
        %v1272 = vpop.permute.xlu0 %1271
        %v1273 = vsel %vm933, %v1270, 0
        %v1275 = vsel %vm933, %v1272, 0
        %1277 = vmatprep.subr.mxu0 0.0
        %1278 = vmatpush1.xpose.msra.mxu0 %v1275
        %1279 = vmatprep.subr.mxu0 0.0
        %1280 = vmatpush1.xpose.msra.mxu0 0.0
        %1281 = vmatprep.subr.mxu0 0.0
        %1282 = vmatpush1.xpose.msra.mxu0 0.0
        %1283 = vmatprep.subr.mxu0 0.0
        %1284 = vmatpush1.xpose.msra.mxu0 0.0
        %1285 = vmatprep.subr.mxu0 0.0
        %1286 = vmatpush1.xpose.msra.mxu0 0.0
        %1287 = vmatprep.subr.mxu0 0.0
        %1288 = vmatpush1.xpose.msra.mxu0 0.0
        %1289 = vmatprep.subr.mxu0 0.0
        %1290 = vmatpush1.xpose.msra.mxu0 0.0
        %1291 = vmatprep.subr.mxu0 0.0
        %1292 = vmatpush1.xpose.msra.mxu0 0.0
        %1293 = vmatprep.subr.mxu0 0.0
        %1294 = vmatpush1.xpose.msra.mxu0 0.0
        %1295 = vmatprep.subr.mxu0 0.0
        %1296 = vmatpush1.xpose.msra.mxu0 0.0
        %1297 = vmatprep.subr.mxu0 0.0
        %1298 = vmatpush1.xpose.msra.mxu0 0.0
        %1299 = vmatprep.subr.mxu0 0.0
        %1300 = vmatpush1.xpose.msra.mxu0 0.0
        %1301 = vmatprep.subr.mxu0 0.0
        %1302 = vmatpush1.xpose.msra.mxu0 0.0
        %1303 = vmatprep.subr.mxu0 0.0
        %1304 = vmatpush1.xpose.msra.mxu0 0.0
        %1305 = vmatprep.subr.mxu0 0.0
        %1306 = vmatpush1.xpose.msra.mxu0 0.0
        %1307 = vmatprep.subr.mxu0 0.0
        %1308 = vmatpush1.xpose.msra.mxu0 0.0
        %1309 = vmatprep.subr.mxu0 0.0
        %1310 = vmatpush1.xpose.msra.mxu0 0.0
        %1311 = vmatprep.subr.mxu0 0.0
        %1312 = vmatpush1.xpose.msra.mxu0 0.0
        %1313 = vmatprep.subr.mxu0 0.0
        %1314 = vmatpush1.xpose.msra.mxu0 0.0
        %1315 = vmatprep.subr.mxu0 0.0
        %1316 = vmatpush1.xpose.msra.mxu0 0.0
        %1317 = vmatprep.subr.mxu0 0.0
        %1318 = vmatpush1.xpose.msra.mxu0 0.0
        %1319 = vmatprep.subr.mxu0 0.0
        %1320 = vmatpush1.xpose.msra.mxu0 0.0
        %1321 = vmatprep.subr.mxu0 0.0
        %1322 = vmatpush1.xpose.msra.mxu0 0.0
        %1323 = vmatprep.subr.mxu0 0.0
        %1324 = vmatpush1.xpose.msra.mxu0 0.0
        %1325 = vmatprep.subr.mxu0 0.0
        %1326 = vmatpush1.xpose.msra.mxu0 0.0
        %1327 = vmatprep.subr.mxu0 0.0
        %1328 = vmatpush1.xpose.msra.mxu0 0.0
        %1329 = vmatprep.subr.mxu0 0.0
        %1330 = vmatpush1.xpose.msra.mxu0 0.0
        %1331 = vmatprep.subr.mxu0 0.0
        %1332 = vmatpush1.xpose.msra.mxu0 0.0
        %1333 = vmatprep.subr.mxu0 0.0
        %1334 = vmatpush1.xpose.msra.mxu0 0.0
        %1335 = vmatprep.subr.mxu0 0.0
        %1336 = vmatpush1.xpose.msra.mxu0 0.0
        %1337 = vmatprep.subr.mxu0 0.0
        %1338 = vmatpush1.xpose.msra.mxu0 0.0
        %1339 = vmatprep.subr.mxu0 0.0
        %1340 = vmatpush1.xpose.msra.mxu0 0.0
        %1341 = vmatprep.mubr.f32.mxu0 0.0
        %1342 = vmatmul.mubr.f32.gmra.mrb[0].mxu0 %v1273
        %v1343 = vpop.f32.mrb[0].mxu0
        %v1344 = vadd.f32 0.0, %v1343
        %v1345 = vpop.f32.mrb[0].mxu0
        %1346 = vdwg.mxu0
        %v1347 = vsel %vm932, -1e+09, %v1344
        %v1348 = vsel %vm933, %v1347, -inf
        %1349 = vmax.xlane.f32.xlu0 %v1348
        %v1350 = vpop.xlane.xlu0 %1349
        %v1351 = vsub.f32 %v1347, %v1350
        %v1352 = vmul.f32 %v1351, 1.442695
        %v1353 = vpow.pop %v1352
        %v1354 = vsel %vm933, %v1353, 0.0
        %1355 = vadd.xlane.f32.xlu0 %v1354
        %v1356 = vpop.xlane.xlu0 %1355
        %v1357 = vrcp.pop %v1356
        %v1358 = vmul.f32 %v1353, %v1357
        %1359 = vrot.lane.b32.xlu0 %v924, 112
        %v1360 = vpop.permute.xlu0 %1359
        %v1363 = vsel %vm933, %v1358, 0
        %1365 = vmatprep.subr.mxu0 0.0
        %1366 = vmatpush1.msra.mxu0 %v1360
        %1367 = vmatprep.subr.mxu0 0.0
        %1368 = vmatpush1.msra.mxu0 0.0
        %1369 = vmatprep.subr.mxu0 0.0
        %1370 = vmatpush1.msra.mxu0 0.0
        %1371 = vmatprep.subr.mxu0 0.0
        %1372 = vmatpush1.msra.mxu0 0.0
        %1373 = vmatprep.subr.mxu0 0.0
        %1374 = vmatpush1.msra.mxu0 0.0
        %1375 = vmatprep.subr.mxu0 0.0
        %1376 = vmatpush1.msra.mxu0 0.0
        %1377 = vmatprep.subr.mxu0 0.0
        %1378 = vmatpush1.msra.mxu0 0.0
        %1379 = vmatprep.subr.mxu0 0.0
        %1380 = vmatpush1.msra.mxu0 0.0
        %1381 = vmatprep.subr.mxu0 0.0
        %1382 = vmatpush1.msra.mxu0 0.0
        %1383 = vmatprep.subr.mxu0 0.0
        %1384 = vmatpush1.msra.mxu0 0.0
        %1385 = vmatprep.subr.mxu0 0.0
        %1386 = vmatpush1.msra.mxu0 0.0
        %1387 = vmatprep.subr.mxu0 0.0
        %1388 = vmatpush1.msra.mxu0 0.0
        %1389 = vmatprep.subr.mxu0 0.0
        %1390 = vmatpush1.msra.mxu0 0.0
        %1391 = vmatprep.subr.mxu0 0.0
        %1392 = vmatpush1.msra.mxu0 0.0
        %1393 = vmatprep.subr.mxu0 0.0
        %1394 = vmatpush1.msra.mxu0 0.0
        %1395 = vmatprep.subr.mxu0 0.0
        %1396 = vmatpush1.msra.mxu0 0.0
        %1397 = vmatprep.subr.mxu0 0.0
        %1398 = vmatpush1.msra.mxu0 0.0
        %1399 = vmatprep.subr.mxu0 0.0
        %1400 = vmatpush1.msra.mxu0 0.0
        %1401 = vmatprep.subr.mxu0 0.0
        %1402 = vmatpush1.msra.mxu0 0.0
        %1403 = vmatprep.subr.mxu0 0.0
        %1404 = vmatpush1.msra.mxu0 0.0
        %1405 = vmatprep.subr.mxu0 0.0
        %1406 = vmatpush1.msra.mxu0 0.0
        %1407 = vmatprep.subr.mxu0 0.0
        %1408 = vmatpush1.msra.mxu0 0.0
        %1409 = vmatprep.subr.mxu0 0.0
        %1410 = vmatpush1.msra.mxu0 0.0
        %1411 = vmatprep.subr.mxu0 0.0
        %1412 = vmatpush1.msra.mxu0 0.0
        %1413 = vmatprep.subr.mxu0 0.0
        %1414 = vmatpush1.msra.mxu0 0.0
        %1415 = vmatprep.subr.mxu0 0.0
        %1416 = vmatpush1.msra.mxu0 0.0
        %1417 = vmatprep.subr.mxu0 0.0
        %1418 = vmatpush1.msra.mxu0 0.0
        %1419 = vmatprep.subr.mxu0 0.0
        %1420 = vmatpush1.msra.mxu0 0.0
        %1421 = vmatprep.subr.mxu0 0.0
        %1422 = vmatpush1.msra.mxu0 0.0
        %1423 = vmatprep.subr.mxu0 0.0
        %1424 = vmatpush1.msra.mxu0 0.0
        %1425 = vmatprep.subr.mxu0 0.0
        %1426 = vmatpush1.msra.mxu0 0.0
        %1427 = vmatprep.subr.mxu0 0.0
        %1428 = vmatpush1.msra.mxu0 0.0
        %1429 = vmatprep.mubr.f32.mxu0 0.0
        %1430 = vmatmul.mubr.f32.gmra.mrb[0].mxu0 %v1363
        %v1431 = vpop.f32.mrb[0].mxu0
        %v1432 = vadd.f32 0.0, %v1431
        %v1433 = vpop.f32.mrb[0].mxu0
        %1434 = vdwg.mxu0
        %1436 = vrot.lane.b32.xlu0 %v1432, 16
        %v1437 = vpop.permute.xlu0 %1436
        %vm1439 = vcmask 195712
        %1440 = vst.msk [vmem:[#allocation4] sm:$0xff] %vm1439, %v1437
        %1441 = vrot.lane.b32.xlu0 %v922, 104
        %v1442 = vpop.permute.xlu0 %1441
        %1443 = vrot.lane.b32.xlu0 %v923, 104
        %v1444 = vpop.permute.xlu0 %1443
        %v1445 = vsel %vm933, %v1442, 0
        %v1447 = vsel %vm933, %v1444, 0
        %1449 = vmatprep.subr.mxu0 0.0
        %1450 = vmatpush1.xpose.msra.mxu0 %v1447
        %1451 = vmatprep.subr.mxu0 0.0
        %1452 = vmatpush1.xpose.msra.mxu0 0.0
        %1453 = vmatprep.subr.mxu0 0.0
        %1454 = vmatpush1.xpose.msra.mxu0 0.0
        %1455 = vmatprep.subr.mxu0 0.0
        %1456 = vmatpush1.xpose.msra.mxu0 0.0
        %1457 = vmatprep.subr.mxu0 0.0
        %1458 = vmatpush1.xpose.msra.mxu0 0.0
        %1459 = vmatprep.subr.mxu0 0.0
        %1460 = vmatpush1.xpose.msra.mxu0 0.0
        %1461 = vmatprep.subr.mxu0 0.0
        %1462 = vmatpush1.xpose.msra.mxu0 0.0
        %1463 = vmatprep.subr.mxu0 0.0
        %1464 = vmatpush1.xpose.msra.mxu0 0.0
        %1465 = vmatprep.subr.mxu0 0.0
        %1466 = vmatpush1.xpose.msra.mxu0 0.0
        %1467 = vmatprep.subr.mxu0 0.0
        %1468 = vmatpush1.xpose.msra.mxu0 0.0
        %1469 = vmatprep.subr.mxu0 0.0
        %1470 = vmatpush1.xpose.msra.mxu0 0.0
        %1471 = vmatprep.subr.mxu0 0.0
        %1472 = vmatpush1.xpose.msra.mxu0 0.0
        %1473 = vmatprep.subr.mxu0 0.0
        %1474 = vmatpush1.xpose.msra.mxu0 0.0
        %1475 = vmatprep.subr.mxu0 0.0
        %1476 = vmatpush1.xpose.msra.mxu0 0.0
        %1477 = vmatprep.subr.mxu0 0.0
        %1478 = vmatpush1.xpose.msra.mxu0 0.0
        %1479 = vmatprep.subr.mxu0 0.0
        %1480 = vmatpush1.xpose.msra.mxu0 0.0
        %1481 = vmatprep.subr.mxu0 0.0
        %1482 = vmatpush1.xpose.msra.mxu0 0.0
        %1483 = vmatprep.subr.mxu0 0.0
        %1484 = vmatpush1.xpose.msra.mxu0 0.0
        %1485 = vmatprep.subr.mxu0 0.0
        %1486 = vmatpush1.xpose.msra.mxu0 0.0
        %1487 = vmatprep.subr.mxu0 0.0
        %1488 = vmatpush1.xpose.msra.mxu0 0.0
        %1489 = vmatprep.subr.mxu0 0.0
        %1490 = vmatpush1.xpose.msra.mxu0 0.0
        %1491 = vmatprep.subr.mxu0 0.0
        %1492 = vmatpush1.xpose.msra.mxu0 0.0
        %1493 = vmatprep.subr.mxu0 0.0
        %1494 = vmatpush1.xpose.msra.mxu0 0.0
        %1495 = vmatprep.subr.mxu0 0.0
        %1496 = vmatpush1.xpose.msra.mxu0 0.0
        %1497 = vmatprep.subr.mxu0 0.0
        %1498 = vmatpush1.xpose.msra.mxu0 0.0
        %1499 = vmatprep.subr.mxu0 0.0
        %1500 = vmatpush1.xpose.msra.mxu0 0.0
        %1501 = vmatprep.subr.mxu0 0.0
        %1502 = vmatpush1.xpose.msra.mxu0 0.0
        %1503 = vmatprep.subr.mxu0 0.0
        %1504 = vmatpush1.xpose.msra.mxu0 0.0
        %1505 = vmatprep.subr.mxu0 0.0
        %1506 = vmatpush1.xpose.msra.mxu0 0.0
        %1507 = vmatprep.subr.mxu0 0.0
        %1508 = vmatpush1.xpose.msra.mxu0 0.0
        %1509 = vmatprep.subr.mxu0 0.0
        %1510 = vmatpush1.xpose.msra.mxu0 0.0
        %1511 = vmatprep.subr.mxu0 0.0
        %1512 = vmatpush1.xpose.msra.mxu0 0.0
        %1513 = vmatprep.mubr.f32.mxu0 0.0
        %1514 = vmatmul.mubr.f32.gmra.mrb[0].mxu0 %v1445
        %v1515 = vpop.f32.mrb[0].mxu0
        %v1516 = vadd.f32 0.0, %v1515
        %v1517 = vpop.f32.mrb[0].mxu0
        %1518 = vdwg.mxu0
        %v1519 = vsel %vm932, -1e+09, %v1516
        %v1520 = vsel %vm933, %v1519, -inf
        %1521 = vmax.xlane.f32.xlu0 %v1520
        %v1522 = vpop.xlane.xlu0 %1521
        %v1523 = vsub.f32 %v1519, %v1522
        %v1524 = vmul.f32 %v1523, 1.442695
        %v1525 = vpow.pop %v1524
        %v1526 = vsel %vm933, %v1525, 0.0
        %1527 = vadd.xlane.f32.xlu0 %v1526
        %v1528 = vpop.xlane.xlu0 %1527
        %v1529 = vrcp.pop %v1528
        %v1530 = vmul.f32 %v1525, %v1529
        %1531 = vrot.lane.b32.xlu0 %v924, 104
        %v1532 = vpop.permute.xlu0 %1531
        %v1535 = vsel %vm933, %v1530, 0
        %1537 = vmatprep.subr.mxu0 0.0
        %1538 = vmatpush1.msra.mxu0 %v1532
        %1539 = vmatprep.subr.mxu0 0.0
        %1540 = vmatpush1.msra.mxu0 0.0
        %1541 = vmatprep.subr.mxu0 0.0
        %1542 = vmatpush1.msra.mxu0 0.0
        %1543 = vmatprep.subr.mxu0 0.0
        %1544 = vmatpush1.msra.mxu0 0.0
        %1545 = vmatprep.subr.mxu0 0.0
        %1546 = vmatpush1.msra.mxu0 0.0
        %1547 = vmatprep.subr.mxu0 0.0
        %1548 = vmatpush1.msra.mxu0 0.0
        %1549 = vmatprep.subr.mxu0 0.0
        %1550 = vmatpush1.msra.mxu0 0.0
        %1551 = vmatprep.subr.mxu0 0.0
        %1552 = vmatpush1.msra.mxu0 0.0
        %1553 = vmatprep.subr.mxu0 0.0
        %1554 = vmatpush1.msra.mxu0 0.0
        %1555 = vmatprep.subr.mxu0 0.0
        %1556 = vmatpush1.msra.mxu0 0.0
        %1557 = vmatprep.subr.mxu0 0.0
        %1558 = vmatpush1.msra.mxu0 0.0
        %1559 = vmatprep.subr.mxu0 0.0
        %1560 = vmatpush1.msra.mxu0 0.0
        %1561 = vmatprep.subr.mxu0 0.0
        %1562 = vmatpush1.msra.mxu0 0.0
        %1563 = vmatprep.subr.mxu0 0.0
        %1564 = vmatpush1.msra.mxu0 0.0
        %1565 = vmatprep.subr.mxu0 0.0
        %1566 = vmatpush1.msra.mxu0 0.0
        %1567 = vmatprep.subr.mxu0 0.0
        %1568 = vmatpush1.msra.mxu0 0.0
        %1569 = vmatprep.subr.mxu0 0.0
        %1570 = vmatpush1.msra.mxu0 0.0
        %1571 = vmatprep.subr.mxu0 0.0
        %1572 = vmatpush1.msra.mxu0 0.0
        %1573 = vmatprep.subr.mxu0 0.0
        %1574 = vmatpush1.msra.mxu0 0.0
        %1575 = vmatprep.subr.mxu0 0.0
        %1576 = vmatpush1.msra.mxu0 0.0
        %1577 = vmatprep.subr.mxu0 0.0
        %1578 = vmatpush1.msra.mxu0 0.0
        %1579 = vmatprep.subr.mxu0 0.0
        %1580 = vmatpush1.msra.mxu0 0.0
        %1581 = vmatprep.subr.mxu0 0.0
        %1582 = vmatpush1.msra.mxu0 0.0
        %1583 = vmatprep.subr.mxu0 0.0
        %1584 = vmatpush1.msra.mxu0 0.0
        %1585 = vmatprep.subr.mxu0 0.0
        %1586 = vmatpush1.msra.mxu0 0.0
        %1587 = vmatprep.subr.mxu0 0.0
        %1588 = vmatpush1.msra.mxu0 0.0
        %1589 = vmatprep.subr.mxu0 0.0
        %1590 = vmatpush1.msra.mxu0 0.0
        %1591 = vmatprep.subr.mxu0 0.0
        %1592 = vmatpush1.msra.mxu0 0.0
        %1593 = vmatprep.subr.mxu0 0.0
        %1594 = vmatpush1.msra.mxu0 0.0
        %1595 = vmatprep.subr.mxu0 0.0
        %1596 = vmatpush1.msra.mxu0 0.0
        %1597 = vmatprep.subr.mxu0 0.0
        %1598 = vmatpush1.msra.mxu0 0.0
        %1599 = vmatprep.subr.mxu0 0.0
        %1600 = vmatpush1.msra.mxu0 0.0
        %1601 = vmatprep.mubr.f32.mxu0 0.0
        %1602 = vmatmul.mubr.f32.gmra.mrb[0].mxu0 %v1535
        %v1603 = vpop.f32.mrb[0].mxu0
        %v1604 = vadd.f32 0.0, %v1603
        %v1605 = vpop.f32.mrb[0].mxu0
        %1606 = vdwg.mxu0
        %1608 = vrot.lane.b32.xlu0 %v1604, 24
        %v1609 = vpop.permute.xlu0 %1608
        %vm1611 = vcmask 261312
        %1612 = vst.msk [vmem:[#allocation4] sm:$0xff] %vm1611, %v1609
        %v1613 = vld [vmem:[#allocation4] sm:$0xff]
        %v1614 = vld [vmem:[#allocation22] sm:$0xff]
        %v1615 = vld [vmem:[#allocation22 + $0x8] sm:$0xff]
        %v1616 = vld [vmem:[#allocation22 + $0x10] sm:$0xff]
        %v1617 = vld [vmem:[#allocation22 + $0x18] sm:$0xff]
        %v1618 = vld [vmem:[#allocation23] sm:$0x1]
        %v1620 = vlaneseq
        %v1621 = vshrl.u32 %v1620, 7
        %v1622 = vsub.s32 0, %v1621
        %v1623 = vrot.slane %v1618, %v1622
        %v1626 = vsel %vm848, %v1613, 0
        %1628 = vmatprep.subr.mxu0 0.0
        %1629 = vmatpush1.msra.mxu0 %v1614
        %1630 = vmatprep.subr.mxu0 0.0
        %1631 = vmatpush1.msra.mxu0 %v1615
        %1632 = vmatprep.subr.mxu0 0.0
        %1633 = vmatpush1.msra.mxu0 %v1616
        %1634 = vmatprep.subr.mxu0 0.0
        %1635 = vmatpush1.msra.mxu0 %v1617
        %1636 = vmatprep.subr.mxu0 0.0
        %1637 = vmatpush1.msra.mxu0 0.0
        %1638 = vmatprep.subr.mxu0 0.0
        %1639 = vmatpush1.msra.mxu0 0.0
        %1640 = vmatprep.subr.mxu0 0.0
        %1641 = vmatpush1.msra.mxu0 0.0
        %1642 = vmatprep.subr.mxu0 0.0
        %1643 = vmatpush1.msra.mxu0 0.0
        %1644 = vmatprep.subr.mxu0 0.0
        %1645 = vmatpush1.msra.mxu0 0.0
        %1646 = vmatprep.subr.mxu0 0.0
        %1647 = vmatpush1.msra.mxu0 0.0
        %1648 = vmatprep.subr.mxu0 0.0
        %1649 = vmatpush1.msra.mxu0 0.0
        %1650 = vmatprep.subr.mxu0 0.0
        %1651 = vmatpush1.msra.mxu0 0.0
        %1652 = vmatprep.subr.mxu0 0.0
        %1653 = vmatpush1.msra.mxu0 0.0
        %1654 = vmatprep.subr.mxu0 0.0
        %1655 = vmatpush1.msra.mxu0 0.0
        %1656 = vmatprep.subr.mxu0 0.0
        %1657 = vmatpush1.msra.mxu0 0.0
        %1658 = vmatprep.subr.mxu0 0.0
        %1659 = vmatpush1.msra.mxu0 0.0
        %1660 = vmatprep.subr.mxu0 0.0
        %1661 = vmatpush1.msra.mxu0 0.0
        %1662 = vmatprep.subr.mxu0 0.0
        %1663 = vmatpush1.msra.mxu0 0.0
        %1664 = vmatprep.subr.mxu0 0.0
        %1665 = vmatpush1.msra.mxu0 0.0
        %1666 = vmatprep.subr.mxu0 0.0
        %1667 = vmatpush1.msra.mxu0 0.0
        %1668 = vmatprep.subr.mxu0 0.0
        %1669 = vmatpush1.msra.mxu0 0.0
        %1670 = vmatprep.subr.mxu0 0.0
        %1671 = vmatpush1.msra.mxu0 0.0
        %1672 = vmatprep.subr.mxu0 0.0
        %1673 = vmatpush1.msra.mxu0 0.0
        %1674 = vmatprep.subr.mxu0 0.0
        %1675 = vmatpush1.msra.mxu0 0.0
        %1676 = vmatprep.subr.mxu0 0.0
        %1677 = vmatpush1.msra.mxu0 0.0
        %1678 = vmatprep.subr.mxu0 0.0
        %1679 = vmatpush1.msra.mxu0 0.0
        %1680 = vmatprep.subr.mxu0 0.0
        %1681 = vmatpush1.msra.mxu0 0.0
        %1682 = vmatprep.subr.mxu0 0.0
        %1683 = vmatpush1.msra.mxu0 0.0
        %1684 = vmatprep.subr.mxu0 0.0
        %1685 = vmatpush1.msra.mxu0 0.0
        %1686 = vmatprep.subr.mxu0 0.0
        %1687 = vmatpush1.msra.mxu0 0.0
        %1688 = vmatprep.subr.mxu0 0.0
        %1689 = vmatpush1.msra.mxu0 0.0
        %1690 = vmatprep.subr.mxu0 0.0
        %1691 = vmatpush1.msra.mxu0 0.0
        %1692 = vmatprep.mubr.f32.mxu0 0.0
        %1693 = vmatmul.mubr.f32.gmra.mrb[0].mxu0 %v1626
        %v1694 = vpop.f32.mrb[0].mxu0
        %v1695 = vadd.f32 %v1623, %v1694
        %v1696 = vpop.f32.mrb[0].mxu0
        %1697 = vdwg.mxu0
        %1698 = vst.msk [vmem:[%s658] sm:$0xff] %vm848, %v1695
        %s1699 = sand.u32 %s335, 1
        %s1700 = scalar_lea.sflag [#allocation7], %s1699
        %s1701 = sand.u32 %s335, 1
        %s1702 = smul.addr %s1701, 8
        %s1703 = scalar_lea.vmem [#allocation25], %s1702
        // Predicated region
        $region121: #{tpu_custom_call.1} parent=67 // pred_check
          %p1704 = pneg %p345
        $region122: #{tpu_custom_call.1} parent=67 // pred_check_branch
          %1706 = sbr.rel (%p1704) target = $region124
        $region123: #{tpu_custom_call.1} parent=67 // pred_region
          %s1708 = ssub.s32 128, 128
          %1709 = vsyncadd %s1700, %s1708
          %s1710 = sadd.s32 %s44, %s43
          %s1711 = smul.addr %s1710, 128
          %s1712 = scalar_lea.hbm %s12, %s1711
          %s1714 = sshll.u32 %s1703, 4
          %s1715 = int_to_ptr.vmem [resolvable:$true] %s1714
          %1717 = dma.vmem_to_hbm [thread:$0]  %s1715, 128, %s1712, %s1700
        $region124: #{tpu_custom_call.1} parent=67 // pred_fallthru
          _
      $region68: #{tpu_custom_call.1} parent=5 // pred_fallthru
        _
      %p1718 = scmp.le.s32.totalorder 2, %s34
      // Predicated region
      $region125: #{tpu_custom_call.1} parent=5 // pred_check
        %p1719 = pneg %p1718
      $region126: #{tpu_custom_call.1} parent=5 // pred_check_branch
        %1721 = sbr.rel (%p1719) target = $region128
      $region127: #{tpu_custom_call.1} parent=5 // pred_region
        %s1722 = ssub.s32 %s34, 2
        // Predicated region
        $region129: #{tpu_custom_call.1} parent=127 // pred_check
          %p1723 = pneg %p351
        $region130: #{tpu_custom_call.1} parent=127 // pred_check_branch
          %1725 = sbr.rel (%p1723) target = $region132
        $region131: #{tpu_custom_call.1} parent=127 // pred_region
          %s1726 = sand.u32 %s336, 1
          %s1727 = scalar_lea.sflag [#allocation7], %s1726
          %s1728 = sand.u32 %s336, 1
          %s1729 = smul.addr %s1728, 8
          %s1730 = scalar_lea.vmem [#allocation25], %s1729
          %1731 = dma.done %s1727, 128
        $region132: #{tpu_custom_call.1} parent=127 // pred_fallthru
          _
      $region128: #{tpu_custom_call.1} parent=5 // pred_fallthru
        _
    $region6: #{tpu_custom_call.1} parent=1 // loop_footer
      %s38 = sadd.s32 1, %s34
    $region7: #{tpu_custom_call.1} parent=1 // loop_footer_branch
      %33 = sbr.rel target = $region3
    $region8: #{tpu_custom_call.1} parent=1 // loop_exit
      _
    %1732 = vsyncpa [#allocation6], 1
    %s1733 = scalar_lea.sflag [#allocation6], 1
    %1734 = vsyncpa %s1733, 1
    %1735 = vsyncpa [#allocation9], 1
    %s1736 = scalar_lea.sflag [#allocation9], 1
    %1737 = vsyncpa %s1736, 1
    %1738 = vsyncpa [#allocation12], 1
    %s1739 = scalar_lea.sflag [#allocation12], 1
    %1740 = vsyncpa %s1739, 1
    %1741 = vsyncpa [#allocation15], 1
    %1742 = vsyncpa [#allocation18], 1
    %1743 = vsyncpa [#allocation21], 1
    %1744 = vsyncpa [#allocation24], 1
    %1745 = vsyncpa [#allocation7], 1
    %s1746 = scalar_lea.sflag [#allocation7], 1
    %1747 = vsyncpa %s1746, 1

</llo_original>
